<compile_context>
chip_gen: v7x
topology: tpu7x:2x2x1
jax: 0.10.0
libtpu: 0.0.40
codegen_flags: <defaults>
</compile_context>

<pallas_src>
import functools

import jax
import jax.numpy as jnp
from jax.experimental import pallas as pl
from jax.experimental.pallas import tpu as pltpu


# ---------------------------------------------------------------------------
# small model config (scaled-down ViT-B/16: D=768->32, heads=12->4, N=197->8)
# ---------------------------------------------------------------------------
BATCH = 2
SEQ = 8          # tokens (cls token at position 0)
DIM = 32         # hidden size
NUM_HEADS = 4
HEAD_DIM = DIM // NUM_HEADS
MLP_DIM = 4 * DIM
CUT_LAYER = 1
TOTAL_BLOCKS = 12                      # ViT-B/16 has 12 transformer blocks
NUM_HEAD_BLOCKS = CUT_LAYER + 1
NUM_BLOCKS = TOTAL_BLOCKS - NUM_HEAD_BLOCKS   # = 10 blocks kept in the backbone
LN_EPS = 1e-6                          # timm ViT uses LayerNorm(eps=1e-6)

# indices of the big matmul weights inside a per-block parameter tuple
_MATMUL_WEIGHT_IDX = (2, 4, 8, 10)     # qkvw, projw, fc1w, fc2w


# ---------------------------------------------------------------------------
# in-kernel helpers
# ---------------------------------------------------------------------------
def _layernorm(x, w, b):
    # fused moments: one pass for E[x] and E[x^2]
    mu = jnp.mean(x, axis=-1, keepdims=True)
    ms = jnp.mean(x * x, axis=-1, keepdims=True)
    var = jnp.maximum(ms - mu * mu, 0.0)
    return (x - mu) * jax.lax.rsqrt(var + LN_EPS) * w + b


def _gelu_exact(x):
    # exact (erf) GELU, matching torch.nn.GELU() default
    # TODO(synk): on v5e consider the tanh-GELU (EUP) variant if erf's VPU
    #   polynomial becomes the binding slot at real MLP dims.
    return 0.5 * x * (1.0 + jax.lax.erf(x * 0.7071067811865476))


# ---------------------------------------------------------------------------
# fused Pallas kernel: grid axis = transformer block index
# ---------------------------------------------------------------------------
def fused_vit_backbone_kernel(x_hbm_ref, ln1w_ref, ln1b_ref, qkvw_ref, qkvb_ref,
                              projw_ref, projb_ref, ln2w_ref, ln2b_ref,
                              fc1w_ref, fc1b_ref, fc2w_ref, fc2b_ref,
                              normw_ref, normb_ref,
                              cls_ref, xs_ref, copy_sem, *, num_heads):
    blk = pl.program_id(0)

    # DMA the token tensor into the resident VMEM scratch once (block 0 only);
    # x is passed with memory_space=pl.ANY so it is NOT double-buffered.
    @pl.when(blk == 0)
    def _():
        cp = pltpu.make_async_copy(x_hbm_ref, xs_ref, copy_sem)
        cp.start()
        cp.wait()

    x = xs_ref[...]                                  # (B, N, D) f32, resident
    B, N, D = x.shape
    H = num_heads
    hd = D // H
    G = B * H
    scale = 1.0 / float(hd) ** 0.5

    def split_heads(t2d):
        # (B*N, D) f32 -> (B*H, N, hd) bf16   (timm head-major column order)
        t = t2d.reshape(B, N, H, hd).transpose(0, 2, 1, 3).reshape(G, N, hd)
        return t.astype(jnp.bfloat16)

    # ---------------- attention branch ----------------
    h = _layernorm(x, ln1w_ref[0], ln1b_ref[0])      # (B, N, D) f32
    h_bf = h.reshape(B * N, D).astype(jnp.bfloat16)

    # one dense MXU-shaped QKV matmul: (B*N, D) @ (D, 3D)
    qkv = (jnp.dot(h_bf, qkvw_ref[0], preferred_element_type=jnp.float32)
           + qkvb_ref[0])                            # (B*N, 3D) f32
    q = split_heads(qkv[:, 0 * D:1 * D])
    k = split_heads(qkv[:, 1 * D:2 * D])
    v = split_heads(qkv[:, 2 * D:3 * D])

    # TODO(synk): at real N, tile this flash-style (online softmax over key
    #   tiles) and mask padded key positions; full (G, N, N) is fine at N=8.
    att = jnp.einsum('gqe,gke->gqk', q, k,
                     preferred_element_type=jnp.float32) * scale    # (G, N, N) f32
    att = att - jnp.max(att, axis=-1, keepdims=True)
    p = jnp.exp(att)
    p = p * pl.reciprocal(jnp.sum(p, axis=-1, keepdims=True), approx=True)
    o = jnp.einsum('gqk,gke->gqe', p.astype(jnp.bfloat16), v,
                   preferred_element_type=jnp.float32)              # (G, N, hd) f32

    # head merge = plain head-concat reshape, then ONE dense proj matmul
    o = (o.reshape(B, H, N, hd).transpose(0, 2, 1, 3)
           .reshape(B * N, D).astype(jnp.bfloat16))                 # (B*N, D) bf16
    attn_out = (jnp.dot(o, projw_ref[0], preferred_element_type=jnp.float32)
                + projb_ref[0])                                     # (B*N, D) f32
    x = x + attn_out.reshape(B, N, D)

    # ---------------- MLP branch ----------------
    h2 = _layernorm(x, ln2w_ref[0], ln2b_ref[0])
    h2_bf = h2.reshape(B * N, D).astype(jnp.bfloat16)
    m = (jnp.dot(h2_bf, fc1w_ref[0], preferred_element_type=jnp.float32)
         + fc1b_ref[0])                                             # (B*N, 4D) f32
    m = _gelu_exact(m)
    m = (jnp.dot(m.astype(jnp.bfloat16), fc2w_ref[0],
                 preferred_element_type=jnp.float32) + fc2b_ref[0]) # (B*N, D) f32
    x = x + m.reshape(B, N, D)

    xs_ref[...] = x

    # ---------------- final LayerNorm + cls extraction ----------------
    @pl.when(blk == pl.num_programs(0) - 1)
    def _():
        y = _layernorm(x, normw_ref[...], normb_ref[...])
        cls_ref[...] = y[:, 0:1, :].astype(cls_ref.dtype)


# ---------------------------------------------------------------------------
# wrapper: one pallas_call for the whole backbone
# ---------------------------------------------------------------------------
def vit_b16_backbone_forward(x, stacked_params, norm_w, norm_b):
    (ln1w, ln1b, qkvw, qkvb, projw, projb,
     ln2w, ln2b, fc1w, fc1b, fc2w, fc2b) = stacked_params
    B, N, D = x.shape
    nb = ln1w.shape[0]
    H = NUM_HEADS

    def per_block_spec(w):
        nrest = w.ndim - 1
        return pl.BlockSpec((1,) + tuple(w.shape[1:]),
                            lambda l, _n=nrest: (l,) + (0,) * _n)

    def const_spec(w):
        nd = w.ndim
        return pl.BlockSpec(tuple(w.shape), lambda l, _n=nd: (0,) * _n)

    weights = (ln1w, ln1b, qkvw, qkvb, projw, projb,
               ln2w, ln2b, fc1w, fc1b, fc2w, fc2b)

    in_specs = ([pl.BlockSpec(memory_space=pl.ANY)]           # x: manual DMA, no double-buffer
                + [per_block_spec(w) for w in weights]        # per-block, auto-pipelined
                + [const_spec(norm_w), const_spec(norm_b)])   # final LN params

    # advisory cost estimate so XLA schedules around the custom call
    flops = nb * (2 * B * N * D * (3 * D + D + 8 * D) + 4 * B * N * N * D)
    transcendentals = nb * (B * H * N * N + B * N * MLP_DIM)
    bytes_accessed = int(
        x.size * x.dtype.itemsize + B * D * x.dtype.itemsize
        + sum(int(w.size) * w.dtype.itemsize for w in weights)
        + (int(norm_w.size) + int(norm_b.size)) * 4)

    kernel = functools.partial(fused_vit_backbone_kernel, num_heads=H)

    cls = pl.pallas_call(
        kernel,
        out_shape=jax.ShapeDtypeStruct((B, 1, D), x.dtype),
        grid=(nb,),
        in_specs=in_specs,
        out_specs=pl.BlockSpec((B, 1, D), lambda l: (0, 0, 0)),
        scratch_shapes=[pltpu.VMEM((B, N, D), jnp.float32),   # resident token tensor
                        pltpu.SemaphoreType.DMA],             # x HBM->VMEM copy sem
        compiler_params=pltpu.CompilerParams(
            dimension_semantics=("arbitrary",),
            # explicit VMEM budget; re-derive (~56 MiB) for v7x's 64 MiB per TC
            vmem_limit_bytes=64 * 1024 * 1024),
        cost_estimate=pl.CostEstimate(flops=int(flops),
                                      transcendentals=int(transcendentals),
                                      bytes_accessed=int(bytes_accessed)),
    )(x, *weights, norm_w, norm_b)
    return cls.reshape(B, D)


# ---------------------------------------------------------------------------
# deterministic synthetic parameter init (natural x @ W (in, out) layout)
# ---------------------------------------------------------------------------
def init_block_params(key):
    """Per-block params in the natural (in, out) matmul layout.

    qkvw (D, 3D): columns [q | k | v], head-major within each (timm order).
    projw (D, D): rows are the head-major concat of per-head outputs.
    """
    # TODO(synk): loading a real timm/PyTorch checkpoint requires transposing
    # nn.Linear weights (torch computes x @ W.T) into this (in, out) layout.
    k = jax.random.split(key, 4)
    ln1w = jnp.ones((1, DIM), jnp.float32)
    ln1b = jnp.zeros((1, DIM), jnp.float32)
    qkvw = 0.02 * jax.random.normal(k[0], (DIM, 3 * DIM), jnp.float32)
    qkvb = jnp.zeros((1, 3 * DIM), jnp.float32)
    projw = 0.02 * jax.random.normal(k[1], (DIM, DIM), jnp.float32)
    projb = jnp.zeros((1, DIM), jnp.float32)
    ln2w = jnp.ones((1, DIM), jnp.float32)
    ln2b = jnp.zeros((1, DIM), jnp.float32)
    fc1w = 0.02 * jax.random.normal(k[2], (DIM, MLP_DIM), jnp.float32)
    fc1b = jnp.zeros((1, MLP_DIM), jnp.float32)
    fc2w = 0.02 * jax.random.normal(k[3], (MLP_DIM, DIM), jnp.float32)
    fc2b = jnp.zeros((1, DIM), jnp.float32)
    return (ln1w, ln1b, qkvw, qkvb, projw, projb,
            ln2w, ln2b, fc1w, fc1b, fc2w, fc2b)


def stack_block_params(per_block):
    """Stack per-block tuples into arrays with a leading NUM_BLOCKS axis.

    The big matmul weights (qkvw, projw, fc1w, fc2w) are cast to bf16 (MXU
    native; halves the per-block weight-stream bytes and double-buffer VMEM).
    """
    stacked = []
    for i, field in enumerate(zip(*per_block)):
        arr = jnp.stack(field)
        if i in _MATMUL_WEIGHT_IDX:
            arr = arr.astype(jnp.bfloat16)
        stacked.append(arr)
    return tuple(stacked)


if __name__ == "__main__":
    root = jax.random.PRNGKey(0)
    keys = jax.random.split(root, NUM_BLOCKS + 1)

    per_block = [init_block_params(keys[i]) for i in range(NUM_BLOCKS)]
    stacked = stack_block_params(per_block)
    norm_w = jnp.ones((1, DIM), jnp.float32)
    norm_b = jnp.zeros((1, DIM), jnp.float32)

    # input: token embeddings [B, N, D] (what the torch module's forward receives)
    x = jax.random.normal(keys[-1], (BATCH, SEQ, DIM), jnp.float32)

    cls = vit_b16_backbone_forward(x, stacked, norm_w, norm_b)
    cls = jax.block_until_ready(cls)
    assert cls.shape == (BATCH, DIM)
    print("KERNEL_OK")
</pallas_src>

<mosaic_0001>
module attributes {stable_mosaic.version = 11 : i64} {
  func.func @fused_vit_backbone_kernel(%arg0: i32, %arg1: memref<2x8x32xf32, #tpu.memory_space<any>>, %arg2: memref<1x1x32xf32, #tpu.memory_space<vmem>>, %arg3: memref<1x1x32xf32, #tpu.memory_space<vmem>>, %arg4: memref<1x32x96xbf16, #tpu.memory_space<vmem>>, %arg5: memref<1x1x96xf32, #tpu.memory_space<vmem>>, %arg6: memref<1x32x32xbf16, #tpu.memory_space<vmem>>, %arg7: memref<1x1x32xf32, #tpu.memory_space<vmem>>, %arg8: memref<1x1x32xf32, #tpu.memory_space<vmem>>, %arg9: memref<1x1x32xf32, #tpu.memory_space<vmem>>, %arg10: memref<1x32x128xbf16, #tpu.memory_space<vmem>>, %arg11: memref<1x1x128xf32, #tpu.memory_space<vmem>>, %arg12: memref<1x128x32xbf16, #tpu.memory_space<vmem>>, %arg13: memref<1x1x32xf32, #tpu.memory_space<vmem>>, %arg14: memref<1x32xf32, #tpu.memory_space<vmem>>, %arg15: memref<1x32xf32, #tpu.memory_space<vmem>>, %arg16: memref<2x1x32xf32, #tpu.memory_space<vmem>>, %arg17: memref<2x8x32xf32, #tpu.memory_space<vmem>>, %arg18: memref<!tpu.dma_semaphore, #tpu.memory_space<semaphore_mem>>) attributes {dimension_semantics = [#tpu.dimension_semantics<arbitrary>], iteration_bounds = array<i64: 10>, scalar_prefetch = 0 : i64, scratch_operands = 2 : i64, tpu.core_type = #tpu.core_type<tc>, window_params = [{}, {transform_indices = @transform_1, window_bounds = array<i64: 1, 1, 32>}, {transform_indices = @transform_2, window_bounds = array<i64: 1, 1, 32>}, {transform_indices = @transform_3, window_bounds = array<i64: 1, 32, 96>}, {transform_indices = @transform_4, window_bounds = array<i64: 1, 1, 96>}, {transform_indices = @transform_5, window_bounds = array<i64: 1, 32, 32>}, {transform_indices = @transform_6, window_bounds = array<i64: 1, 1, 32>}, {transform_indices = @transform_7, window_bounds = array<i64: 1, 1, 32>}, {transform_indices = @transform_8, window_bounds = array<i64: 1, 1, 32>}, {transform_indices = @transform_9, window_bounds = array<i64: 1, 32, 128>}, {transform_indices = @transform_10, window_bounds = array<i64: 1, 1, 128>}, {transform_indices = @transform_11, window_bounds = array<i64: 1, 128, 32>}, {transform_indices = @transform_12, window_bounds = array<i64: 1, 1, 32>}, {pipeline_mode = #tpu.pipeline_mode<synchronous>, transform_indices = @transform_13, window_bounds = array<i64: 1, 32>}, {pipeline_mode = #tpu.pipeline_mode<synchronous>, transform_indices = @transform_14, window_bounds = array<i64: 1, 32>}, {pipeline_mode = #tpu.pipeline_mode<synchronous>, transform_indices = @transform_15, window_bounds = array<i64: 2, 1, 32>}]} {
    %c0_i32 = arith.constant 0 : i32
    %0 = arith.cmpi eq, %arg0, %c0_i32 : i32
    %1 = arith.extui %0 : i1 to i32
    %c0_i32_0 = arith.constant 0 : i32
    %2 = arith.cmpi ne, %1, %c0_i32_0 : i32
    scf.if %2 {
      tpu.enqueue_dma source(%arg1 : memref<2x8x32xf32, #tpu.memory_space<any>>) target(%arg17 : memref<2x8x32xf32, #tpu.memory_space<vmem>>) target_semaphore(%arg18 : memref<!tpu.dma_semaphore, #tpu.memory_space<semaphore_mem>>)
      tpu.wait_dma2 semaphore(%arg18 : memref<!tpu.dma_semaphore, #tpu.memory_space<semaphore_mem>>) src(%arg1 : memref<2x8x32xf32, #tpu.memory_space<any>>) dst(%arg17 : memref<2x8x32xf32, #tpu.memory_space<vmem>>)
    } else {
    }
    %c0 = arith.constant 0 : index
    %c0_1 = arith.constant 0 : index
    %c0_2 = arith.constant 0 : index
    %3 = vector.load %arg17[%c0, %c0_1, %c0_2] : memref<2x8x32xf32, #tpu.memory_space<vmem>>, vector<2x8x32xf32>
    %c0_3 = arith.constant 0 : index
    %c0_4 = arith.constant 0 : index
    %c0_5 = arith.constant 0 : index
    %4 = vector.load %arg2[%c0_3, %c0_4, %c0_5] : memref<1x1x32xf32, #tpu.memory_space<vmem>>, vector<1x1x32xf32>
    %5 = vector.shape_cast %4 : vector<1x1x32xf32> to vector<1x32xf32>
    %c0_6 = arith.constant 0 : index
    %c0_7 = arith.constant 0 : index
    %c0_8 = arith.constant 0 : index
    %6 = vector.load %arg3[%c0_6, %c0_7, %c0_8] : memref<1x1x32xf32, #tpu.memory_space<vmem>>, vector<1x1x32xf32>
    %7 = vector.shape_cast %6 : vector<1x1x32xf32> to vector<1x32xf32>
    %cst = arith.constant dense<0.000000e+00> : vector<2x8xf32>
    %8 = vector.multi_reduction <add>, %3, %cst [2] : vector<2x8x32xf32> to vector<2x8xf32>
    %9 = vector.shape_cast %8 : vector<2x8xf32> to vector<2x8x1xf32>
    %cst_9 = arith.constant 3.200000e+01 : f32
    %10 = vector.broadcast %cst_9 : f32 to vector<2x8x1xf32>
    %11 = arith.divf %9, %10 : vector<2x8x1xf32>
    %12 = arith.mulf %3, %3 : vector<2x8x32xf32>
    %cst_10 = arith.constant dense<0.000000e+00> : vector<2x8xf32>
    %13 = vector.multi_reduction <add>, %12, %cst_10 [2] : vector<2x8x32xf32> to vector<2x8xf32>
    %14 = vector.shape_cast %13 : vector<2x8xf32> to vector<2x8x1xf32>
    %cst_11 = arith.constant 3.200000e+01 : f32
    %15 = vector.broadcast %cst_11 : f32 to vector<2x8x1xf32>
    %16 = arith.divf %14, %15 : vector<2x8x1xf32>
    %17 = arith.mulf %11, %11 : vector<2x8x1xf32>
    %18 = arith.subf %16, %17 : vector<2x8x1xf32>
    %cst_12 = arith.constant 0.000000e+00 : f32
    %19 = vector.broadcast %cst_12 : f32 to vector<2x8x1xf32>
    %20 = arith.maximumf %18, %19 : vector<2x8x1xf32>
    %21 = vector.broadcast %11 : vector<2x8x1xf32> to vector<2x8x32xf32>
    %22 = arith.subf %3, %21 : vector<2x8x32xf32>
    %cst_13 = arith.constant 9.99999997E-7 : f32
    %23 = vector.broadcast %cst_13 : f32 to vector<2x8x1xf32>
    %24 = arith.addf %20, %23 : vector<2x8x1xf32>
    %25 = math.rsqrt %24 : vector<2x8x1xf32>
    %26 = vector.broadcast %25 : vector<2x8x1xf32> to vector<2x8x32xf32>
    %27 = arith.mulf %22, %26 : vector<2x8x32xf32>
    %28 = vector.shape_cast %5 : vector<1x32xf32> to vector<1x1x32xf32>
    %29 = vector.broadcast %28 : vector<1x1x32xf32> to vector<2x8x32xf32>
    %30 = arith.mulf %27, %29 : vector<2x8x32xf32>
    %31 = vector.shape_cast %7 : vector<1x32xf32> to vector<1x1x32xf32>
    %32 = vector.broadcast %31 : vector<1x1x32xf32> to vector<2x8x32xf32>
    %33 = arith.addf %30, %32 : vector<2x8x32xf32>
    %34 = vector.shape_cast %33 : vector<2x8x32xf32> to vector<16x32xf32>
    %35 = arith.truncf %34 : vector<16x32xf32> to vector<16x32xbf16>
    %c0_14 = arith.constant 0 : index
    %c0_15 = arith.constant 0 : index
    %c0_16 = arith.constant 0 : index
    %36 = vector.load %arg4[%c0_14, %c0_15, %c0_16] : memref<1x32x96xbf16, #tpu.memory_space<vmem>>, vector<1x32x96xbf16>
    %37 = vector.shape_cast %36 : vector<1x32x96xbf16> to vector<32x96xbf16>
    %cst_17 = arith.constant dense<0.000000e+00> : vector<16x96xf32>
    %38 = tpu.matmul %35, %37, %cst_17 {dimension_numbers = #tpu.dot_dimension_numbers<[1], [0], [0], [1], [0, 0, 1, 1], [], []>} : vector<16x32xbf16>, vector<32x96xbf16>, vector<16x96xf32> -> vector<16x96xf32>
    %c0_18 = arith.constant 0 : index
    %c0_19 = arith.constant 0 : index
    %c0_20 = arith.constant 0 : index
    %39 = vector.load %arg5[%c0_18, %c0_19, %c0_20] : memref<1x1x96xf32, #tpu.memory_space<vmem>>, vector<1x1x96xf32>
    %40 = vector.shape_cast %39 : vector<1x1x96xf32> to vector<1x96xf32>
    %41 = vector.broadcast %40 : vector<1x96xf32> to vector<16x96xf32>
    %42 = arith.addf %38, %41 : vector<16x96xf32>
    %43 = vector.extract_strided_slice %42 {offsets = [0, 0], sizes = [16, 32], strides = [1, 1]} : vector<16x96xf32> to vector<16x32xf32>
    %44 = vector.shape_cast %43 : vector<16x32xf32> to vector<2x8x4x8xf32>
    %45 = tpu.transpose %44, [0, 2, 1, 3] : vector<2x8x4x8xf32> -> vector<2x4x8x8xf32>
    %46 = vector.shape_cast %45 : vector<2x4x8x8xf32> to vector<8x8x8xf32>
    %47 = arith.truncf %46 : vector<8x8x8xf32> to vector<8x8x8xbf16>
    %48 = vector.extract_strided_slice %42 {offsets = [0, 32], sizes = [16, 32], strides = [1, 1]} : vector<16x96xf32> to vector<16x32xf32>
    %49 = vector.shape_cast %48 : vector<16x32xf32> to vector<2x8x4x8xf32>
    %50 = tpu.transpose %49, [0, 2, 1, 3] : vector<2x8x4x8xf32> -> vector<2x4x8x8xf32>
    %51 = vector.shape_cast %50 : vector<2x4x8x8xf32> to vector<8x8x8xf32>
    %52 = arith.truncf %51 : vector<8x8x8xf32> to vector<8x8x8xbf16>
    %53 = vector.extract_strided_slice %42 {offsets = [0, 64], sizes = [16, 32], strides = [1, 1]} : vector<16x96xf32> to vector<16x32xf32>
    %54 = vector.shape_cast %53 : vector<16x32xf32> to vector<2x8x4x8xf32>
    %55 = tpu.transpose %54, [0, 2, 1, 3] : vector<2x8x4x8xf32> -> vector<2x4x8x8xf32>
    %56 = vector.shape_cast %55 : vector<2x4x8x8xf32> to vector<8x8x8xf32>
    %57 = arith.truncf %56 : vector<8x8x8xf32> to vector<8x8x8xbf16>
    "tpu.trace_start"() <{level = 10 : i32, message = "gqe,gke->gqk"}> : () -> ()
    %cst_21 = arith.constant dense<0.000000e+00> : vector<8x8x8xf32>
    %58 = tpu.matmul %47, %52, %cst_21 {dimension_numbers = #tpu.dot_dimension_numbers<[2], [2], [1], [1], [0, 0, 0, 1, 1, 1], [0], [0]>} : vector<8x8x8xbf16>, vector<8x8x8xbf16>, vector<8x8x8xf32> -> vector<8x8x8xf32>
    "tpu.trace_stop"() : () -> ()
    %cst_22 = arith.constant 0.353553385 : f32
    %59 = vector.broadcast %cst_22 : f32 to vector<8x8x8xf32>
    %60 = arith.mulf %58, %59 : vector<8x8x8xf32>
    %cst_23 = arith.constant dense<0xFF800000> : vector<8x8xf32>
    %61 = vector.multi_reduction <maximumf>, %60, %cst_23 [2] : vector<8x8x8xf32> to vector<8x8xf32>
    %62 = vector.shape_cast %61 : vector<8x8xf32> to vector<8x8x1xf32>
    %63 = vector.broadcast %62 : vector<8x8x1xf32> to vector<8x8x8xf32>
    %64 = arith.subf %60, %63 : vector<8x8x8xf32>
    %65 = math.exp %64 : vector<8x8x8xf32>
    %cst_24 = arith.constant dense<0.000000e+00> : vector<8x8xf32>
    %66 = vector.multi_reduction <add>, %65, %cst_24 [2] : vector<8x8x8xf32> to vector<8x8xf32>
    %67 = vector.shape_cast %66 : vector<8x8xf32> to vector<8x8x1xf32>
    %68 = tpu.reciprocal %67 {approx = true} : vector<8x8x1xf32> -> vector<8x8x1xf32>
    %69 = vector.broadcast %68 : vector<8x8x1xf32> to vector<8x8x8xf32>
    %70 = arith.mulf %65, %69 : vector<8x8x8xf32>
    %71 = arith.truncf %70 : vector<8x8x8xf32> to vector<8x8x8xbf16>
    "tpu.trace_start"() <{level = 10 : i32, message = "gqk,gke->gqe"}> : () -> ()
    %cst_25 = arith.constant dense<0.000000e+00> : vector<8x8x8xf32>
    %72 = tpu.matmul %71, %57, %cst_25 {dimension_numbers = #tpu.dot_dimension_numbers<[2], [1], [1], [2], [0, 0, 0, 1, 1, 2], [0], [0]>} : vector<8x8x8xbf16>, vector<8x8x8xbf16>, vector<8x8x8xf32> -> vector<8x8x8xf32>
    "tpu.trace_stop"() : () -> ()
    %73 = vector.shape_cast %72 : vector<8x8x8xf32> to vector<2x4x8x8xf32>
    %74 = tpu.transpose %73, [0, 2, 1, 3] : vector<2x4x8x8xf32> -> vector<2x8x4x8xf32>
    %75 = vector.shape_cast %74 : vector<2x8x4x8xf32> to vector<16x32xf32>
    %76 = arith.truncf %75 : vector<16x32xf32> to vector<16x32xbf16>
    %c0_26 = arith.constant 0 : index
    %c0_27 = arith.constant 0 : index
    %c0_28 = arith.constant 0 : index
    %77 = vector.load %arg6[%c0_26, %c0_27, %c0_28] : memref<1x32x32xbf16, #tpu.memory_space<vmem>>, vector<1x32x32xbf16>
    %78 = vector.shape_cast %77 : vector<1x32x32xbf16> to vector<32x32xbf16>
    %cst_29 = arith.constant dense<0.000000e+00> : vector<16x32xf32>
    %79 = tpu.matmul %76, %78, %cst_29 {dimension_numbers = #tpu.dot_dimension_numbers<[1], [0], [0], [1], [0, 0, 1, 1], [], []>} : vector<16x32xbf16>, vector<32x32xbf16>, vector<16x32xf32> -> vector<16x32xf32>
    %c0_30 = arith.constant 0 : index
    %c0_31 = arith.constant 0 : index
    %c0_32 = arith.constant 0 : index
    %80 = vector.load %arg7[%c0_30, %c0_31, %c0_32] : memref<1x1x32xf32, #tpu.memory_space<vmem>>, vector<1x1x32xf32>
    %81 = vector.shape_cast %80 : vector<1x1x32xf32> to vector<1x32xf32>
    %82 = vector.broadcast %81 : vector<1x32xf32> to vector<16x32xf32>
    %83 = arith.addf %79, %82 : vector<16x32xf32>
    %84 = vector.shape_cast %83 : vector<16x32xf32> to vector<2x8x32xf32>
    %85 = arith.addf %3, %84 : vector<2x8x32xf32>
    %c0_33 = arith.constant 0 : index
    %c0_34 = arith.constant 0 : index
    %c0_35 = arith.constant 0 : index
    %86 = vector.load %arg8[%c0_33, %c0_34, %c0_35] : memref<1x1x32xf32, #tpu.memory_space<vmem>>, vector<1x1x32xf32>
    %87 = vector.shape_cast %86 : vector<1x1x32xf32> to vector<1x32xf32>
    %c0_36 = arith.constant 0 : index
    %c0_37 = arith.constant 0 : index
    %c0_38 = arith.constant 0 : index
    %88 = vector.load %arg9[%c0_36, %c0_37, %c0_38] : memref<1x1x32xf32, #tpu.memory_space<vmem>>, vector<1x1x32xf32>
    %89 = vector.shape_cast %88 : vector<1x1x32xf32> to vector<1x32xf32>
    %cst_39 = arith.constant dense<0.000000e+00> : vector<2x8xf32>
    %90 = vector.multi_reduction <add>, %85, %cst_39 [2] : vector<2x8x32xf32> to vector<2x8xf32>
    %91 = vector.shape_cast %90 : vector<2x8xf32> to vector<2x8x1xf32>
    %cst_40 = arith.constant 3.200000e+01 : f32
    %92 = vector.broadcast %cst_40 : f32 to vector<2x8x1xf32>
    %93 = arith.divf %91, %92 : vector<2x8x1xf32>
    %94 = arith.mulf %85, %85 : vector<2x8x32xf32>
    %cst_41 = arith.constant dense<0.000000e+00> : vector<2x8xf32>
    %95 = vector.multi_reduction <add>, %94, %cst_41 [2] : vector<2x8x32xf32> to vector<2x8xf32>
    %96 = vector.shape_cast %95 : vector<2x8xf32> to vector<2x8x1xf32>
    %cst_42 = arith.constant 3.200000e+01 : f32
    %97 = vector.broadcast %cst_42 : f32 to vector<2x8x1xf32>
    %98 = arith.divf %96, %97 : vector<2x8x1xf32>
    %99 = arith.mulf %93, %93 : vector<2x8x1xf32>
    %100 = arith.subf %98, %99 : vector<2x8x1xf32>
    %cst_43 = arith.constant 0.000000e+00 : f32
    %101 = vector.broadcast %cst_43 : f32 to vector<2x8x1xf32>
    %102 = arith.maximumf %100, %101 : vector<2x8x1xf32>
    %103 = vector.broadcast %93 : vector<2x8x1xf32> to vector<2x8x32xf32>
    %104 = arith.subf %85, %103 : vector<2x8x32xf32>
    %cst_44 = arith.constant 9.99999997E-7 : f32
    %105 = vector.broadcast %cst_44 : f32 to vector<2x8x1xf32>
    %106 = arith.addf %102, %105 : vector<2x8x1xf32>
    %107 = math.rsqrt %106 : vector<2x8x1xf32>
    %108 = vector.broadcast %107 : vector<2x8x1xf32> to vector<2x8x32xf32>
    %109 = arith.mulf %104, %108 : vector<2x8x32xf32>
    %110 = vector.shape_cast %87 : vector<1x32xf32> to vector<1x1x32xf32>
    %111 = vector.broadcast %110 : vector<1x1x32xf32> to vector<2x8x32xf32>
    %112 = arith.mulf %109, %111 : vector<2x8x32xf32>
    %113 = vector.shape_cast %89 : vector<1x32xf32> to vector<1x1x32xf32>
    %114 = vector.broadcast %113 : vector<1x1x32xf32> to vector<2x8x32xf32>
    %115 = arith.addf %112, %114 : vector<2x8x32xf32>
    %116 = vector.shape_cast %115 : vector<2x8x32xf32> to vector<16x32xf32>
    %117 = arith.truncf %116 : vector<16x32xf32> to vector<16x32xbf16>
    %c0_45 = arith.constant 0 : index
    %c0_46 = arith.constant 0 : index
    %c0_47 = arith.constant 0 : index
    %118 = vector.load %arg10[%c0_45, %c0_46, %c0_47] : memref<1x32x128xbf16, #tpu.memory_space<vmem>>, vector<1x32x128xbf16>
    %119 = vector.shape_cast %118 : vector<1x32x128xbf16> to vector<32x128xbf16>
    %cst_48 = arith.constant dense<0.000000e+00> : vector<16x128xf32>
    %120 = tpu.matmul %117, %119, %cst_48 {dimension_numbers = #tpu.dot_dimension_numbers<[1], [0], [0], [1], [0, 0, 1, 1], [], []>} : vector<16x32xbf16>, vector<32x128xbf16>, vector<16x128xf32> -> vector<16x128xf32>
    %c0_49 = arith.constant 0 : index
    %c0_50 = arith.constant 0 : index
    %c0_51 = arith.constant 0 : index
    %121 = vector.load %arg11[%c0_49, %c0_50, %c0_51] : memref<1x1x128xf32, #tpu.memory_space<vmem>>, vector<1x1x128xf32>
    %122 = vector.shape_cast %121 : vector<1x1x128xf32> to vector<1x128xf32>
    %123 = vector.broadcast %122 : vector<1x128xf32> to vector<16x128xf32>
    %124 = arith.addf %120, %123 : vector<16x128xf32>
    %cst_52 = arith.constant 5.000000e-01 : f32
    %125 = vector.broadcast %cst_52 : f32 to vector<16x128xf32>
    %126 = arith.mulf %125, %124 : vector<16x128xf32>
    %cst_53 = arith.constant 0.707106769 : f32
    %127 = vector.broadcast %cst_53 : f32 to vector<16x128xf32>
    %128 = arith.mulf %124, %127 : vector<16x128xf32>
    %129 = math.erf %128 : vector<16x128xf32>
    %cst_54 = arith.constant 1.000000e+00 : f32
    %130 = vector.broadcast %cst_54 : f32 to vector<16x128xf32>
    %131 = arith.addf %130, %129 : vector<16x128xf32>
    %132 = arith.mulf %126, %131 : vector<16x128xf32>
    %133 = arith.truncf %132 : vector<16x128xf32> to vector<16x128xbf16>
    %c0_55 = arith.constant 0 : index
    %c0_56 = arith.constant 0 : index
    %c0_57 = arith.constant 0 : index
    %134 = vector.load %arg12[%c0_55, %c0_56, %c0_57] : memref<1x128x32xbf16, #tpu.memory_space<vmem>>, vector<1x128x32xbf16>
    %135 = vector.shape_cast %134 : vector<1x128x32xbf16> to vector<128x32xbf16>
    %cst_58 = arith.constant dense<0.000000e+00> : vector<16x32xf32>
    %136 = tpu.matmul %133, %135, %cst_58 {dimension_numbers = #tpu.dot_dimension_numbers<[1], [0], [0], [1], [0, 0, 1, 1], [], []>} : vector<16x128xbf16>, vector<128x32xbf16>, vector<16x32xf32> -> vector<16x32xf32>
    %c0_59 = arith.constant 0 : index
    %c0_60 = arith.constant 0 : index
    %c0_61 = arith.constant 0 : index
    %137 = vector.load %arg13[%c0_59, %c0_60, %c0_61] : memref<1x1x32xf32, #tpu.memory_space<vmem>>, vector<1x1x32xf32>
    %138 = vector.shape_cast %137 : vector<1x1x32xf32> to vector<1x32xf32>
    %139 = vector.broadcast %138 : vector<1x32xf32> to vector<16x32xf32>
    %140 = arith.addf %136, %139 : vector<16x32xf32>
    %141 = vector.shape_cast %140 : vector<16x32xf32> to vector<2x8x32xf32>
    %142 = arith.addf %85, %141 : vector<2x8x32xf32>
    %c0_62 = arith.constant 0 : index
    %c0_63 = arith.constant 0 : index
    %c0_64 = arith.constant 0 : index
    %143 = vector.load %arg17[%c0_62, %c0_63, %c0_64] : memref<2x8x32xf32, #tpu.memory_space<vmem>>, vector<2x8x32xf32>
    tpu.vector_store %arg17[%c0_62, %c0_63, %c0_64], %142 {strides = array<i32>} : memref<2x8x32xf32, #tpu.memory_space<vmem>>, vector<2x8x32xf32>,
    %c9_i32 = arith.constant 9 : i32
    %144 = arith.cmpi eq, %arg0, %c9_i32 : i32
    %145 = arith.extui %144 : i1 to i32
    %c0_i32_65 = arith.constant 0 : i32
    %146 = arith.cmpi ne, %145, %c0_i32_65 : i32
    scf.if %146 {
      %c0_66 = arith.constant 0 : index
      %c0_67 = arith.constant 0 : index
      %147 = vector.load %arg14[%c0_66, %c0_67] : memref<1x32xf32, #tpu.memory_space<vmem>>, vector<1x32xf32>
      %c0_68 = arith.constant 0 : index
      %c0_69 = arith.constant 0 : index
      %148 = vector.load %arg15[%c0_68, %c0_69] : memref<1x32xf32, #tpu.memory_space<vmem>>, vector<1x32xf32>
      %cst_70 = arith.constant dense<0.000000e+00> : vector<2x8xf32>
      %149 = vector.multi_reduction <add>, %142, %cst_70 [2] : vector<2x8x32xf32> to vector<2x8xf32>
      %150 = vector.shape_cast %149 : vector<2x8xf32> to vector<2x8x1xf32>
      %cst_71 = arith.constant 3.200000e+01 : f32
      %151 = vector.broadcast %cst_71 : f32 to vector<2x8x1xf32>
      %152 = arith.divf %150, %151 : vector<2x8x1xf32>
      %153 = arith.mulf %142, %142 : vector<2x8x32xf32>
      %cst_72 = arith.constant dense<0.000000e+00> : vector<2x8xf32>
      %154 = vector.multi_reduction <add>, %153, %cst_72 [2] : vector<2x8x32xf32> to vector<2x8xf32>
      %155 = vector.shape_cast %154 : vector<2x8xf32> to vector<2x8x1xf32>
      %cst_73 = arith.constant 3.200000e+01 : f32
      %156 = vector.broadcast %cst_73 : f32 to vector<2x8x1xf32>
      %157 = arith.divf %155, %156 : vector<2x8x1xf32>
      %158 = arith.mulf %152, %152 : vector<2x8x1xf32>
      %159 = arith.subf %157, %158 : vector<2x8x1xf32>
      %cst_74 = arith.constant 0.000000e+00 : f32
      %160 = vector.broadcast %cst_74 : f32 to vector<2x8x1xf32>
      %161 = arith.maximumf %159, %160 : vector<2x8x1xf32>
      %162 = vector.broadcast %152 : vector<2x8x1xf32> to vector<2x8x32xf32>
      %163 = arith.subf %142, %162 : vector<2x8x32xf32>
      %cst_75 = arith.constant 9.99999997E-7 : f32
      %164 = vector.broadcast %cst_75 : f32 to vector<2x8x1xf32>
      %165 = arith.addf %161, %164 : vector<2x8x1xf32>
      %166 = math.rsqrt %165 : vector<2x8x1xf32>
      %167 = vector.broadcast %166 : vector<2x8x1xf32> to vector<2x8x32xf32>
      %168 = arith.mulf %163, %167 : vector<2x8x32xf32>
      %169 = vector.shape_cast %147 : vector<1x32xf32> to vector<1x1x32xf32>
      %170 = vector.broadcast %169 : vector<1x1x32xf32> to vector<2x8x32xf32>
      %171 = arith.mulf %168, %170 : vector<2x8x32xf32>
      %172 = vector.shape_cast %148 : vector<1x32xf32> to vector<1x1x32xf32>
      %173 = vector.broadcast %172 : vector<1x1x32xf32> to vector<2x8x32xf32>
      %174 = arith.addf %171, %173 : vector<2x8x32xf32>
      %175 = vector.extract_strided_slice %174 {offsets = [0, 0, 0], sizes = [2, 1, 32], strides = [1, 1, 1]} : vector<2x8x32xf32> to vector<2x1x32xf32>
      %c0_76 = arith.constant 0 : index
      %c0_77 = arith.constant 0 : index
      %c0_78 = arith.constant 0 : index
      %176 = vector.load %arg16[%c0_76, %c0_77, %c0_78] : memref<2x1x32xf32, #tpu.memory_space<vmem>>, vector<2x1x32xf32>
      tpu.vector_store %arg16[%c0_76, %c0_77, %c0_78], %175 {strides = array<i32>} : memref<2x1x32xf32, #tpu.memory_space<vmem>>, vector<2x1x32xf32>,
    } else {
    }
    return
  }
  func.func @transform_1(%arg0: i32) -> (i32, i32, i32) {
    %c0_i32 = arith.constant 0 : i32
    %c0_i32_0 = arith.constant 0 : i32
    %c0_i32_1 = arith.constant 0 : i32
    return %arg0, %c0_i32, %c0_i32_0 : i32, i32, i32
  }
  func.func @transform_2(%arg0: i32) -> (i32, i32, i32) {
    %c0_i32 = arith.constant 0 : i32
    %c0_i32_0 = arith.constant 0 : i32
    %c0_i32_1 = arith.constant 0 : i32
    return %arg0, %c0_i32, %c0_i32_0 : i32, i32, i32
  }
  func.func @transform_3(%arg0: i32) -> (i32, i32, i32) {
    %c0_i32 = arith.constant 0 : i32
    %c0_i32_0 = arith.constant 0 : i32
    %c0_i32_1 = arith.constant 0 : i32
    return %arg0, %c0_i32, %c0_i32_0 : i32, i32, i32
  }
  func.func @transform_4(%arg0: i32) -> (i32, i32, i32) {
    %c0_i32 = arith.constant 0 : i32
    %c0_i32_0 = arith.constant 0 : i32
    %c0_i32_1 = arith.constant 0 : i32
    return %arg0, %c0_i32, %c0_i32_0 : i32, i32, i32
  }
  func.func @transform_5(%arg0: i32) -> (i32, i32, i32) {
    %c0_i32 = arith.constant 0 : i32
    %c0_i32_0 = arith.constant 0 : i32
    %c0_i32_1 = arith.constant 0 : i32
    return %arg0, %c0_i32, %c0_i32_0 : i32, i32, i32
  }
  func.func @transform_6(%arg0: i32) -> (i32, i32, i32) {
    %c0_i32 = arith.constant 0 : i32
    %c0_i32_0 = arith.constant 0 : i32
    %c0_i32_1 = arith.constant 0 : i32
    return %arg0, %c0_i32, %c0_i32_0 : i32, i32, i32
  }
  func.func @transform_7(%arg0: i32) -> (i32, i32, i32) {
    %c0_i32 = arith.constant 0 : i32
    %c0_i32_0 = arith.constant 0 : i32
    %c0_i32_1 = arith.constant 0 : i32
    return %arg0, %c0_i32, %c0_i32_0 : i32, i32, i32
  }
  func.func @transform_8(%arg0: i32) -> (i32, i32, i32) {
    %c0_i32 = arith.constant 0 : i32
    %c0_i32_0 = arith.constant 0 : i32
    %c0_i32_1 = arith.constant 0 : i32
    return %arg0, %c0_i32, %c0_i32_0 : i32, i32, i32
  }
  func.func @transform_9(%arg0: i32) -> (i32, i32, i32) {
    %c0_i32 = arith.constant 0 : i32
    %c0_i32_0 = arith.constant 0 : i32
    %c0_i32_1 = arith.constant 0 : i32
    return %arg0, %c0_i32, %c0_i32_0 : i32, i32, i32
  }
  func.func @transform_10(%arg0: i32) -> (i32, i32, i32) {
    %c0_i32 = arith.constant 0 : i32
    %c0_i32_0 = arith.constant 0 : i32
    %c0_i32_1 = arith.constant 0 : i32
    return %arg0, %c0_i32, %c0_i32_0 : i32, i32, i32
  }
  func.func @transform_11(%arg0: i32) -> (i32, i32, i32) {
    %c0_i32 = arith.constant 0 : i32
    %c0_i32_0 = arith.constant 0 : i32
    %c0_i32_1 = arith.constant 0 : i32
    return %arg0, %c0_i32, %c0_i32_0 : i32, i32, i32
  }
  func.func @transform_12(%arg0: i32) -> (i32, i32, i32) {
    %c0_i32 = arith.constant 0 : i32
    %c0_i32_0 = arith.constant 0 : i32
    %c0_i32_1 = arith.constant 0 : i32
    return %arg0, %c0_i32, %c0_i32_0 : i32, i32, i32
  }
  func.func @transform_13(%arg0: i32) -> (i32, i32) {
    %c0_i32 = arith.constant 0 : i32
    %c0_i32_0 = arith.constant 0 : i32
    %c0_i32_1 = arith.constant 0 : i32
    return %c0_i32, %c0_i32_0 : i32, i32
  }
  func.func @transform_14(%arg0: i32) -> (i32, i32) {
    %c0_i32 = arith.constant 0 : i32
    %c0_i32_0 = arith.constant 0 : i32
    %c0_i32_1 = arith.constant 0 : i32
    return %c0_i32, %c0_i32_0 : i32, i32
  }
  func.func @transform_15(%arg0: i32) -> (i32, i32, i32) {
    %c0_i32 = arith.constant 0 : i32
    %c0_i32_0 = arith.constant 0 : i32
    %c0_i32_1 = arith.constant 0 : i32
    %c0_i32_2 = arith.constant 0 : i32
    return %c0_i32, %c0_i32_0, %c0_i32_1 : i32, i32, i32
  }
}

</mosaic_0001>

<llo_original>
// kernel: tpu_custom_call.1
$region0: #{tpu_custom_call.1}
  #allocation0 [shape = 'u32[]', space=smem, size = 0x4, offset = 0x4, fixed_abs, tag = 'smem constant byte address 0x4 - core index']
  #allocation1 [shape = 'u32[144,128]{1,0:T(1,128)}', space=vmem, size = 0x12000, scoped, tag = 'internal scratch']
  #allocation2 [shape = 'f32[2,8,32]{2,1,0:T(8,128)}', space=vmem, size = 0x2000, scoped, tag = 'scratch operand']
  #allocation3 [shape = 's32[1]{0}', space=sflag, size = 0x4, scoped, tag = 'scratch operand']
  #allocation28 [shape = 's32[]', space=sflag, size = 0x4, offset = 0, fixed_abs, tag = 'sflag constant byte address 0x0 - dummy sync flag']
  #allocation29 [shape = 's32[]', space=sflag, size = 0x4, offset = 0, fixed_abs, tag = 'sflag constant byte address 0x0 - dummy sync flag']
  #allocation30 [shape = 'u32[]', space=smem, size = 0x4, offset = 0x44, fixed_abs, tag = 'smem constant byte address 0x44 - assertion arg 0']
  #allocation31 [shape = 'u32[]', space=smem, size = 0x4, offset = 0x48, fixed_abs, tag = 'smem constant byte address 0x48 - assertion arg 1']
  %s0 = inlined_call_operand.hbm [shape: f32[2,8,32], index: 0, kind: input, shape index: {}]
  %s1 = inlined_call_operand.hbm [shape: f32[10,1,32], index: 1, kind: input, shape index: {}]
  %s2 = inlined_call_operand.hbm [shape: f32[10,1,32], index: 2, kind: input, shape index: {}]
  %s3 = inlined_call_operand.hbm [shape: bf16[10,32,96], index: 3, kind: input, shape index: {}]
  %s4 = inlined_call_operand.hbm [shape: f32[10,1,96], index: 4, kind: input, shape index: {}]
  %s5 = inlined_call_operand.hbm [shape: bf16[10,32,32], index: 5, kind: input, shape index: {}]
  %s6 = inlined_call_operand.hbm [shape: f32[10,1,32], index: 6, kind: input, shape index: {}]
  %s7 = inlined_call_operand.hbm [shape: f32[10,1,32], index: 7, kind: input, shape index: {}]
  %s8 = inlined_call_operand.hbm [shape: f32[10,1,32], index: 8, kind: input, shape index: {}]
  %s9 = inlined_call_operand.hbm [shape: bf16[10,32,128], index: 9, kind: input, shape index: {}]
  %s10 = inlined_call_operand.hbm [shape: f32[10,1,128], index: 10, kind: input, shape index: {}]
  %s11 = inlined_call_operand.hbm [shape: bf16[10,128,32], index: 11, kind: input, shape index: {}]
  %s12 = inlined_call_operand.hbm [shape: f32[10,1,32], index: 12, kind: input, shape index: {}]
  %s13 = inlined_call_operand.hbm [shape: f32[1,32], index: 13, kind: input, shape index: {}]
  %s14 = inlined_call_operand.hbm [shape: f32[1,32], index: 14, kind: input, shape index: {}]
  %s15 = inlined_call_operand.hbm [shape: f32[2,1,32], index: 15, kind: output, shape index: {}]
  %s16 = sld [smem:[#allocation0]]
  $region157: #{tpu_custom_call.1} parent=0
    _
  %s18 = ssub.s32 1, %s16
  %s19 = scalar_select 0, %s18, %s16
  $region1: #{tpu_custom_call.1} parent=0
    #allocation4 [shape = 'u8[1024]{0}', space=vmem, size = 0x400, scoped, tag = 'input window, operand 1']
    #allocation5 [shape = 's32[2]{0}', space=sflag, size = 0x8, scoped, tag = 'scoped memory for tpu_custom_call.1']
    #allocation6 [shape = 's32[2]{0}', space=sflag, size = 0x8, scoped, tag = 'scoped memory for tpu_custom_call.1']
    #allocation7 [shape = 'u8[1024]{0}', space=vmem, size = 0x400, scoped, tag = 'input window, operand 2']
    #allocation8 [shape = 's32[2]{0}', space=sflag, size = 0x8, scoped, tag = 'scoped memory for tpu_custom_call.1']
    #allocation9 [shape = 'u8[16384]{0}', space=vmem, size = 0x4000, scoped, tag = 'input window, operand 3']
    #allocation10 [shape = 'u8[1024]{0}', space=vmem, size = 0x400, scoped, tag = 'input window, operand 4']
    #allocation11 [shape = 's32[2]{0}', space=sflag, size = 0x8, scoped, tag = 'scoped memory for tpu_custom_call.1']
    #allocation12 [shape = 'u8[16384]{0}', space=vmem, size = 0x4000, scoped, tag = 'input window, operand 5']
    #allocation13 [shape = 'u8[1024]{0}', space=vmem, size = 0x400, scoped, tag = 'input window, operand 6']
    #allocation14 [shape = 's32[2]{0}', space=sflag, size = 0x8, scoped, tag = 'scoped memory for tpu_custom_call.1']
    #allocation15 [shape = 'u8[1024]{0}', space=vmem, size = 0x400, scoped, tag = 'input window, operand 7']
    #allocation16 [shape = 'u8[1024]{0}', space=vmem, size = 0x400, scoped, tag = 'input window, operand 8']
    #allocation17 [shape = 's32[2]{0}', space=sflag, size = 0x8, scoped, tag = 'scoped memory for tpu_custom_call.1']
    #allocation18 [shape = 'u8[16384]{0}', space=vmem, size = 0x4000, scoped, tag = 'input window, operand 9']
    #allocation19 [shape = 'u8[1024]{0}', space=vmem, size = 0x400, scoped, tag = 'input window, operand 10']
    #allocation20 [shape = 's32[2]{0}', space=sflag, size = 0x8, scoped, tag = 'scoped memory for tpu_custom_call.1']
    #allocation21 [shape = 'u8[65536]{0}', space=vmem, size = 0x10000, scoped, tag = 'input window, operand 11']
    #allocation22 [shape = 'u8[1024]{0}', space=vmem, size = 0x400, scoped, tag = 'input window, operand 12']
    #allocation23 [shape = 's32[2]{0}', space=sflag, size = 0x8, scoped, tag = 'scoped memory for tpu_custom_call.1']
    #allocation24 [shape = 'u8[512]{0}', space=vmem, size = 0x400, scoped, tag = 'input window, operand 13, single buffered']
    #allocation25 [shape = 'u8[512]{0}', space=vmem, size = 0x400, scoped, tag = 'input window, operand 14, single buffered']
    #allocation26 [shape = 's32[1]{0}', space=sflag, size = 0x4, scoped, tag = 'scoped memory for tpu_custom_call.1']
    #allocation27 [shape = 'u8[1024]{0}', space=vmem, size = 0x400, scoped, tag = 'output window, operand 0, single buffered']
    %20 = vsyncpa [#allocation5], 0
    %s21 = scalar_lea.sflag [#allocation5], 1
    %22 = vsyncpa %s21, 0
    %23 = vsyncpa [#allocation8], 0
    %s24 = scalar_lea.sflag [#allocation8], 1
    %25 = vsyncpa %s24, 0
    %26 = vsyncpa [#allocation11], 0
    %s27 = scalar_lea.sflag [#allocation11], 1
    %28 = vsyncpa %s27, 0
    %29 = vsyncpa [#allocation14], 0
    %s30 = scalar_lea.sflag [#allocation14], 1
    %31 = vsyncpa %s30, 0
    %32 = vsyncpa [#allocation17], 0
    %s33 = scalar_lea.sflag [#allocation17], 1
    %34 = vsyncpa %s33, 0
    %35 = vsyncpa [#allocation20], 0
    %s36 = scalar_lea.sflag [#allocation20], 1
    %37 = vsyncpa %s36, 0
    %38 = vsyncpa [#allocation23], 0
    %s39 = scalar_lea.sflag [#allocation23], 1
    %40 = vsyncpa %s39, 0
    %41 = vsyncpa [#allocation26], 0
    %42 = vsyncpa [#allocation6], 0
    loop: start=0, step=1, limit=12
    $region2: #{tpu_custom_call.1} parent=1 // loop_pre_header
      _
    $region3: #{tpu_custom_call.1} parent=1 // loop_header
      %s44 = sphi 0, %s48
      %p45 = scmp.ge.s32.totalorder %s44, 12
      %s54 = sphi 0, %s56
      %s57 = sphi 0, %s54
      %s58 = sphi 0, %s57
      %s74 = sphi 0, %s58
      %s80 = sphi 0, %s82
      %s83 = sphi 0, %s80
      %s84 = sphi 0, %s83
      %s100 = sphi 0, %s84
      %s106 = sphi 0, %s108
      %s109 = sphi 0, %s106
      %s110 = sphi 0, %s109
      %s126 = sphi 0, %s110
      %s132 = sphi 0, %s134
      %s135 = sphi 0, %s132
      %s136 = sphi 0, %s135
      %s152 = sphi 0, %s136
      %s158 = sphi 0, %s160
      %s161 = sphi 0, %s158
      %s162 = sphi 0, %s161
      %s178 = sphi 0, %s162
      %s184 = sphi 0, %s186
      %s187 = sphi 0, %s184
      %s188 = sphi 0, %s187
      %s204 = sphi 0, %s188
      %s210 = sphi 0, %s212
      %s213 = sphi 0, %s210
      %s214 = sphi 0, %s213
      %s230 = sphi 0, %s214
      %s236 = sphi 0, %s238
      %s239 = sphi 0, %s236
      %s240 = sphi 0, %s239
      %s256 = sphi 0, %s240
      %s262 = sphi 0, %s264
      %s265 = sphi 0, %s262
      %s266 = sphi 0, %s265
      %s282 = sphi 0, %s266
      %s288 = sphi 0, %s290
      %s291 = sphi 0, %s288
      %s292 = sphi 0, %s291
      %s308 = sphi 0, %s292
      %s314 = sphi 0, %s316
      %s317 = sphi 0, %s314
      %s318 = sphi 0, %s317
      %s334 = sphi 0, %s318
      %s340 = sphi 0, %s342
      %s343 = sphi 0, %s340
      %s344 = sphi 0, %s343
      %s360 = sphi 0, %s344
      %s364 = sphi 0, %s364
      %s366 = sphi 0, %s364
      %s367 = sphi 0, %s366
      %s381 = sphi 0, %s367
      %s385 = sphi 0, %s385
      %s387 = sphi 0, %s385
      %s388 = sphi 0, %s387
      %s402 = sphi 0, %s388
      %s406 = sphi 0, %s406
      %s408 = sphi 0, %s406
      %s409 = sphi 0, %s408
      %s423 = sphi 0, %s409
    $region4: #{tpu_custom_call.1} parent=1 // loop_header_branch
      %47 = sbr.rel (%p45) target = $region8
    $region5: #{tpu_custom_call.1} parent=1 // loop_body
      %s49 = ssub.s32 %s44, 1
      %s50 = ssub.s32 %s44, 2
      %s51 = sadd.s32 %s44, 1
      %s52 = ssub.s32 %s44, %s51
      %p53 = scmp.eq.s32.totalorder %s52, 0
      %s55 = sadd.s32 %s54, 1
      %s56 = scalar_select %p53, %s54, %s55
      %p59 = pneg %p53
      %p60 = scmp.eq.s32.totalorder %s44, 9
      %p61 = por %p59, %p60
      %p62 = scmp.ne.s32.totalorder %s54, %s57
      %p63 = scmp.eq.s32.totalorder %s44, 0
      %p64 = por %p62, %p63
      %p65 = scmp.ne.s32.totalorder %s54, %s57
      %p66 = scmp.eq.s32.totalorder %s49, 9
      %p67 = por %p65, %p66
      %p68 = scmp.ne.s32.totalorder %s57, %s58
      %p69 = scmp.eq.s32.totalorder %s49, 0
      %p70 = por %p68, %p69
      %p71 = scmp.ne.s32.totalorder %s57, %s58
      %p72 = scmp.eq.s32.totalorder %s50, 9
      %p73 = por %p71, %p72
      %p75 = scmp.ne.s32.totalorder %s58, %s74
      %p76 = scmp.eq.s32.totalorder %s50, 0
      %p77 = por %p75, %p76
      %s78 = ssub.s32 %s44, %s51
      %p79 = scmp.eq.s32.totalorder %s78, 0
      %s81 = sadd.s32 %s80, 1
      %s82 = scalar_select %p79, %s80, %s81
      %p85 = pneg %p79
      %p86 = scmp.eq.s32.totalorder %s44, 9
      %p87 = por %p85, %p86
      %p88 = scmp.ne.s32.totalorder %s80, %s83
      %p89 = scmp.eq.s32.totalorder %s44, 0
      %p90 = por %p88, %p89
      %p91 = scmp.ne.s32.totalorder %s80, %s83
      %p92 = scmp.eq.s32.totalorder %s49, 9
      %p93 = por %p91, %p92
      %p94 = scmp.ne.s32.totalorder %s83, %s84
      %p95 = scmp.eq.s32.totalorder %s49, 0
      %p96 = por %p94, %p95
      %p97 = scmp.ne.s32.totalorder %s83, %s84
      %p98 = scmp.eq.s32.totalorder %s50, 9
      %p99 = por %p97, %p98
      %p101 = scmp.ne.s32.totalorder %s84, %s100
      %p102 = scmp.eq.s32.totalorder %s50, 0
      %p103 = por %p101, %p102
      %s104 = ssub.s32 %s44, %s51
      %p105 = scmp.eq.s32.totalorder %s104, 0
      %s107 = sadd.s32 %s106, 1
      %s108 = scalar_select %p105, %s106, %s107
      %p111 = pneg %p105
      %p112 = scmp.eq.s32.totalorder %s44, 9
      %p113 = por %p111, %p112
      %p114 = scmp.ne.s32.totalorder %s106, %s109
      %p115 = scmp.eq.s32.totalorder %s44, 0
      %p116 = por %p114, %p115
      %p117 = scmp.ne.s32.totalorder %s106, %s109
      %p118 = scmp.eq.s32.totalorder %s49, 9
      %p119 = por %p117, %p118
      %p120 = scmp.ne.s32.totalorder %s109, %s110
      %p121 = scmp.eq.s32.totalorder %s49, 0
      %p122 = por %p120, %p121
      %p123 = scmp.ne.s32.totalorder %s109, %s110
      %p124 = scmp.eq.s32.totalorder %s50, 9
      %p125 = por %p123, %p124
      %p127 = scmp.ne.s32.totalorder %s110, %s126
      %p128 = scmp.eq.s32.totalorder %s50, 0
      %p129 = por %p127, %p128
      %s130 = ssub.s32 %s44, %s51
      %p131 = scmp.eq.s32.totalorder %s130, 0
      %s133 = sadd.s32 %s132, 1
      %s134 = scalar_select %p131, %s132, %s133
      %p137 = pneg %p131
      %p138 = scmp.eq.s32.totalorder %s44, 9
      %p139 = por %p137, %p138
      %p140 = scmp.ne.s32.totalorder %s132, %s135
      %p141 = scmp.eq.s32.totalorder %s44, 0
      %p142 = por %p140, %p141
      %p143 = scmp.ne.s32.totalorder %s132, %s135
      %p144 = scmp.eq.s32.totalorder %s49, 9
      %p145 = por %p143, %p144
      %p146 = scmp.ne.s32.totalorder %s135, %s136
      %p147 = scmp.eq.s32.totalorder %s49, 0
      %p148 = por %p146, %p147
      %p149 = scmp.ne.s32.totalorder %s135, %s136
      %p150 = scmp.eq.s32.totalorder %s50, 9
      %p151 = por %p149, %p150
      %p153 = scmp.ne.s32.totalorder %s136, %s152
      %p154 = scmp.eq.s32.totalorder %s50, 0
      %p155 = por %p153, %p154
      %s156 = ssub.s32 %s44, %s51
      %p157 = scmp.eq.s32.totalorder %s156, 0
      %s159 = sadd.s32 %s158, 1
      %s160 = scalar_select %p157, %s158, %s159
      %p163 = pneg %p157
      %p164 = scmp.eq.s32.totalorder %s44, 9
      %p165 = por %p163, %p164
      %p166 = scmp.ne.s32.totalorder %s158, %s161
      %p167 = scmp.eq.s32.totalorder %s44, 0
      %p168 = por %p166, %p167
      %p169 = scmp.ne.s32.totalorder %s158, %s161
      %p170 = scmp.eq.s32.totalorder %s49, 9
      %p171 = por %p169, %p170
      %p172 = scmp.ne.s32.totalorder %s161, %s162
      %p173 = scmp.eq.s32.totalorder %s49, 0
      %p174 = por %p172, %p173
      %p175 = scmp.ne.s32.totalorder %s161, %s162
      %p176 = scmp.eq.s32.totalorder %s50, 9
      %p177 = por %p175, %p176
      %p179 = scmp.ne.s32.totalorder %s162, %s178
      %p180 = scmp.eq.s32.totalorder %s50, 0
      %p181 = por %p179, %p180
      %s182 = ssub.s32 %s44, %s51
      %p183 = scmp.eq.s32.totalorder %s182, 0
      %s185 = sadd.s32 %s184, 1
      %s186 = scalar_select %p183, %s184, %s185
      %p189 = pneg %p183
      %p190 = scmp.eq.s32.totalorder %s44, 9
      %p191 = por %p189, %p190
      %p192 = scmp.ne.s32.totalorder %s184, %s187
      %p193 = scmp.eq.s32.totalorder %s44, 0
      %p194 = por %p192, %p193
      %p195 = scmp.ne.s32.totalorder %s184, %s187
      %p196 = scmp.eq.s32.totalorder %s49, 9
      %p197 = por %p195, %p196
      %p198 = scmp.ne.s32.totalorder %s187, %s188
      %p199 = scmp.eq.s32.totalorder %s49, 0
      %p200 = por %p198, %p199
      %p201 = scmp.ne.s32.totalorder %s187, %s188
      %p202 = scmp.eq.s32.totalorder %s50, 9
      %p203 = por %p201, %p202
      %p205 = scmp.ne.s32.totalorder %s188, %s204
      %p206 = scmp.eq.s32.totalorder %s50, 0
      %p207 = por %p205, %p206
      %s208 = ssub.s32 %s44, %s51
      %p209 = scmp.eq.s32.totalorder %s208, 0
      %s211 = sadd.s32 %s210, 1
      %s212 = scalar_select %p209, %s210, %s211
      %p215 = pneg %p209
      %p216 = scmp.eq.s32.totalorder %s44, 9
      %p217 = por %p215, %p216
      %p218 = scmp.ne.s32.totalorder %s210, %s213
      %p219 = scmp.eq.s32.totalorder %s44, 0
      %p220 = por %p218, %p219
      %p221 = scmp.ne.s32.totalorder %s210, %s213
      %p222 = scmp.eq.s32.totalorder %s49, 9
      %p223 = por %p221, %p222
      %p224 = scmp.ne.s32.totalorder %s213, %s214
      %p225 = scmp.eq.s32.totalorder %s49, 0
      %p226 = por %p224, %p225
      %p227 = scmp.ne.s32.totalorder %s213, %s214
      %p228 = scmp.eq.s32.totalorder %s50, 9
      %p229 = por %p227, %p228
      %p231 = scmp.ne.s32.totalorder %s214, %s230
      %p232 = scmp.eq.s32.totalorder %s50, 0
      %p233 = por %p231, %p232
      %s234 = ssub.s32 %s44, %s51
      %p235 = scmp.eq.s32.totalorder %s234, 0
      %s237 = sadd.s32 %s236, 1
      %s238 = scalar_select %p235, %s236, %s237
      %p241 = pneg %p235
      %p242 = scmp.eq.s32.totalorder %s44, 9
      %p243 = por %p241, %p242
      %p244 = scmp.ne.s32.totalorder %s236, %s239
      %p245 = scmp.eq.s32.totalorder %s44, 0
      %p246 = por %p244, %p245
      %p247 = scmp.ne.s32.totalorder %s236, %s239
      %p248 = scmp.eq.s32.totalorder %s49, 9
      %p249 = por %p247, %p248
      %p250 = scmp.ne.s32.totalorder %s239, %s240
      %p251 = scmp.eq.s32.totalorder %s49, 0
      %p252 = por %p250, %p251
      %p253 = scmp.ne.s32.totalorder %s239, %s240
      %p254 = scmp.eq.s32.totalorder %s50, 9
      %p255 = por %p253, %p254
      %p257 = scmp.ne.s32.totalorder %s240, %s256
      %p258 = scmp.eq.s32.totalorder %s50, 0
      %p259 = por %p257, %p258
      %s260 = ssub.s32 %s44, %s51
      %p261 = scmp.eq.s32.totalorder %s260, 0
      %s263 = sadd.s32 %s262, 1
      %s264 = scalar_select %p261, %s262, %s263
      %p267 = pneg %p261
      %p268 = scmp.eq.s32.totalorder %s44, 9
      %p269 = por %p267, %p268
      %p270 = scmp.ne.s32.totalorder %s262, %s265
      %p271 = scmp.eq.s32.totalorder %s44, 0
      %p272 = por %p270, %p271
      %p273 = scmp.ne.s32.totalorder %s262, %s265
      %p274 = scmp.eq.s32.totalorder %s49, 9
      %p275 = por %p273, %p274
      %p276 = scmp.ne.s32.totalorder %s265, %s266
      %p277 = scmp.eq.s32.totalorder %s49, 0
      %p278 = por %p276, %p277
      %p279 = scmp.ne.s32.totalorder %s265, %s266
      %p280 = scmp.eq.s32.totalorder %s50, 9
      %p281 = por %p279, %p280
      %p283 = scmp.ne.s32.totalorder %s266, %s282
      %p284 = scmp.eq.s32.totalorder %s50, 0
      %p285 = por %p283, %p284
      %s286 = ssub.s32 %s44, %s51
      %p287 = scmp.eq.s32.totalorder %s286, 0
      %s289 = sadd.s32 %s288, 1
      %s290 = scalar_select %p287, %s288, %s289
      %p293 = pneg %p287
      %p294 = scmp.eq.s32.totalorder %s44, 9
      %p295 = por %p293, %p294
      %p296 = scmp.ne.s32.totalorder %s288, %s291
      %p297 = scmp.eq.s32.totalorder %s44, 0
      %p298 = por %p296, %p297
      %p299 = scmp.ne.s32.totalorder %s288, %s291
      %p300 = scmp.eq.s32.totalorder %s49, 9
      %p301 = por %p299, %p300
      %p302 = scmp.ne.s32.totalorder %s291, %s292
      %p303 = scmp.eq.s32.totalorder %s49, 0
      %p304 = por %p302, %p303
      %p305 = scmp.ne.s32.totalorder %s291, %s292
      %p306 = scmp.eq.s32.totalorder %s50, 9
      %p307 = por %p305, %p306
      %p309 = scmp.ne.s32.totalorder %s292, %s308
      %p310 = scmp.eq.s32.totalorder %s50, 0
      %p311 = por %p309, %p310
      %s312 = ssub.s32 %s44, %s51
      %p313 = scmp.eq.s32.totalorder %s312, 0
      %s315 = sadd.s32 %s314, 1
      %s316 = scalar_select %p313, %s314, %s315
      %p319 = pneg %p313
      %p320 = scmp.eq.s32.totalorder %s44, 9
      %p321 = por %p319, %p320
      %p322 = scmp.ne.s32.totalorder %s314, %s317
      %p323 = scmp.eq.s32.totalorder %s44, 0
      %p324 = por %p322, %p323
      %p325 = scmp.ne.s32.totalorder %s314, %s317
      %p326 = scmp.eq.s32.totalorder %s49, 9
      %p327 = por %p325, %p326
      %p328 = scmp.ne.s32.totalorder %s317, %s318
      %p329 = scmp.eq.s32.totalorder %s49, 0
      %p330 = por %p328, %p329
      %p331 = scmp.ne.s32.totalorder %s317, %s318
      %p332 = scmp.eq.s32.totalorder %s50, 9
      %p333 = por %p331, %p332
      %p335 = scmp.ne.s32.totalorder %s318, %s334
      %p336 = scmp.eq.s32.totalorder %s50, 0
      %p337 = por %p335, %p336
      %s338 = ssub.s32 %s44, %s51
      %p339 = scmp.eq.s32.totalorder %s338, 0
      %s341 = sadd.s32 %s340, 1
      %s342 = scalar_select %p339, %s340, %s341
      %p345 = pneg %p339
      %p346 = scmp.eq.s32.totalorder %s44, 9
      %p347 = por %p345, %p346
      %p348 = scmp.ne.s32.totalorder %s340, %s343
      %p349 = scmp.eq.s32.totalorder %s44, 0
      %p350 = por %p348, %p349
      %p351 = scmp.ne.s32.totalorder %s340, %s343
      %p352 = scmp.eq.s32.totalorder %s49, 9
      %p353 = por %p351, %p352
      %p354 = scmp.ne.s32.totalorder %s343, %s344
      %p355 = scmp.eq.s32.totalorder %s49, 0
      %p356 = por %p354, %p355
      %p357 = scmp.ne.s32.totalorder %s343, %s344
      %p358 = scmp.eq.s32.totalorder %s50, 9
      %p359 = por %p357, %p358
      %p361 = scmp.ne.s32.totalorder %s344, %s360
      %p362 = scmp.eq.s32.totalorder %s50, 0
      %p363 = por %p361, %p362
      %s365 = sadd.s32 %s364, 1
      %p368 = scmp.eq.s32.totalorder %s44, 9
      %p369 = scmp.ne.s32.totalorder %s364, %s366
      %p370 = scmp.eq.s32.totalorder %s44, 0
      %p371 = por %p369, %p370
      %p372 = scmp.ne.s32.totalorder %s364, %s366
      %p373 = scmp.eq.s32.totalorder %s49, 9
      %p374 = por %p372, %p373
      %p375 = scmp.ne.s32.totalorder %s366, %s367
      %p376 = scmp.eq.s32.totalorder %s49, 0
      %p377 = por %p375, %p376
      %p378 = scmp.ne.s32.totalorder %s366, %s367
      %p379 = scmp.eq.s32.totalorder %s50, 9
      %p380 = por %p378, %p379
      %p382 = scmp.ne.s32.totalorder %s367, %s381
      %p383 = scmp.eq.s32.totalorder %s50, 0
      %p384 = por %p382, %p383
      %s386 = sadd.s32 %s385, 1
      %p389 = scmp.eq.s32.totalorder %s44, 9
      %p390 = scmp.ne.s32.totalorder %s385, %s387
      %p391 = scmp.eq.s32.totalorder %s44, 0
      %p392 = por %p390, %p391
      %p393 = scmp.ne.s32.totalorder %s385, %s387
      %p394 = scmp.eq.s32.totalorder %s49, 9
      %p395 = por %p393, %p394
      %p396 = scmp.ne.s32.totalorder %s387, %s388
      %p397 = scmp.eq.s32.totalorder %s49, 0
      %p398 = por %p396, %p397
      %p399 = scmp.ne.s32.totalorder %s387, %s388
      %p400 = scmp.eq.s32.totalorder %s50, 9
      %p401 = por %p399, %p400
      %p403 = scmp.ne.s32.totalorder %s388, %s402
      %p404 = scmp.eq.s32.totalorder %s50, 0
      %p405 = por %p403, %p404
      %s407 = sadd.s32 %s406, 1
      %p410 = scmp.eq.s32.totalorder %s44, 9
      %p411 = scmp.ne.s32.totalorder %s406, %s408
      %p412 = scmp.eq.s32.totalorder %s44, 0
      %p413 = por %p411, %p412
      %p414 = scmp.ne.s32.totalorder %s406, %s408
      %p415 = scmp.eq.s32.totalorder %s49, 9
      %p416 = por %p414, %p415
      %p417 = scmp.ne.s32.totalorder %s408, %s409
      %p418 = scmp.eq.s32.totalorder %s49, 0
      %p419 = por %p417, %p418
      %p420 = scmp.ne.s32.totalorder %s408, %s409
      %p421 = scmp.eq.s32.totalorder %s50, 9
      %p422 = por %p420, %p421
      %p424 = scmp.ne.s32.totalorder %s409, %s423
      %p425 = scmp.eq.s32.totalorder %s50, 0
      %p426 = por %p424, %p425
      %p427 = scmp.le.s32.totalorder 1, %s44
      %p428 = scmp.lt.s32.totalorder %s44, 11
      %p429 = pnand %p427, %p428
      %p430 = pneg %p429
      // Predicated region
      $region9: #{tpu_custom_call.1} parent=5 // pred_check
        _
      $region10: #{tpu_custom_call.1} parent=5 // pred_check_branch
        %432 = sbr.rel (%p429) target = $region12
      $region11: #{tpu_custom_call.1} parent=5 // pred_region
        %s433 = ssub.s32 %s44, 1
        // Predicated region
        $region13: #{tpu_custom_call.1} parent=11 // pred_check
          %p434 = pneg %p377
        $region14: #{tpu_custom_call.1} parent=11 // pred_check_branch
          %436 = sbr.rel (%p434) target = $region16
        $region15: #{tpu_custom_call.1} parent=11 // pred_region
          %s438 = ssub.s32 16, 16
          %439 = vsyncadd [#allocation23], %s438
          %s441 = sshll.u32 [#allocation24], 4
          %s442 = int_to_ptr.vmem [resolvable:$true] %s441
          %444 = dma.hbm_to_vmem [thread:$0]  %s13, 16, %s442, [#allocation23]
        $region16: #{tpu_custom_call.1} parent=11 // pred_fallthru
          _
        // Predicated region
        $region17: #{tpu_custom_call.1} parent=11 // pred_check
          %p445 = pneg %p398
        $region18: #{tpu_custom_call.1} parent=11 // pred_check_branch
          %447 = sbr.rel (%p445) target = $region20
        $region19: #{tpu_custom_call.1} parent=11 // pred_region
          %s449 = ssub.s32 16, 16
          %450 = vsyncadd [#allocation26], %s449
          %s452 = sshll.u32 [#allocation25], 4
          %s453 = int_to_ptr.vmem [resolvable:$true] %s452
          %455 = dma.hbm_to_vmem [thread:$0]  %s14, 16, %s453, [#allocation26]
        $region20: #{tpu_custom_call.1} parent=11 // pred_fallthru
          _
      $region12: #{tpu_custom_call.1} parent=5 // pred_fallthru
        _
      %p456 = scmp.lt.s32.totalorder %s44, 10
      // Predicated region
      $region21: #{tpu_custom_call.1} parent=5 // pred_check
        %p457 = pneg %p456
      $region22: #{tpu_custom_call.1} parent=5 // pred_check_branch
        %459 = sbr.rel (%p457) target = $region24
      $region23: #{tpu_custom_call.1} parent=5 // pred_region
        // Predicated region
        $region25: #{tpu_custom_call.1} parent=23 // pred_check
          %p460 = pneg %p64
        $region26: #{tpu_custom_call.1} parent=23 // pred_check_branch
          %462 = sbr.rel (%p460) target = $region28
        $region27: #{tpu_custom_call.1} parent=23 // pred_region
          %s463 = sand.u32 %s54, 1
          %s464 = scalar_lea.sflag [#allocation5], %s463
          %s465 = sand.u32 %s54, 1
          %s466 = scalar_lea.vmem [#allocation4], %s465
          %s468 = ssub.s32 16, 16
          %469 = vsyncadd %s464, %s468
          %s470 = smul.addr %s44, 16
          %s471 = scalar_lea.hbm %s1, %s470
          %s473 = sshll.u32 %s466, 4
          %s474 = int_to_ptr.vmem [resolvable:$true] %s473
          %476 = dma.hbm_to_vmem [thread:$0]  %s471, 16, %s474, %s464
        $region28: #{tpu_custom_call.1} parent=23 // pred_fallthru
          _
        // Predicated region
        $region29: #{tpu_custom_call.1} parent=23 // pred_check
          %p477 = pneg %p90
        $region30: #{tpu_custom_call.1} parent=23 // pred_check_branch
          %479 = sbr.rel (%p477) target = $region32
        $region31: #{tpu_custom_call.1} parent=23 // pred_region
          %s480 = sand.u32 %s44, 1
          %s481 = scalar_lea.sflag [#allocation8], %s480
          %s482 = sand.u32 %s80, 1
          %s483 = scalar_lea.vmem [#allocation7], %s482
          %s485 = ssub.s32 16, 16
          %486 = vsyncadd %s481, %s485
          %s487 = smul.addr %s44, 16
          %s488 = scalar_lea.hbm %s2, %s487
          %s490 = sshll.u32 %s483, 4
          %s491 = int_to_ptr.vmem [resolvable:$true] %s490
          %493 = dma.hbm_to_vmem [thread:$0]  %s488, 16, %s491, %s481
        $region32: #{tpu_custom_call.1} parent=23 // pred_fallthru
          _
        // Predicated region
        $region33: #{tpu_custom_call.1} parent=23 // pred_check
          %p494 = pneg %p116
        $region34: #{tpu_custom_call.1} parent=23 // pred_check_branch
          %496 = sbr.rel (%p494) target = $region36
        $region35: #{tpu_custom_call.1} parent=23 // pred_region
          %s497 = sand.u32 %s44, 1
          %s498 = scalar_lea.sflag [#allocation8], %s497
          %s499 = sand.u32 %s106, 1
          %s500 = smul.addr %s499, 16
          %s501 = scalar_lea.vmem [#allocation9], %s500
          %s503 = ssub.s32 256, 256
          %504 = vsyncadd %s498, %s503
          %s505 = smul.addr %s44, 4
          %s506 = smul.addr %s505, 64
          %s507 = scalar_lea.hbm %s3, %s506
          %s508 = sshll.u32 %s501, 4
          %s509 = int_to_ptr.vmem [resolvable:$true] %s508
          %514 = dma.hbm_to_vmem [thread:$0]  %s507, 256, %s509, %s498, 64, 64, 4
        $region36: #{tpu_custom_call.1} parent=23 // pred_fallthru
          _
        // Predicated region
        $region37: #{tpu_custom_call.1} parent=23 // pred_check
          %p515 = pneg %p142
        $region38: #{tpu_custom_call.1} parent=23 // pred_check_branch
          %517 = sbr.rel (%p515) target = $region40
        $region39: #{tpu_custom_call.1} parent=23 // pred_region
          %s518 = sand.u32 %s44, 1
          %s519 = scalar_lea.sflag [#allocation11], %s518
          %s520 = sand.u32 %s132, 1
          %s521 = scalar_lea.vmem [#allocation10], %s520
          %s523 = ssub.s32 16, 16
          %524 = vsyncadd %s519, %s523
          %s525 = smul.addr %s44, 16
          %s526 = scalar_lea.hbm %s4, %s525
          %s528 = sshll.u32 %s521, 4
          %s529 = int_to_ptr.vmem [resolvable:$true] %s528
          %531 = dma.hbm_to_vmem [thread:$0]  %s526, 16, %s529, %s519
        $region40: #{tpu_custom_call.1} parent=23 // pred_fallthru
          _
        // Predicated region
        $region41: #{tpu_custom_call.1} parent=23 // pred_check
          %p532 = pneg %p168
        $region42: #{tpu_custom_call.1} parent=23 // pred_check_branch
          %534 = sbr.rel (%p532) target = $region44
        $region43: #{tpu_custom_call.1} parent=23 // pred_region
          %s535 = sand.u32 %s44, 1
          %s536 = scalar_lea.sflag [#allocation11], %s535
          %s537 = sand.u32 %s158, 1
          %s538 = smul.addr %s537, 16
          %s539 = scalar_lea.vmem [#allocation12], %s538
          %s541 = ssub.s32 256, 256
          %542 = vsyncadd %s536, %s541
          %s543 = smul.addr %s44, 4
          %s544 = smul.addr %s543, 64
          %s545 = scalar_lea.hbm %s5, %s544
          %s546 = sshll.u32 %s539, 4
          %s547 = int_to_ptr.vmem [resolvable:$true] %s546
          %552 = dma.hbm_to_vmem [thread:$0]  %s545, 256, %s547, %s536, 64, 64, 4
        $region44: #{tpu_custom_call.1} parent=23 // pred_fallthru
          _
        // Predicated region
        $region45: #{tpu_custom_call.1} parent=23 // pred_check
          %p553 = pneg %p194
        $region46: #{tpu_custom_call.1} parent=23 // pred_check_branch
          %555 = sbr.rel (%p553) target = $region48
        $region47: #{tpu_custom_call.1} parent=23 // pred_region
          %s556 = sand.u32 %s44, 1
          %s557 = scalar_lea.sflag [#allocation14], %s556
          %s558 = sand.u32 %s184, 1
          %s559 = scalar_lea.vmem [#allocation13], %s558
          %s561 = ssub.s32 16, 16
          %562 = vsyncadd %s557, %s561
          %s563 = smul.addr %s44, 16
          %s564 = scalar_lea.hbm %s6, %s563
          %s566 = sshll.u32 %s559, 4
          %s567 = int_to_ptr.vmem [resolvable:$true] %s566
          %569 = dma.hbm_to_vmem [thread:$0]  %s564, 16, %s567, %s557
        $region48: #{tpu_custom_call.1} parent=23 // pred_fallthru
          _
        // Predicated region
        $region49: #{tpu_custom_call.1} parent=23 // pred_check
          %p570 = pneg %p220
        $region50: #{tpu_custom_call.1} parent=23 // pred_check_branch
          %572 = sbr.rel (%p570) target = $region52
        $region51: #{tpu_custom_call.1} parent=23 // pred_region
          %s573 = sand.u32 %s44, 1
          %s574 = scalar_lea.sflag [#allocation14], %s573
          %s575 = sand.u32 %s210, 1
          %s576 = scalar_lea.vmem [#allocation15], %s575
          %s578 = ssub.s32 16, 16
          %579 = vsyncadd %s574, %s578
          %s580 = smul.addr %s44, 16
          %s581 = scalar_lea.hbm %s7, %s580
          %s583 = sshll.u32 %s576, 4
          %s584 = int_to_ptr.vmem [resolvable:$true] %s583
          %586 = dma.hbm_to_vmem [thread:$0]  %s581, 16, %s584, %s574
        $region52: #{tpu_custom_call.1} parent=23 // pred_fallthru
          _
        // Predicated region
        $region53: #{tpu_custom_call.1} parent=23 // pred_check
          %p587 = pneg %p246
        $region54: #{tpu_custom_call.1} parent=23 // pred_check_branch
          %589 = sbr.rel (%p587) target = $region56
        $region55: #{tpu_custom_call.1} parent=23 // pred_region
          %s590 = sand.u32 %s44, 1
          %s591 = scalar_lea.sflag [#allocation17], %s590
          %s592 = sand.u32 %s236, 1
          %s593 = scalar_lea.vmem [#allocation16], %s592
          %s595 = ssub.s32 16, 16
          %596 = vsyncadd %s591, %s595
          %s597 = smul.addr %s44, 16
          %s598 = scalar_lea.hbm %s8, %s597
          %s600 = sshll.u32 %s593, 4
          %s601 = int_to_ptr.vmem [resolvable:$true] %s600
          %603 = dma.hbm_to_vmem [thread:$0]  %s598, 16, %s601, %s591
        $region56: #{tpu_custom_call.1} parent=23 // pred_fallthru
          _
        // Predicated region
        $region57: #{tpu_custom_call.1} parent=23 // pred_check
          %p604 = pneg %p272
        $region58: #{tpu_custom_call.1} parent=23 // pred_check_branch
          %606 = sbr.rel (%p604) target = $region60
        $region59: #{tpu_custom_call.1} parent=23 // pred_region
          %s607 = sand.u32 %s44, 1
          %s608 = scalar_lea.sflag [#allocation17], %s607
          %s609 = sand.u32 %s262, 1
          %s610 = smul.addr %s609, 16
          %s611 = scalar_lea.vmem [#allocation18], %s610
          %s613 = ssub.s32 256, 256
          %614 = vsyncadd %s608, %s613
          %s615 = smul.addr %s44, 4
          %s616 = smul.addr %s615, 64
          %s617 = scalar_lea.hbm %s9, %s616
          %s618 = sshll.u32 %s611, 4
          %s619 = int_to_ptr.vmem [resolvable:$true] %s618
          %624 = dma.hbm_to_vmem [thread:$0]  %s617, 256, %s619, %s608, 64, 64, 4
        $region60: #{tpu_custom_call.1} parent=23 // pred_fallthru
          _
        // Predicated region
        $region61: #{tpu_custom_call.1} parent=23 // pred_check
          %p625 = pneg %p298
        $region62: #{tpu_custom_call.1} parent=23 // pred_check_branch
          %627 = sbr.rel (%p625) target = $region64
        $region63: #{tpu_custom_call.1} parent=23 // pred_region
          %s628 = sand.u32 %s44, 1
          %s629 = scalar_lea.sflag [#allocation20], %s628
          %s630 = sand.u32 %s288, 1
          %s631 = scalar_lea.vmem [#allocation19], %s630
          %s633 = ssub.s32 16, 16
          %634 = vsyncadd %s629, %s633
          %s635 = smul.addr %s44, 16
          %s636 = scalar_lea.hbm %s10, %s635
          %s638 = sshll.u32 %s631, 4
          %s639 = int_to_ptr.vmem [resolvable:$true] %s638
          %641 = dma.hbm_to_vmem [thread:$0]  %s636, 16, %s639, %s629
        $region64: #{tpu_custom_call.1} parent=23 // pred_fallthru
          _
        // Predicated region
        $region65: #{tpu_custom_call.1} parent=23 // pred_check
          %p642 = pneg %p324
        $region66: #{tpu_custom_call.1} parent=23 // pred_check_branch
          %644 = sbr.rel (%p642) target = $region68
        $region67: #{tpu_custom_call.1} parent=23 // pred_region
          %s645 = sand.u32 %s44, 1
          %s646 = scalar_lea.sflag [#allocation20], %s645
          %s647 = sand.u32 %s314, 1
          %s648 = smul.addr %s647, 64
          %s649 = scalar_lea.vmem [#allocation21], %s648
          %s651 = ssub.s32 1024, 1024
          %652 = vsyncadd %s646, %s651
          %s653 = smul.addr %s44, 16
          %s654 = smul.addr %s653, 64
          %s655 = scalar_lea.hbm %s11, %s654
          %s656 = sshll.u32 %s649, 4
          %s657 = int_to_ptr.vmem [resolvable:$true] %s656
          %662 = dma.hbm_to_vmem [thread:$0]  %s655, 1024, %s657, %s646, 64, 64, 4
        $region68: #{tpu_custom_call.1} parent=23 // pred_fallthru
          _
        // Predicated region
        $region69: #{tpu_custom_call.1} parent=23 // pred_check
          %p663 = pneg %p350
        $region70: #{tpu_custom_call.1} parent=23 // pred_check_branch
          %665 = sbr.rel (%p663) target = $region72
        $region71: #{tpu_custom_call.1} parent=23 // pred_region
          %s666 = sand.u32 %s44, 1
          %s667 = scalar_lea.sflag [#allocation23], %s666
          %s668 = sand.u32 %s340, 1
          %s669 = scalar_lea.vmem [#allocation22], %s668
          %s671 = ssub.s32 16, 16
          %672 = vsyncadd %s667, %s671
          %s673 = smul.addr %s44, 16
          %s674 = scalar_lea.hbm %s12, %s673
          %s676 = sshll.u32 %s669, 4
          %s677 = int_to_ptr.vmem [resolvable:$true] %s676
          %679 = dma.hbm_to_vmem [thread:$0]  %s674, 16, %s677, %s667
        $region72: #{tpu_custom_call.1} parent=23 // pred_fallthru
          _
      $region24: #{tpu_custom_call.1} parent=5 // pred_fallthru
        _
      %p680 = scmp.le.s32.totalorder 1, %s44
      %p681 = scmp.lt.s32.totalorder %s44, 11
      %p682 = pnand %p680, %p681
      %p683 = pneg %p682
      // Predicated region
      $region73: #{tpu_custom_call.1} parent=5 // pred_check
        _
      $region74: #{tpu_custom_call.1} parent=5 // pred_check_branch
        %685 = sbr.rel (%p682) target = $region76
      $region75: #{tpu_custom_call.1} parent=5 // pred_region
        %s686 = ssub.s32 %s44, 1
        %s687 = sand.u32 %s57, 1
        %s688 = scalar_lea.sflag [#allocation5], %s687
        %s689 = sand.u32 %s57, 1
        %s690 = scalar_lea.vmem [#allocation4], %s689
        // Predicated region
        $region77: #{tpu_custom_call.1} parent=75 // pred_check
          %p691 = pneg %p70
        $region78: #{tpu_custom_call.1} parent=75 // pred_check_branch
          %693 = sbr.rel (%p691) target = $region80
        $region79: #{tpu_custom_call.1} parent=75 // pred_region
          %694 = dma.done %s688, 16
        $region80: #{tpu_custom_call.1} parent=75 // pred_fallthru
          _
        %s695 = sand.u32 %s49, 1
        %s696 = scalar_lea.sflag [#allocation8], %s695
        %s697 = sand.u32 %s83, 1
        %s698 = scalar_lea.vmem [#allocation7], %s697
        // Predicated region
        $region81: #{tpu_custom_call.1} parent=75 // pred_check
          %p699 = pneg %p96
        $region82: #{tpu_custom_call.1} parent=75 // pred_check_branch
          %701 = sbr.rel (%p699) target = $region84
        $region83: #{tpu_custom_call.1} parent=75 // pred_region
          %702 = dma.done %s696, 16
        $region84: #{tpu_custom_call.1} parent=75 // pred_fallthru
          _
        %s703 = sand.u32 %s49, 1
        %s704 = scalar_lea.sflag [#allocation8], %s703
        %s705 = sand.u32 %s109, 1
        %s706 = smul.addr %s705, 16
        %s707 = scalar_lea.vmem [#allocation9], %s706
        // Predicated region
        $region85: #{tpu_custom_call.1} parent=75 // pred_check
          %p708 = pneg %p122
        $region86: #{tpu_custom_call.1} parent=75 // pred_check_branch
          %710 = sbr.rel (%p708) target = $region88
        $region87: #{tpu_custom_call.1} parent=75 // pred_region
          %711 = dma.done %s704, 256
        $region88: #{tpu_custom_call.1} parent=75 // pred_fallthru
          _
        %s712 = sand.u32 %s49, 1
        %s713 = scalar_lea.sflag [#allocation11], %s712
        %s714 = sand.u32 %s135, 1
        %s715 = scalar_lea.vmem [#allocation10], %s714
        // Predicated region
        $region89: #{tpu_custom_call.1} parent=75 // pred_check
          %p716 = pneg %p148
        $region90: #{tpu_custom_call.1} parent=75 // pred_check_branch
          %718 = sbr.rel (%p716) target = $region92
        $region91: #{tpu_custom_call.1} parent=75 // pred_region
          %719 = dma.done %s713, 16
        $region92: #{tpu_custom_call.1} parent=75 // pred_fallthru
          _
        %s720 = sand.u32 %s49, 1
        %s721 = scalar_lea.sflag [#allocation11], %s720
        %s722 = sand.u32 %s161, 1
        %s723 = smul.addr %s722, 16
        %s724 = scalar_lea.vmem [#allocation12], %s723
        // Predicated region
        $region93: #{tpu_custom_call.1} parent=75 // pred_check
          %p725 = pneg %p174
        $region94: #{tpu_custom_call.1} parent=75 // pred_check_branch
          %727 = sbr.rel (%p725) target = $region96
        $region95: #{tpu_custom_call.1} parent=75 // pred_region
          %728 = dma.done %s721, 256
        $region96: #{tpu_custom_call.1} parent=75 // pred_fallthru
          _
        %s729 = sand.u32 %s49, 1
        %s730 = scalar_lea.sflag [#allocation14], %s729
        %s731 = sand.u32 %s187, 1
        %s732 = scalar_lea.vmem [#allocation13], %s731
        // Predicated region
        $region97: #{tpu_custom_call.1} parent=75 // pred_check
          %p733 = pneg %p200
        $region98: #{tpu_custom_call.1} parent=75 // pred_check_branch
          %735 = sbr.rel (%p733) target = $region100
        $region99: #{tpu_custom_call.1} parent=75 // pred_region
          %736 = dma.done %s730, 16
        $region100: #{tpu_custom_call.1} parent=75 // pred_fallthru
          _
        %s737 = sand.u32 %s49, 1
        %s738 = scalar_lea.sflag [#allocation14], %s737
        %s739 = sand.u32 %s213, 1
        %s740 = scalar_lea.vmem [#allocation15], %s739
        // Predicated region
        $region101: #{tpu_custom_call.1} parent=75 // pred_check
          %p741 = pneg %p226
        $region102: #{tpu_custom_call.1} parent=75 // pred_check_branch
          %743 = sbr.rel (%p741) target = $region104
        $region103: #{tpu_custom_call.1} parent=75 // pred_region
          %744 = dma.done %s738, 16
        $region104: #{tpu_custom_call.1} parent=75 // pred_fallthru
          _
        %s745 = sand.u32 %s49, 1
        %s746 = scalar_lea.sflag [#allocation17], %s745
        %s747 = sand.u32 %s239, 1
        %s748 = scalar_lea.vmem [#allocation16], %s747
        // Predicated region
        $region105: #{tpu_custom_call.1} parent=75 // pred_check
          %p749 = pneg %p252
        $region106: #{tpu_custom_call.1} parent=75 // pred_check_branch
          %751 = sbr.rel (%p749) target = $region108
        $region107: #{tpu_custom_call.1} parent=75 // pred_region
          %752 = dma.done %s746, 16
        $region108: #{tpu_custom_call.1} parent=75 // pred_fallthru
          _
        %s753 = sand.u32 %s49, 1
        %s754 = scalar_lea.sflag [#allocation17], %s753
        %s755 = sand.u32 %s265, 1
        %s756 = smul.addr %s755, 16
        %s757 = scalar_lea.vmem [#allocation18], %s756
        // Predicated region
        $region109: #{tpu_custom_call.1} parent=75 // pred_check
          %p758 = pneg %p278
        $region110: #{tpu_custom_call.1} parent=75 // pred_check_branch
          %760 = sbr.rel (%p758) target = $region112
        $region111: #{tpu_custom_call.1} parent=75 // pred_region
          %761 = dma.done %s754, 256
        $region112: #{tpu_custom_call.1} parent=75 // pred_fallthru
          _
        %s762 = sand.u32 %s49, 1
        %s763 = scalar_lea.sflag [#allocation20], %s762
        %s764 = sand.u32 %s291, 1
        %s765 = scalar_lea.vmem [#allocation19], %s764
        // Predicated region
        $region113: #{tpu_custom_call.1} parent=75 // pred_check
          %p766 = pneg %p304
        $region114: #{tpu_custom_call.1} parent=75 // pred_check_branch
          %768 = sbr.rel (%p766) target = $region116
        $region115: #{tpu_custom_call.1} parent=75 // pred_region
          %769 = dma.done %s763, 16
        $region116: #{tpu_custom_call.1} parent=75 // pred_fallthru
          _
        %s770 = sand.u32 %s49, 1
        %s771 = scalar_lea.sflag [#allocation20], %s770
        %s772 = sand.u32 %s317, 1
        %s773 = smul.addr %s772, 64
        %s774 = scalar_lea.vmem [#allocation21], %s773
        // Predicated region
        $region117: #{tpu_custom_call.1} parent=75 // pred_check
          %p775 = pneg %p330
        $region118: #{tpu_custom_call.1} parent=75 // pred_check_branch
          %777 = sbr.rel (%p775) target = $region120
        $region119: #{tpu_custom_call.1} parent=75 // pred_region
          %778 = dma.done %s771, 1024
        $region120: #{tpu_custom_call.1} parent=75 // pred_fallthru
          _
        %s779 = sand.u32 %s49, 1
        %s780 = scalar_lea.sflag [#allocation23], %s779
        %s781 = sand.u32 %s343, 1
        %s782 = scalar_lea.vmem [#allocation22], %s781
        // Predicated region
        $region121: #{tpu_custom_call.1} parent=75 // pred_check
          %p783 = pneg %p356
        $region122: #{tpu_custom_call.1} parent=75 // pred_check_branch
          %785 = sbr.rel (%p783) target = $region124
        $region123: #{tpu_custom_call.1} parent=75 // pred_region
          %786 = dma.done %s780, 16
        $region124: #{tpu_custom_call.1} parent=75 // pred_fallthru
          _
        // Predicated region
        $region125: #{tpu_custom_call.1} parent=75 // pred_check
          %p787 = pneg %p377
        $region126: #{tpu_custom_call.1} parent=75 // pred_check_branch
          %789 = sbr.rel (%p787) target = $region128
        $region127: #{tpu_custom_call.1} parent=75 // pred_region
          %790 = dma.done [#allocation23], 16
        $region128: #{tpu_custom_call.1} parent=75 // pred_fallthru
          _
        // Predicated region
        $region129: #{tpu_custom_call.1} parent=75 // pred_check
          %p791 = pneg %p398
        $region130: #{tpu_custom_call.1} parent=75 // pred_check_branch
          %793 = sbr.rel (%p791) target = $region132
        $region131: #{tpu_custom_call.1} parent=75 // pred_region
          %794 = dma.done [#allocation26], 16
        $region132: #{tpu_custom_call.1} parent=75 // pred_fallthru
          _
        %s795 = sand.u32 %s57, 1
        %s796 = scalar_lea.sflag [#allocation5], %s795
        %s797 = sand.u32 %s57, 1
        %s798 = scalar_lea.vmem [#allocation4], %s797
        %p799 = pneg %p70
        %p800 = pneg %p67
        %s801 = sand.u32 %s49, 1
        %s802 = scalar_lea.sflag [#allocation8], %s801
        %s803 = sand.u32 %s83, 1
        %s804 = scalar_lea.vmem [#allocation7], %s803
        %p805 = pneg %p96
        %p806 = pneg %p93
        %s807 = sand.u32 %s49, 1
        %s808 = scalar_lea.sflag [#allocation8], %s807
        %s809 = sand.u32 %s109, 1
        %s810 = smul.addr %s809, 16
        %s811 = scalar_lea.vmem [#allocation9], %s810
        %p812 = pneg %p122
        %p813 = pneg %p119
        %s814 = sand.u32 %s49, 1
        %s815 = scalar_lea.sflag [#allocation11], %s814
        %s816 = sand.u32 %s135, 1
        %s817 = scalar_lea.vmem [#allocation10], %s816
        %p818 = pneg %p148
        %p819 = pneg %p145
        %s820 = sand.u32 %s49, 1
        %s821 = scalar_lea.sflag [#allocation11], %s820
        %s822 = sand.u32 %s161, 1
        %s823 = smul.addr %s822, 16
        %s824 = scalar_lea.vmem [#allocation12], %s823
        %p825 = pneg %p174
        %p826 = pneg %p171
        %s827 = sand.u32 %s49, 1
        %s828 = scalar_lea.sflag [#allocation14], %s827
        %s829 = sand.u32 %s187, 1
        %s830 = scalar_lea.vmem [#allocation13], %s829
        %p831 = pneg %p200
        %p832 = pneg %p197
        %s833 = sand.u32 %s49, 1
        %s834 = scalar_lea.sflag [#allocation14], %s833
        %s835 = sand.u32 %s213, 1
        %s836 = scalar_lea.vmem [#allocation15], %s835
        %p837 = pneg %p226
        %p838 = pneg %p223
        %s839 = sand.u32 %s49, 1
        %s840 = scalar_lea.sflag [#allocation17], %s839
        %s841 = sand.u32 %s239, 1
        %s842 = scalar_lea.vmem [#allocation16], %s841
        %p843 = pneg %p252
        %p844 = pneg %p249
        %s845 = sand.u32 %s49, 1
        %s846 = scalar_lea.sflag [#allocation17], %s845
        %s847 = sand.u32 %s265, 1
        %s848 = smul.addr %s847, 16
        %s849 = scalar_lea.vmem [#allocation18], %s848
        %p850 = pneg %p278
        %p851 = pneg %p275
        %s852 = sand.u32 %s49, 1
        %s853 = scalar_lea.sflag [#allocation20], %s852
        %s854 = sand.u32 %s291, 1
        %s855 = scalar_lea.vmem [#allocation19], %s854
        %p856 = pneg %p304
        %p857 = pneg %p301
        %s858 = sand.u32 %s49, 1
        %s859 = scalar_lea.sflag [#allocation20], %s858
        %s860 = sand.u32 %s317, 1
        %s861 = smul.addr %s860, 64
        %s862 = scalar_lea.vmem [#allocation21], %s861
        %p863 = pneg %p330
        %p864 = pneg %p327
        %s865 = sand.u32 %s49, 1
        %s866 = scalar_lea.sflag [#allocation23], %s865
        %s867 = sand.u32 %s343, 1
        %s868 = scalar_lea.vmem [#allocation22], %s867
        %p869 = pneg %p356
        %p870 = pneg %p353
        %p871 = pneg %p377
        %p872 = pneg %p374
        %p873 = pneg %p398
        %p874 = pneg %p395
        %p875 = pneg %p419
        %p876 = pneg %p416
        %p878 = scmp.eq.s32.totalorder %s49, 0
        // Predicated region
        $region133: #{tpu_custom_call.1} parent=75 // pred_check
          %p879 = pneg %p878
        $region134: #{tpu_custom_call.1} parent=75 // pred_check_branch
          %881 = sbr.rel (%p879) target = $region136
        $region135: #{tpu_custom_call.1} parent=75 // pred_region
          // Predicated region
          $region137: #{tpu_custom_call.1} parent=135 // pred_check
            _
          $region138: #{tpu_custom_call.1} parent=135 // pred_check_branch
            %883 = sbr.rel target = $region140
          $region139: #{tpu_custom_call.1} parent=135 // pred_region
            %884 = sst [smem:[#allocation30]] [#allocation29]
            %885 = sst [smem:[#allocation31]] [#allocation28]
          $region140: #{tpu_custom_call.1} parent=135 // pred_fallthru
            _
          %887 = shalt.err (0)
          %s889 = sshll.u32 [#allocation2], 4
          %s890 = int_to_ptr.vmem [resolvable:$true] %s889
          %892 = dma.hbm_to_vmem [thread:$0]  %s0, 256, %s890, [#allocation3]
          %s893 = smul.u32 2, 8
          %s894 = smul.u32 %s893, 1
          %s895 = sshll.u32 %s894, 4
          %896 = dma.done [#allocation3], %s895
        $region136: #{tpu_custom_call.1} parent=75 // pred_fallthru
          _
        %v897 = vld [vmem:[#allocation2] sm:$0xff]
        %v898 = vld [vmem:[#allocation2 + $0x8] sm:$0xff]
        %v899 = vld [vmem:[%s690] sm:$0x1]
        %v900 = vld [vmem:[%s698] sm:$0x1]
        %vm901 = vcmask 261120
        %v902 = vsel %vm901, %v897, 0.0
        %903 = vadd.xlane.f32.xlu0 %v902
        %v904 = vpop.xlane.xlu0 %903
        %v905 = vsel %vm901, %v898, 0.0
        %906 = vadd.xlane.f32.xlu0 %v905
        %v907 = vpop.xlane.xlu0 %906
        %v908 = vrcp.pop 32.0
        %v909 = vmul.f32 %v904, %v908
        %v910 = vmul.f32 %v907, %v908
        %v911 = vmul.f32 %v897, %v897
        %v912 = vmul.f32 %v898, %v898
        %v913 = vsel %vm901, %v911, 0.0
        %914 = vadd.xlane.f32.xlu0 %v913
        %v915 = vpop.xlane.xlu0 %914
        %v916 = vsel %vm901, %v912, 0.0
        %917 = vadd.xlane.f32.xlu0 %v916
        %v918 = vpop.xlane.xlu0 %917
        %v919 = vmul.f32 %v915, %v908
        %v920 = vmul.f32 %v918, %v908
        %v921 = vmul.f32 %v909, %v909
        %v922 = vmul.f32 %v910, %v910
        %v923 = vsub.f32 %v919, %v921
        %v924 = vsub.f32 %v920, %v922
        %v925 = vmax.f32 %v923, 0.0
        %v926 = vmax.f32 %v924, 0.0
        %v927 = vsub.f32 %v897, %v909
        %v928 = vsub.f32 %v898, %v910
        %v929 = vadd.f32 %v925, 1e-06
        %v930 = vadd.f32 %v926, 1e-06
        %v931 = vrsqrt.pop %v929
        %v932 = vrsqrt.pop %v930
        %v933 = vmul.f32 %v927, %v931
        %v934 = vmul.f32 %v928, %v932
        %v936 = vlaneseq
        %v937 = vshrl.u32 %v936, 7
        %v938 = vsub.s32 0, %v937
        %v939 = vrot.slane %v899, %v938
        %v941 = vmul.f32 %v933, %v939
        %v942 = vmul.f32 %v934, %v939
        %v944 = vlaneseq
        %v945 = vshrl.u32 %v944, 7
        %v946 = vsub.s32 0, %v945
        %v947 = vrot.slane %v900, %v946
        %v949 = vadd.f32 %v941, %v947
        %v950 = vadd.f32 %v942, %v947
        %v951 = vpack.c.bf16 %v950, %v949
        %v952 = vld [vmem:[%s707] sm:$0xf]
        %v953 = vld [vmem:[%s707 + $0x4] sm:$0xf]
        %v954 = vld [vmem:[%s707 + $0x8] sm:$0xf]
        %v955 = vld [vmem:[%s707 + $0xc] sm:$0xf]
        %v956 = vld [vmem:[%s715] sm:$0x1]
        %v958 = vlaneseq
        %v959 = vshrl.u32 %v958, 7
        %v960 = vsub.s32 0, %v959
        %v961 = vrot.slane %v956, %v960
        %v967 = vunpack.c.l.b16 %v952
        %v968 = vunpack.c.l.b16 %v953
        %v969 = vunpack.c.l.b16 %v954
        %v970 = vunpack.c.l.b16 %v955
        %v971 = vpack.c.b16 %v968, %v967
        %v972 = vpack.c.b16 %v970, %v969
        %v976 = vsel %vm901, %v951, 0
        %978 = vmatprep.subr.bf16.mxu0 0
        %979 = vmatpush1.bf16.msra.mxu0 %v971
        %980 = vmatprep.subr.bf16.mxu0 0
        %981 = vmatpush1.bf16.msra.mxu0 %v972
        %982 = vmatprep.subr.bf16.mxu0 0
        %983 = vmatpush1.bf16.msra.mxu0 0
        %984 = vmatprep.subr.bf16.mxu0 0
        %985 = vmatpush1.bf16.msra.mxu0 0
        %986 = vmatprep.subr.bf16.mxu0 0
        %987 = vmatpush1.bf16.msra.mxu0 0
        %988 = vmatprep.subr.bf16.mxu0 0
        %989 = vmatpush1.bf16.msra.mxu0 0
        %990 = vmatprep.subr.bf16.mxu0 0
        %991 = vmatpush1.bf16.msra.mxu0 0
        %992 = vmatprep.subr.bf16.mxu0 0
        %993 = vmatpush1.bf16.msra.mxu0 0
        %994 = vmatprep.subr.bf16.mxu0 0
        %995 = vmatpush1.bf16.msra.mxu0 0
        %996 = vmatprep.subr.bf16.mxu0 0
        %997 = vmatpush1.bf16.msra.mxu0 0
        %998 = vmatprep.subr.bf16.mxu0 0
        %999 = vmatpush1.bf16.msra.mxu0 0
        %1000 = vmatprep.subr.bf16.mxu0 0
        %1001 = vmatpush1.bf16.msra.mxu0 0
        %1002 = vmatprep.subr.bf16.mxu0 0
        %1003 = vmatpush1.bf16.msra.mxu0 0
        %1004 = vmatprep.subr.bf16.mxu0 0
        %1005 = vmatpush1.bf16.msra.mxu0 0
        %1006 = vmatprep.subr.bf16.mxu0 0
        %1007 = vmatpush1.bf16.msra.mxu0 0
        %1008 = vmatprep.subr.bf16.mxu0 0
        %1009 = vmatpush1.bf16.msra.mxu0 0
        %1010 = vmatprep.mubr.bf16.mxu0 0
        %1011 = vmatmul.mubr.bf16.gmra.mrb[0].mxu0 %v976
        %v1012 = vpop.f32.mrb[0].mxu0
        %v1013 = vadd.f32 %v961, %v1012
        %v1014 = vpop.f32.mrb[0].mxu0
        %v1015 = vpop.f32.mrb[0].mxu0
        %v1016 = vadd.f32 %v961, %v1015
        %v1017 = vpop.f32.mrb[0].mxu0
        %1018 = vdwg.mxu0
        %1021 = vrot.lane.b32.xlu0 %v1013, 120
        %v1022 = vpop.permute.xlu0 %1021
        %1023 = vrot.lane.b32.xlu0 %v1016, 120
        %v1024 = vpop.permute.xlu0 %1023
        %1027 = vrot.lane.b32.xlu0 %v1013, 112
        %v1028 = vpop.permute.xlu0 %1027
        %1029 = vrot.lane.b32.xlu0 %v1016, 112
        %v1030 = vpop.permute.xlu0 %1029
        %1033 = vrot.lane.b32.xlu0 %v1013, 104
        %v1034 = vpop.permute.xlu0 %1033
        %1035 = vrot.lane.b32.xlu0 %v1016, 104
        %v1036 = vpop.permute.xlu0 %1035
        %v1039 = vcombine.low %v1013, %v1028
        %v1040 = vcombine.high %v1013, %v1028
        %v1042 = vunpack.c.l.s4 1983009808
        %v1043 = vunpack.c.0.s8 %v1042
        %v1044 = vlaneseq
        %v1045 = vshrl.u32 %v1044, 7
        %v1046 = vsub.s32 %v1043, %v1045
        %v1047 = vrot.slane %v1039, %v1046
        %v1049 = vunpack.c.l.s4 1983009808
        %v1050 = vunpack.c.0.s8 %v1049
        %v1051 = vlaneseq
        %v1052 = vshrl.u32 %v1051, 7
        %v1053 = vsub.s32 %v1050, %v1052
        %v1054 = vrot.slane %v1040, %v1053
        %v1055 = vcombine.low %v1022, %v1034
        %v1056 = vcombine.high %v1022, %v1034
        %v1058 = vunpack.c.l.s4 1983009808
        %v1059 = vunpack.c.0.s8 %v1058
        %v1060 = vlaneseq
        %v1061 = vshrl.u32 %v1060, 7
        %v1062 = vsub.s32 %v1059, %v1061
        %v1063 = vrot.slane %v1055, %v1062
        %v1065 = vunpack.c.l.s4 1983009808
        %v1066 = vunpack.c.0.s8 %v1065
        %v1067 = vlaneseq
        %v1068 = vshrl.u32 %v1067, 7
        %v1069 = vsub.s32 %v1066, %v1068
        %v1070 = vrot.slane %v1056, %v1069
        %v1071 = vcombine.low %v1047, %v1063
        %v1072 = vcombine.high %v1047, %v1063
        %v1074 = vunpack.c.l.s4 1934713408
        %v1075 = vunpack.c.0.s8 %v1074
        %v1076 = vlaneseq
        %v1077 = vshrl.u32 %v1076, 7
        %v1078 = vsub.s32 %v1075, %v1077
        %v1079 = vrot.slane %v1071, %v1078
        %v1081 = vunpack.c.l.s4 1934713408
        %v1082 = vunpack.c.0.s8 %v1081
        %v1083 = vlaneseq
        %v1084 = vshrl.u32 %v1083, 7
        %v1085 = vsub.s32 %v1082, %v1084
        %v1086 = vrot.slane %v1072, %v1085
        %v1087 = vcombine.low %v1054, %v1070
        %v1088 = vcombine.high %v1054, %v1070
        %v1090 = vunpack.c.l.s4 1934713408
        %v1091 = vunpack.c.0.s8 %v1090
        %v1092 = vlaneseq
        %v1093 = vshrl.u32 %v1092, 7
        %v1094 = vsub.s32 %v1091, %v1093
        %v1095 = vrot.slane %v1087, %v1094
        %v1097 = vunpack.c.l.s4 1934713408
        %v1098 = vunpack.c.0.s8 %v1097
        %v1099 = vlaneseq
        %v1100 = vshrl.u32 %v1099, 7
        %v1101 = vsub.s32 %v1098, %v1100
        %v1102 = vrot.slane %v1088, %v1101
        %v1103 = vcombine.high %v1079, 0.0
        %v1104 = vcombine.high %v1086, 0.0
        %v1105 = vcombine.high %v1095, 0.0
        %v1106 = vcombine.high %v1102, 0.0
        %v1107 = vcombine.low %v1016, %v1030
        %v1108 = vcombine.high %v1016, %v1030
        %v1110 = vunpack.c.l.s4 1983009808
        %v1111 = vunpack.c.0.s8 %v1110
        %v1112 = vlaneseq
        %v1113 = vshrl.u32 %v1112, 7
        %v1114 = vsub.s32 %v1111, %v1113
        %v1115 = vrot.slane %v1107, %v1114
        %v1117 = vunpack.c.l.s4 1983009808
        %v1118 = vunpack.c.0.s8 %v1117
        %v1119 = vlaneseq
        %v1120 = vshrl.u32 %v1119, 7
        %v1121 = vsub.s32 %v1118, %v1120
        %v1122 = vrot.slane %v1108, %v1121
        %v1123 = vcombine.low %v1024, %v1036
        %v1124 = vcombine.high %v1024, %v1036
        %v1126 = vunpack.c.l.s4 1983009808
        %v1127 = vunpack.c.0.s8 %v1126
        %v1128 = vlaneseq
        %v1129 = vshrl.u32 %v1128, 7
        %v1130 = vsub.s32 %v1127, %v1129
        %v1131 = vrot.slane %v1123, %v1130
        %v1133 = vunpack.c.l.s4 1983009808
        %v1134 = vunpack.c.0.s8 %v1133
        %v1135 = vlaneseq
        %v1136 = vshrl.u32 %v1135, 7
        %v1137 = vsub.s32 %v1134, %v1136
        %v1138 = vrot.slane %v1124, %v1137
        %v1139 = vcombine.low %v1115, %v1131
        %v1140 = vcombine.high %v1115, %v1131
        %v1142 = vunpack.c.l.s4 1934713408
        %v1143 = vunpack.c.0.s8 %v1142
        %v1144 = vlaneseq
        %v1145 = vshrl.u32 %v1144, 7
        %v1146 = vsub.s32 %v1143, %v1145
        %v1147 = vrot.slane %v1139, %v1146
        %v1149 = vunpack.c.l.s4 1934713408
        %v1150 = vunpack.c.0.s8 %v1149
        %v1151 = vlaneseq
        %v1152 = vshrl.u32 %v1151, 7
        %v1153 = vsub.s32 %v1150, %v1152
        %v1154 = vrot.slane %v1140, %v1153
        %v1155 = vcombine.low %v1122, %v1138
        %v1156 = vcombine.high %v1122, %v1138
        %v1158 = vunpack.c.l.s4 1934713408
        %v1159 = vunpack.c.0.s8 %v1158
        %v1160 = vlaneseq
        %v1161 = vshrl.u32 %v1160, 7
        %v1162 = vsub.s32 %v1159, %v1161
        %v1163 = vrot.slane %v1155, %v1162
        %v1165 = vunpack.c.l.s4 1934713408
        %v1166 = vunpack.c.0.s8 %v1165
        %v1167 = vlaneseq
        %v1168 = vshrl.u32 %v1167, 7
        %v1169 = vsub.s32 %v1166, %v1168
        %v1170 = vrot.slane %v1156, %v1169
        %v1171 = vcombine.high %v1147, 0.0
        %v1172 = vcombine.high %v1154, 0.0
        %v1173 = vcombine.high %v1163, 0.0
        %v1174 = vcombine.high %v1170, 0.0
        %v1175 = vcombine.low %v1079, %v1086
        %v1177 = vunpack.c.l.s4 1983009808
        %v1178 = vunpack.c.0.s8 %v1177
        %v1179 = vlaneseq
        %v1180 = vshrl.u32 %v1179, 7
        %v1181 = vsub.s32 %v1178, %v1180
        %v1182 = vrot.slane %v1175, %v1181
        %v1183 = vcombine.low %v1103, %v1104
        %v1185 = vunpack.c.l.s4 1983009808
        %v1186 = vunpack.c.0.s8 %v1185
        %v1187 = vlaneseq
        %v1188 = vshrl.u32 %v1187, 7
        %v1189 = vsub.s32 %v1186, %v1188
        %v1190 = vrot.slane %v1183, %v1189
        %v1191 = vcombine.low %v1095, %v1102
        %v1193 = vunpack.c.l.s4 1983009808
        %v1194 = vunpack.c.0.s8 %v1193
        %v1195 = vlaneseq
        %v1196 = vshrl.u32 %v1195, 7
        %v1197 = vsub.s32 %v1194, %v1196
        %v1198 = vrot.slane %v1191, %v1197
        %v1199 = vcombine.low %v1105, %v1106
        %v1201 = vunpack.c.l.s4 1983009808
        %v1202 = vunpack.c.0.s8 %v1201
        %v1203 = vlaneseq
        %v1204 = vshrl.u32 %v1203, 7
        %v1205 = vsub.s32 %v1202, %v1204
        %v1206 = vrot.slane %v1199, %v1205
        %v1207 = vcombine.low %v1182, %v1190
        %v1208 = vcombine.high %v1182, %v1190
        %v1210 = vunpack.c.l.s4 1934713408
        %v1211 = vunpack.c.0.s8 %v1210
        %v1212 = vlaneseq
        %v1213 = vshrl.u32 %v1212, 7
        %v1214 = vsub.s32 %v1211, %v1213
        %v1215 = vrot.slane %v1207, %v1214
        %v1217 = vunpack.c.l.s4 1934713408
        %v1218 = vunpack.c.0.s8 %v1217
        %v1219 = vlaneseq
        %v1220 = vshrl.u32 %v1219, 7
        %v1221 = vsub.s32 %v1218, %v1220
        %v1222 = vrot.slane %v1208, %v1221
        %v1223 = vcombine.low %v1198, %v1206
        %v1224 = vcombine.high %v1198, %v1206
        %v1226 = vunpack.c.l.s4 1934713408
        %v1227 = vunpack.c.0.s8 %v1226
        %v1228 = vlaneseq
        %v1229 = vshrl.u32 %v1228, 7
        %v1230 = vsub.s32 %v1227, %v1229
        %v1231 = vrot.slane %v1223, %v1230
        %v1233 = vunpack.c.l.s4 1934713408
        %v1234 = vunpack.c.0.s8 %v1233
        %v1235 = vlaneseq
        %v1236 = vshrl.u32 %v1235, 7
        %v1237 = vsub.s32 %v1234, %v1236
        %v1238 = vrot.slane %v1224, %v1237
        %v1239 = vcombine.low %v1215, %v1231
        %v1240 = vcombine.high %v1215, %v1231
        %v1241 = vcombine.low %v1222, %v1238
        %v1242 = vcombine.high %v1222, %v1238
        %v1243 = vcombine.low %v1147, %v1154
        %v1245 = vunpack.c.l.s4 1983009808
        %v1246 = vunpack.c.0.s8 %v1245
        %v1247 = vlaneseq
        %v1248 = vshrl.u32 %v1247, 7
        %v1249 = vsub.s32 %v1246, %v1248
        %v1250 = vrot.slane %v1243, %v1249
        %v1251 = vcombine.low %v1171, %v1172
        %v1253 = vunpack.c.l.s4 1983009808
        %v1254 = vunpack.c.0.s8 %v1253
        %v1255 = vlaneseq
        %v1256 = vshrl.u32 %v1255, 7
        %v1257 = vsub.s32 %v1254, %v1256
        %v1258 = vrot.slane %v1251, %v1257
        %v1259 = vcombine.low %v1163, %v1170
        %v1261 = vunpack.c.l.s4 1983009808
        %v1262 = vunpack.c.0.s8 %v1261
        %v1263 = vlaneseq
        %v1264 = vshrl.u32 %v1263, 7
        %v1265 = vsub.s32 %v1262, %v1264
        %v1266 = vrot.slane %v1259, %v1265
        %v1267 = vcombine.low %v1173, %v1174
        %v1269 = vunpack.c.l.s4 1983009808
        %v1270 = vunpack.c.0.s8 %v1269
        %v1271 = vlaneseq
        %v1272 = vshrl.u32 %v1271, 7
        %v1273 = vsub.s32 %v1270, %v1272
        %v1274 = vrot.slane %v1267, %v1273
        %v1275 = vcombine.low %v1250, %v1258
        %v1276 = vcombine.high %v1250, %v1258
        %v1278 = vunpack.c.l.s4 1934713408
        %v1279 = vunpack.c.0.s8 %v1278
        %v1280 = vlaneseq
        %v1281 = vshrl.u32 %v1280, 7
        %v1282 = vsub.s32 %v1279, %v1281
        %v1283 = vrot.slane %v1275, %v1282
        %v1285 = vunpack.c.l.s4 1934713408
        %v1286 = vunpack.c.0.s8 %v1285
        %v1287 = vlaneseq
        %v1288 = vshrl.u32 %v1287, 7
        %v1289 = vsub.s32 %v1286, %v1288
        %v1290 = vrot.slane %v1276, %v1289
        %v1291 = vcombine.low %v1266, %v1274
        %v1292 = vcombine.high %v1266, %v1274
        %v1294 = vunpack.c.l.s4 1934713408
        %v1295 = vunpack.c.0.s8 %v1294
        %v1296 = vlaneseq
        %v1297 = vshrl.u32 %v1296, 7
        %v1298 = vsub.s32 %v1295, %v1297
        %v1299 = vrot.slane %v1291, %v1298
        %v1301 = vunpack.c.l.s4 1934713408
        %v1302 = vunpack.c.0.s8 %v1301
        %v1303 = vlaneseq
        %v1304 = vshrl.u32 %v1303, 7
        %v1305 = vsub.s32 %v1302, %v1304
        %v1306 = vrot.slane %v1292, %v1305
        %v1307 = vcombine.low %v1283, %v1299
        %v1308 = vcombine.high %v1283, %v1299
        %v1309 = vcombine.low %v1290, %v1306
        %v1310 = vcombine.high %v1290, %v1306
        %v1311 = vpack.c.bf16 %v1239, %v1239
        %v1312 = vpack.c.bf16 %v1240, %v1240
        %v1313 = vpack.c.bf16 %v1241, %v1241
        %v1314 = vpack.c.bf16 %v1242, %v1242
        %v1315 = vpack.c.bf16 %v1307, %v1307
        %v1316 = vpack.c.bf16 %v1308, %v1308
        %v1317 = vpack.c.bf16 %v1309, %v1309
        %v1318 = vpack.c.bf16 %v1310, %v1310
        %1319 = vrot.lane.b32.xlu0 %v1013, 96
        %v1320 = vpop.permute.xlu0 %1319
        %1321 = vrot.lane.b32.xlu0 %v1016, 96
        %v1322 = vpop.permute.xlu0 %1321
        %1323 = vrot.lane.b32.xlu0 %v1022, 96
        %v1324 = vpop.permute.xlu0 %1323
        %1325 = vrot.lane.b32.xlu0 %v1024, 96
        %v1326 = vpop.permute.xlu0 %1325
        %1327 = vrot.lane.b32.xlu0 %v1028, 96
        %v1328 = vpop.permute.xlu0 %1327
        %1329 = vrot.lane.b32.xlu0 %v1030, 96
        %v1330 = vpop.permute.xlu0 %1329
        %1331 = vrot.lane.b32.xlu0 %v1034, 96
        %v1332 = vpop.permute.xlu0 %1331
        %1333 = vrot.lane.b32.xlu0 %v1036, 96
        %v1334 = vpop.permute.xlu0 %1333
        %v1343 = vcombine.low %v1320, %v1328
        %v1344 = vcombine.high %v1320, %v1328
        %v1346 = vunpack.c.l.s4 1983009808
        %v1347 = vunpack.c.0.s8 %v1346
        %v1348 = vlaneseq
        %v1349 = vshrl.u32 %v1348, 7
        %v1350 = vsub.s32 %v1347, %v1349
        %v1351 = vrot.slane %v1343, %v1350
        %v1353 = vunpack.c.l.s4 1983009808
        %v1354 = vunpack.c.0.s8 %v1353
        %v1355 = vlaneseq
        %v1356 = vshrl.u32 %v1355, 7
        %v1357 = vsub.s32 %v1354, %v1356
        %v1358 = vrot.slane %v1344, %v1357
        %v1359 = vcombine.low %v1324, %v1332
        %v1360 = vcombine.high %v1324, %v1332
        %v1362 = vunpack.c.l.s4 1983009808
        %v1363 = vunpack.c.0.s8 %v1362
        %v1364 = vlaneseq
        %v1365 = vshrl.u32 %v1364, 7
        %v1366 = vsub.s32 %v1363, %v1365
        %v1367 = vrot.slane %v1359, %v1366
        %v1369 = vunpack.c.l.s4 1983009808
        %v1370 = vunpack.c.0.s8 %v1369
        %v1371 = vlaneseq
        %v1372 = vshrl.u32 %v1371, 7
        %v1373 = vsub.s32 %v1370, %v1372
        %v1374 = vrot.slane %v1360, %v1373
        %v1375 = vcombine.low %v1351, %v1367
        %v1376 = vcombine.high %v1351, %v1367
        %v1378 = vunpack.c.l.s4 1934713408
        %v1379 = vunpack.c.0.s8 %v1378
        %v1380 = vlaneseq
        %v1381 = vshrl.u32 %v1380, 7
        %v1382 = vsub.s32 %v1379, %v1381
        %v1383 = vrot.slane %v1375, %v1382
        %v1385 = vunpack.c.l.s4 1934713408
        %v1386 = vunpack.c.0.s8 %v1385
        %v1387 = vlaneseq
        %v1388 = vshrl.u32 %v1387, 7
        %v1389 = vsub.s32 %v1386, %v1388
        %v1390 = vrot.slane %v1376, %v1389
        %v1391 = vcombine.low %v1358, %v1374
        %v1392 = vcombine.high %v1358, %v1374
        %v1394 = vunpack.c.l.s4 1934713408
        %v1395 = vunpack.c.0.s8 %v1394
        %v1396 = vlaneseq
        %v1397 = vshrl.u32 %v1396, 7
        %v1398 = vsub.s32 %v1395, %v1397
        %v1399 = vrot.slane %v1391, %v1398
        %v1401 = vunpack.c.l.s4 1934713408
        %v1402 = vunpack.c.0.s8 %v1401
        %v1403 = vlaneseq
        %v1404 = vshrl.u32 %v1403, 7
        %v1405 = vsub.s32 %v1402, %v1404
        %v1406 = vrot.slane %v1392, %v1405
        %v1407 = vcombine.high %v1383, 0.0
        %v1408 = vcombine.high %v1390, 0.0
        %v1409 = vcombine.high %v1399, 0.0
        %v1410 = vcombine.high %v1406, 0.0
        %v1411 = vcombine.low %v1322, %v1330
        %v1412 = vcombine.high %v1322, %v1330
        %v1414 = vunpack.c.l.s4 1983009808
        %v1415 = vunpack.c.0.s8 %v1414
        %v1416 = vlaneseq
        %v1417 = vshrl.u32 %v1416, 7
        %v1418 = vsub.s32 %v1415, %v1417
        %v1419 = vrot.slane %v1411, %v1418
        %v1421 = vunpack.c.l.s4 1983009808
        %v1422 = vunpack.c.0.s8 %v1421
        %v1423 = vlaneseq
        %v1424 = vshrl.u32 %v1423, 7
        %v1425 = vsub.s32 %v1422, %v1424
        %v1426 = vrot.slane %v1412, %v1425
        %v1427 = vcombine.low %v1326, %v1334
        %v1428 = vcombine.high %v1326, %v1334
        %v1430 = vunpack.c.l.s4 1983009808
        %v1431 = vunpack.c.0.s8 %v1430
        %v1432 = vlaneseq
        %v1433 = vshrl.u32 %v1432, 7
        %v1434 = vsub.s32 %v1431, %v1433
        %v1435 = vrot.slane %v1427, %v1434
        %v1437 = vunpack.c.l.s4 1983009808
        %v1438 = vunpack.c.0.s8 %v1437
        %v1439 = vlaneseq
        %v1440 = vshrl.u32 %v1439, 7
        %v1441 = vsub.s32 %v1438, %v1440
        %v1442 = vrot.slane %v1428, %v1441
        %v1443 = vcombine.low %v1419, %v1435
        %v1444 = vcombine.high %v1419, %v1435
        %v1446 = vunpack.c.l.s4 1934713408
        %v1447 = vunpack.c.0.s8 %v1446
        %v1448 = vlaneseq
        %v1449 = vshrl.u32 %v1448, 7
        %v1450 = vsub.s32 %v1447, %v1449
        %v1451 = vrot.slane %v1443, %v1450
        %v1453 = vunpack.c.l.s4 1934713408
        %v1454 = vunpack.c.0.s8 %v1453
        %v1455 = vlaneseq
        %v1456 = vshrl.u32 %v1455, 7
        %v1457 = vsub.s32 %v1454, %v1456
        %v1458 = vrot.slane %v1444, %v1457
        %v1459 = vcombine.low %v1426, %v1442
        %v1460 = vcombine.high %v1426, %v1442
        %v1462 = vunpack.c.l.s4 1934713408
        %v1463 = vunpack.c.0.s8 %v1462
        %v1464 = vlaneseq
        %v1465 = vshrl.u32 %v1464, 7
        %v1466 = vsub.s32 %v1463, %v1465
        %v1467 = vrot.slane %v1459, %v1466
        %v1469 = vunpack.c.l.s4 1934713408
        %v1470 = vunpack.c.0.s8 %v1469
        %v1471 = vlaneseq
        %v1472 = vshrl.u32 %v1471, 7
        %v1473 = vsub.s32 %v1470, %v1472
        %v1474 = vrot.slane %v1460, %v1473
        %v1475 = vcombine.high %v1451, 0.0
        %v1476 = vcombine.high %v1458, 0.0
        %v1477 = vcombine.high %v1467, 0.0
        %v1478 = vcombine.high %v1474, 0.0
        %v1479 = vcombine.low %v1383, %v1390
        %v1481 = vunpack.c.l.s4 1983009808
        %v1482 = vunpack.c.0.s8 %v1481
        %v1483 = vlaneseq
        %v1484 = vshrl.u32 %v1483, 7
        %v1485 = vsub.s32 %v1482, %v1484
        %v1486 = vrot.slane %v1479, %v1485
        %v1487 = vcombine.low %v1407, %v1408
        %v1489 = vunpack.c.l.s4 1983009808
        %v1490 = vunpack.c.0.s8 %v1489
        %v1491 = vlaneseq
        %v1492 = vshrl.u32 %v1491, 7
        %v1493 = vsub.s32 %v1490, %v1492
        %v1494 = vrot.slane %v1487, %v1493
        %v1495 = vcombine.low %v1399, %v1406
        %v1497 = vunpack.c.l.s4 1983009808
        %v1498 = vunpack.c.0.s8 %v1497
        %v1499 = vlaneseq
        %v1500 = vshrl.u32 %v1499, 7
        %v1501 = vsub.s32 %v1498, %v1500
        %v1502 = vrot.slane %v1495, %v1501
        %v1503 = vcombine.low %v1409, %v1410
        %v1505 = vunpack.c.l.s4 1983009808
        %v1506 = vunpack.c.0.s8 %v1505
        %v1507 = vlaneseq
        %v1508 = vshrl.u32 %v1507, 7
        %v1509 = vsub.s32 %v1506, %v1508
        %v1510 = vrot.slane %v1503, %v1509
        %v1511 = vcombine.low %v1486, %v1494
        %v1512 = vcombine.high %v1486, %v1494
        %v1514 = vunpack.c.l.s4 1934713408
        %v1515 = vunpack.c.0.s8 %v1514
        %v1516 = vlaneseq
        %v1517 = vshrl.u32 %v1516, 7
        %v1518 = vsub.s32 %v1515, %v1517
        %v1519 = vrot.slane %v1511, %v1518
        %v1521 = vunpack.c.l.s4 1934713408
        %v1522 = vunpack.c.0.s8 %v1521
        %v1523 = vlaneseq
        %v1524 = vshrl.u32 %v1523, 7
        %v1525 = vsub.s32 %v1522, %v1524
        %v1526 = vrot.slane %v1512, %v1525
        %v1527 = vcombine.low %v1502, %v1510
        %v1528 = vcombine.high %v1502, %v1510
        %v1530 = vunpack.c.l.s4 1934713408
        %v1531 = vunpack.c.0.s8 %v1530
        %v1532 = vlaneseq
        %v1533 = vshrl.u32 %v1532, 7
        %v1534 = vsub.s32 %v1531, %v1533
        %v1535 = vrot.slane %v1527, %v1534
        %v1537 = vunpack.c.l.s4 1934713408
        %v1538 = vunpack.c.0.s8 %v1537
        %v1539 = vlaneseq
        %v1540 = vshrl.u32 %v1539, 7
        %v1541 = vsub.s32 %v1538, %v1540
        %v1542 = vrot.slane %v1528, %v1541
        %v1543 = vcombine.low %v1519, %v1535
        %v1544 = vcombine.high %v1519, %v1535
        %v1545 = vcombine.low %v1526, %v1542
        %v1546 = vcombine.high %v1526, %v1542
        %v1547 = vcombine.low %v1451, %v1458
        %v1549 = vunpack.c.l.s4 1983009808
        %v1550 = vunpack.c.0.s8 %v1549
        %v1551 = vlaneseq
        %v1552 = vshrl.u32 %v1551, 7
        %v1553 = vsub.s32 %v1550, %v1552
        %v1554 = vrot.slane %v1547, %v1553
        %v1555 = vcombine.low %v1475, %v1476
        %v1557 = vunpack.c.l.s4 1983009808
        %v1558 = vunpack.c.0.s8 %v1557
        %v1559 = vlaneseq
        %v1560 = vshrl.u32 %v1559, 7
        %v1561 = vsub.s32 %v1558, %v1560
        %v1562 = vrot.slane %v1555, %v1561
        %v1563 = vcombine.low %v1467, %v1474
        %v1565 = vunpack.c.l.s4 1983009808
        %v1566 = vunpack.c.0.s8 %v1565
        %v1567 = vlaneseq
        %v1568 = vshrl.u32 %v1567, 7
        %v1569 = vsub.s32 %v1566, %v1568
        %v1570 = vrot.slane %v1563, %v1569
        %v1571 = vcombine.low %v1477, %v1478
        %v1573 = vunpack.c.l.s4 1983009808
        %v1574 = vunpack.c.0.s8 %v1573
        %v1575 = vlaneseq
        %v1576 = vshrl.u32 %v1575, 7
        %v1577 = vsub.s32 %v1574, %v1576
        %v1578 = vrot.slane %v1571, %v1577
        %v1579 = vcombine.low %v1554, %v1562
        %v1580 = vcombine.high %v1554, %v1562
        %v1582 = vunpack.c.l.s4 1934713408
        %v1583 = vunpack.c.0.s8 %v1582
        %v1584 = vlaneseq
        %v1585 = vshrl.u32 %v1584, 7
        %v1586 = vsub.s32 %v1583, %v1585
        %v1587 = vrot.slane %v1579, %v1586
        %v1589 = vunpack.c.l.s4 1934713408
        %v1590 = vunpack.c.0.s8 %v1589
        %v1591 = vlaneseq
        %v1592 = vshrl.u32 %v1591, 7
        %v1593 = vsub.s32 %v1590, %v1592
        %v1594 = vrot.slane %v1580, %v1593
        %v1595 = vcombine.low %v1570, %v1578
        %v1596 = vcombine.high %v1570, %v1578
        %v1598 = vunpack.c.l.s4 1934713408
        %v1599 = vunpack.c.0.s8 %v1598
        %v1600 = vlaneseq
        %v1601 = vshrl.u32 %v1600, 7
        %v1602 = vsub.s32 %v1599, %v1601
        %v1603 = vrot.slane %v1595, %v1602
        %v1605 = vunpack.c.l.s4 1934713408
        %v1606 = vunpack.c.0.s8 %v1605
        %v1607 = vlaneseq
        %v1608 = vshrl.u32 %v1607, 7
        %v1609 = vsub.s32 %v1606, %v1608
        %v1610 = vrot.slane %v1596, %v1609
        %v1611 = vcombine.low %v1587, %v1603
        %v1612 = vcombine.high %v1587, %v1603
        %v1613 = vcombine.low %v1594, %v1610
        %v1614 = vcombine.high %v1594, %v1610
        %v1615 = vpack.c.bf16 %v1543, %v1543
        %v1616 = vpack.c.bf16 %v1544, %v1544
        %v1617 = vpack.c.bf16 %v1545, %v1545
        %v1618 = vpack.c.bf16 %v1546, %v1546
        %v1619 = vpack.c.bf16 %v1611, %v1611
        %v1620 = vpack.c.bf16 %v1612, %v1612
        %v1621 = vpack.c.bf16 %v1613, %v1613
        %v1622 = vpack.c.bf16 %v1614, %v1614
        %1623 = vrot.lane.b32.xlu0 %v1013, 64
        %v1624 = vpop.permute.xlu0 %1623
        %1625 = vrot.lane.b32.xlu0 %v1016, 64
        %v1626 = vpop.permute.xlu0 %1625
        %1627 = vrot.lane.b32.xlu0 %v1022, 64
        %v1628 = vpop.permute.xlu0 %1627
        %1629 = vrot.lane.b32.xlu0 %v1024, 64
        %v1630 = vpop.permute.xlu0 %1629
        %1631 = vrot.lane.b32.xlu0 %v1028, 64
        %v1632 = vpop.permute.xlu0 %1631
        %1633 = vrot.lane.b32.xlu0 %v1030, 64
        %v1634 = vpop.permute.xlu0 %1633
        %1635 = vrot.lane.b32.xlu0 %v1034, 64
        %v1636 = vpop.permute.xlu0 %1635
        %1637 = vrot.lane.b32.xlu0 %v1036, 64
        %v1638 = vpop.permute.xlu0 %1637
        %v1647 = vcombine.low %v1624, %v1632
        %v1648 = vcombine.high %v1624, %v1632
        %v1650 = vunpack.c.l.s4 1983009808
        %v1651 = vunpack.c.0.s8 %v1650
        %v1652 = vlaneseq
        %v1653 = vshrl.u32 %v1652, 7
        %v1654 = vsub.s32 %v1651, %v1653
        %v1655 = vrot.slane %v1647, %v1654
        %v1657 = vunpack.c.l.s4 1983009808
        %v1658 = vunpack.c.0.s8 %v1657
        %v1659 = vlaneseq
        %v1660 = vshrl.u32 %v1659, 7
        %v1661 = vsub.s32 %v1658, %v1660
        %v1662 = vrot.slane %v1648, %v1661
        %v1663 = vcombine.low %v1628, %v1636
        %v1664 = vcombine.high %v1628, %v1636
        %v1666 = vunpack.c.l.s4 1983009808
        %v1667 = vunpack.c.0.s8 %v1666
        %v1668 = vlaneseq
        %v1669 = vshrl.u32 %v1668, 7
        %v1670 = vsub.s32 %v1667, %v1669
        %v1671 = vrot.slane %v1663, %v1670
        %v1673 = vunpack.c.l.s4 1983009808
        %v1674 = vunpack.c.0.s8 %v1673
        %v1675 = vlaneseq
        %v1676 = vshrl.u32 %v1675, 7
        %v1677 = vsub.s32 %v1674, %v1676
        %v1678 = vrot.slane %v1664, %v1677
        %v1679 = vcombine.low %v1655, %v1671
        %v1680 = vcombine.high %v1655, %v1671
        %v1682 = vunpack.c.l.s4 1934713408
        %v1683 = vunpack.c.0.s8 %v1682
        %v1684 = vlaneseq
        %v1685 = vshrl.u32 %v1684, 7
        %v1686 = vsub.s32 %v1683, %v1685
        %v1687 = vrot.slane %v1679, %v1686
        %v1689 = vunpack.c.l.s4 1934713408
        %v1690 = vunpack.c.0.s8 %v1689
        %v1691 = vlaneseq
        %v1692 = vshrl.u32 %v1691, 7
        %v1693 = vsub.s32 %v1690, %v1692
        %v1694 = vrot.slane %v1680, %v1693
        %v1695 = vcombine.low %v1662, %v1678
        %v1696 = vcombine.high %v1662, %v1678
        %v1698 = vunpack.c.l.s4 1934713408
        %v1699 = vunpack.c.0.s8 %v1698
        %v1700 = vlaneseq
        %v1701 = vshrl.u32 %v1700, 7
        %v1702 = vsub.s32 %v1699, %v1701
        %v1703 = vrot.slane %v1695, %v1702
        %v1705 = vunpack.c.l.s4 1934713408
        %v1706 = vunpack.c.0.s8 %v1705
        %v1707 = vlaneseq
        %v1708 = vshrl.u32 %v1707, 7
        %v1709 = vsub.s32 %v1706, %v1708
        %v1710 = vrot.slane %v1696, %v1709
        %v1711 = vcombine.high %v1687, 0.0
        %v1712 = vcombine.high %v1694, 0.0
        %v1713 = vcombine.high %v1703, 0.0
        %v1714 = vcombine.high %v1710, 0.0
        %v1715 = vcombine.low %v1626, %v1634
        %v1716 = vcombine.high %v1626, %v1634
        %v1718 = vunpack.c.l.s4 1983009808
        %v1719 = vunpack.c.0.s8 %v1718
        %v1720 = vlaneseq
        %v1721 = vshrl.u32 %v1720, 7
        %v1722 = vsub.s32 %v1719, %v1721
        %v1723 = vrot.slane %v1715, %v1722
        %v1725 = vunpack.c.l.s4 1983009808
        %v1726 = vunpack.c.0.s8 %v1725
        %v1727 = vlaneseq
        %v1728 = vshrl.u32 %v1727, 7
        %v1729 = vsub.s32 %v1726, %v1728
        %v1730 = vrot.slane %v1716, %v1729
        %v1731 = vcombine.low %v1630, %v1638
        %v1732 = vcombine.high %v1630, %v1638
        %v1734 = vunpack.c.l.s4 1983009808
        %v1735 = vunpack.c.0.s8 %v1734
        %v1736 = vlaneseq
        %v1737 = vshrl.u32 %v1736, 7
        %v1738 = vsub.s32 %v1735, %v1737
        %v1739 = vrot.slane %v1731, %v1738
        %v1741 = vunpack.c.l.s4 1983009808
        %v1742 = vunpack.c.0.s8 %v1741
        %v1743 = vlaneseq
        %v1744 = vshrl.u32 %v1743, 7
        %v1745 = vsub.s32 %v1742, %v1744
        %v1746 = vrot.slane %v1732, %v1745
        %v1747 = vcombine.low %v1723, %v1739
        %v1748 = vcombine.high %v1723, %v1739
        %v1750 = vunpack.c.l.s4 1934713408
        %v1751 = vunpack.c.0.s8 %v1750
        %v1752 = vlaneseq
        %v1753 = vshrl.u32 %v1752, 7
        %v1754 = vsub.s32 %v1751, %v1753
        %v1755 = vrot.slane %v1747, %v1754
        %v1757 = vunpack.c.l.s4 1934713408
        %v1758 = vunpack.c.0.s8 %v1757
        %v1759 = vlaneseq
        %v1760 = vshrl.u32 %v1759, 7
        %v1761 = vsub.s32 %v1758, %v1760
        %v1762 = vrot.slane %v1748, %v1761
        %v1763 = vcombine.low %v1730, %v1746
        %v1764 = vcombine.high %v1730, %v1746
        %v1766 = vunpack.c.l.s4 1934713408
        %v1767 = vunpack.c.0.s8 %v1766
        %v1768 = vlaneseq
        %v1769 = vshrl.u32 %v1768, 7
        %v1770 = vsub.s32 %v1767, %v1769
        %v1771 = vrot.slane %v1763, %v1770
        %v1773 = vunpack.c.l.s4 1934713408
        %v1774 = vunpack.c.0.s8 %v1773
        %v1775 = vlaneseq
        %v1776 = vshrl.u32 %v1775, 7
        %v1777 = vsub.s32 %v1774, %v1776
        %v1778 = vrot.slane %v1764, %v1777
        %v1779 = vcombine.high %v1755, 0.0
        %v1780 = vcombine.high %v1762, 0.0
        %v1781 = vcombine.high %v1771, 0.0
        %v1782 = vcombine.high %v1778, 0.0
        %v1783 = vcombine.low %v1687, %v1694
        %v1785 = vunpack.c.l.s4 1983009808
        %v1786 = vunpack.c.0.s8 %v1785
        %v1787 = vlaneseq
        %v1788 = vshrl.u32 %v1787, 7
        %v1789 = vsub.s32 %v1786, %v1788
        %v1790 = vrot.slane %v1783, %v1789
        %v1791 = vcombine.low %v1711, %v1712
        %v1793 = vunpack.c.l.s4 1983009808
        %v1794 = vunpack.c.0.s8 %v1793
        %v1795 = vlaneseq
        %v1796 = vshrl.u32 %v1795, 7
        %v1797 = vsub.s32 %v1794, %v1796
        %v1798 = vrot.slane %v1791, %v1797
        %v1799 = vcombine.low %v1703, %v1710
        %v1801 = vunpack.c.l.s4 1983009808
        %v1802 = vunpack.c.0.s8 %v1801
        %v1803 = vlaneseq
        %v1804 = vshrl.u32 %v1803, 7
        %v1805 = vsub.s32 %v1802, %v1804
        %v1806 = vrot.slane %v1799, %v1805
        %v1807 = vcombine.low %v1713, %v1714
        %v1809 = vunpack.c.l.s4 1983009808
        %v1810 = vunpack.c.0.s8 %v1809
        %v1811 = vlaneseq
        %v1812 = vshrl.u32 %v1811, 7
        %v1813 = vsub.s32 %v1810, %v1812
        %v1814 = vrot.slane %v1807, %v1813
        %v1815 = vcombine.low %v1790, %v1798
        %v1816 = vcombine.high %v1790, %v1798
        %v1818 = vunpack.c.l.s4 1934713408
        %v1819 = vunpack.c.0.s8 %v1818
        %v1820 = vlaneseq
        %v1821 = vshrl.u32 %v1820, 7
        %v1822 = vsub.s32 %v1819, %v1821
        %v1823 = vrot.slane %v1815, %v1822
        %v1825 = vunpack.c.l.s4 1934713408
        %v1826 = vunpack.c.0.s8 %v1825
        %v1827 = vlaneseq
        %v1828 = vshrl.u32 %v1827, 7
        %v1829 = vsub.s32 %v1826, %v1828
        %v1830 = vrot.slane %v1816, %v1829
        %v1831 = vcombine.low %v1806, %v1814
        %v1832 = vcombine.high %v1806, %v1814
        %v1834 = vunpack.c.l.s4 1934713408
        %v1835 = vunpack.c.0.s8 %v1834
        %v1836 = vlaneseq
        %v1837 = vshrl.u32 %v1836, 7
        %v1838 = vsub.s32 %v1835, %v1837
        %v1839 = vrot.slane %v1831, %v1838
        %v1841 = vunpack.c.l.s4 1934713408
        %v1842 = vunpack.c.0.s8 %v1841
        %v1843 = vlaneseq
        %v1844 = vshrl.u32 %v1843, 7
        %v1845 = vsub.s32 %v1842, %v1844
        %v1846 = vrot.slane %v1832, %v1845
        %v1847 = vcombine.low %v1823, %v1839
        %v1848 = vcombine.high %v1823, %v1839
        %v1849 = vcombine.low %v1830, %v1846
        %v1850 = vcombine.high %v1830, %v1846
        %v1851 = vcombine.low %v1755, %v1762
        %v1853 = vunpack.c.l.s4 1983009808
        %v1854 = vunpack.c.0.s8 %v1853
        %v1855 = vlaneseq
        %v1856 = vshrl.u32 %v1855, 7
        %v1857 = vsub.s32 %v1854, %v1856
        %v1858 = vrot.slane %v1851, %v1857
        %v1859 = vcombine.low %v1779, %v1780
        %v1861 = vunpack.c.l.s4 1983009808
        %v1862 = vunpack.c.0.s8 %v1861
        %v1863 = vlaneseq
        %v1864 = vshrl.u32 %v1863, 7
        %v1865 = vsub.s32 %v1862, %v1864
        %v1866 = vrot.slane %v1859, %v1865
        %v1867 = vcombine.low %v1771, %v1778
        %v1869 = vunpack.c.l.s4 1983009808
        %v1870 = vunpack.c.0.s8 %v1869
        %v1871 = vlaneseq
        %v1872 = vshrl.u32 %v1871, 7
        %v1873 = vsub.s32 %v1870, %v1872
        %v1874 = vrot.slane %v1867, %v1873
        %v1875 = vcombine.low %v1781, %v1782
        %v1877 = vunpack.c.l.s4 1983009808
        %v1878 = vunpack.c.0.s8 %v1877
        %v1879 = vlaneseq
        %v1880 = vshrl.u32 %v1879, 7
        %v1881 = vsub.s32 %v1878, %v1880
        %v1882 = vrot.slane %v1875, %v1881
        %v1883 = vcombine.low %v1858, %v1866
        %v1884 = vcombine.high %v1858, %v1866
        %v1886 = vunpack.c.l.s4 1934713408
        %v1887 = vunpack.c.0.s8 %v1886
        %v1888 = vlaneseq
        %v1889 = vshrl.u32 %v1888, 7
        %v1890 = vsub.s32 %v1887, %v1889
        %v1891 = vrot.slane %v1883, %v1890
        %v1893 = vunpack.c.l.s4 1934713408
        %v1894 = vunpack.c.0.s8 %v1893
        %v1895 = vlaneseq
        %v1896 = vshrl.u32 %v1895, 7
        %v1897 = vsub.s32 %v1894, %v1896
        %v1898 = vrot.slane %v1884, %v1897
        %v1899 = vcombine.low %v1874, %v1882
        %v1900 = vcombine.high %v1874, %v1882
        %v1902 = vunpack.c.l.s4 1934713408
        %v1903 = vunpack.c.0.s8 %v1902
        %v1904 = vlaneseq
        %v1905 = vshrl.u32 %v1904, 7
        %v1906 = vsub.s32 %v1903, %v1905
        %v1907 = vrot.slane %v1899, %v1906
        %v1909 = vunpack.c.l.s4 1934713408
        %v1910 = vunpack.c.0.s8 %v1909
        %v1911 = vlaneseq
        %v1912 = vshrl.u32 %v1911, 7
        %v1913 = vsub.s32 %v1910, %v1912
        %v1914 = vrot.slane %v1900, %v1913
        %v1915 = vcombine.low %v1891, %v1907
        %v1916 = vcombine.high %v1891, %v1907
        %v1917 = vcombine.low %v1898, %v1914
        %v1918 = vcombine.high %v1898, %v1914
        %v1919 = vpack.c.bf16 %v1847, %v1847
        %v1920 = vpack.c.bf16 %v1848, %v1848
        %v1921 = vpack.c.bf16 %v1849, %v1849
        %v1922 = vpack.c.bf16 %v1850, %v1850
        %v1923 = vpack.c.bf16 %v1915, %v1915
        %v1924 = vpack.c.bf16 %v1916, %v1916
        %v1925 = vpack.c.bf16 %v1917, %v1917
        %v1926 = vpack.c.bf16 %v1918, %v1918
        %vm1927 = vcmask 64512
        %v1929 = vsel %vm1927, %v1311, 0
        %v1932 = vsel %vm1927, %v1615, 0
        %1934 = vmatprep.subr.bf16.mxu0 0
        %1935 = vmatpush1.bf16.xpose.msra.mxu0 %v1932
        %1936 = vmatprep.subr.bf16.mxu0 0
        %1937 = vmatpush1.bf16.xpose.msra.mxu0 0
        %1938 = vmatprep.subr.bf16.mxu0 0
        %1939 = vmatpush1.bf16.xpose.msra.mxu0 0
        %1940 = vmatprep.subr.bf16.mxu0 0
        %1941 = vmatpush1.bf16.xpose.msra.mxu0 0
        %1942 = vmatprep.subr.bf16.mxu0 0
        %1943 = vmatpush1.bf16.xpose.msra.mxu0 0
        %1944 = vmatprep.subr.bf16.mxu0 0
        %1945 = vmatpush1.bf16.xpose.msra.mxu0 0
        %1946 = vmatprep.subr.bf16.mxu0 0
        %1947 = vmatpush1.bf16.xpose.msra.mxu0 0
        %1948 = vmatprep.subr.bf16.mxu0 0
        %1949 = vmatpush1.bf16.xpose.msra.mxu0 0
        %1950 = vmatprep.subr.bf16.mxu0 0
        %1951 = vmatpush1.bf16.xpose.msra.mxu0 0
        %1952 = vmatprep.subr.bf16.mxu0 0
        %1953 = vmatpush1.bf16.xpose.msra.mxu0 0
        %1954 = vmatprep.subr.bf16.mxu0 0
        %1955 = vmatpush1.bf16.xpose.msra.mxu0 0
        %1956 = vmatprep.subr.bf16.mxu0 0
        %1957 = vmatpush1.bf16.xpose.msra.mxu0 0
        %1958 = vmatprep.subr.bf16.mxu0 0
        %1959 = vmatpush1.bf16.xpose.msra.mxu0 0
        %1960 = vmatprep.subr.bf16.mxu0 0
        %1961 = vmatpush1.bf16.xpose.msra.mxu0 0
        %1962 = vmatprep.subr.bf16.mxu0 0
        %1963 = vmatpush1.bf16.xpose.msra.mxu0 0
        %1964 = vmatprep.subr.bf16.mxu0 0
        %1965 = vmatpush1.bf16.xpose.msra.mxu0 0
        %1966 = vmatprep.mubr.bf16.mxu0 0
        %1967 = vmatmul.mubr.bf16.gmra.mrb[0].mxu0 %v1929
        %v1968 = vpop.f32.mrb[0].mxu0
        %v1969 = vadd.f32 0.0, %v1968
        %v1970 = vpop.f32.mrb[0].mxu0
        %v1971 = vpop.f32.mrb[0].mxu0
        %v1972 = vpop.f32.mrb[0].mxu0
        %1973 = vdwg.mxu0
        %v1975 = vsel %vm1927, %v1312, 0
        %v1978 = vsel %vm1927, %v1616, 0
        %1980 = vmatprep.subr.bf16.mxu0 0
        %1981 = vmatpush1.bf16.xpose.msra.mxu0 %v1978
        %1982 = vmatprep.subr.bf16.mxu0 0
        %1983 = vmatpush1.bf16.xpose.msra.mxu0 0
        %1984 = vmatprep.subr.bf16.mxu0 0
        %1985 = vmatpush1.bf16.xpose.msra.mxu0 0
        %1986 = vmatprep.subr.bf16.mxu0 0
        %1987 = vmatpush1.bf16.xpose.msra.mxu0 0
        %1988 = vmatprep.subr.bf16.mxu0 0
        %1989 = vmatpush1.bf16.xpose.msra.mxu0 0
        %1990 = vmatprep.subr.bf16.mxu0 0
        %1991 = vmatpush1.bf16.xpose.msra.mxu0 0
        %1992 = vmatprep.subr.bf16.mxu0 0
        %1993 = vmatpush1.bf16.xpose.msra.mxu0 0
        %1994 = vmatprep.subr.bf16.mxu0 0
        %1995 = vmatpush1.bf16.xpose.msra.mxu0 0
        %1996 = vmatprep.subr.bf16.mxu0 0
        %1997 = vmatpush1.bf16.xpose.msra.mxu0 0
        %1998 = vmatprep.subr.bf16.mxu0 0
        %1999 = vmatpush1.bf16.xpose.msra.mxu0 0
        %2000 = vmatprep.subr.bf16.mxu0 0
        %2001 = vmatpush1.bf16.xpose.msra.mxu0 0
        %2002 = vmatprep.subr.bf16.mxu0 0
        %2003 = vmatpush1.bf16.xpose.msra.mxu0 0
        %2004 = vmatprep.subr.bf16.mxu0 0
        %2005 = vmatpush1.bf16.xpose.msra.mxu0 0
        %2006 = vmatprep.subr.bf16.mxu0 0
        %2007 = vmatpush1.bf16.xpose.msra.mxu0 0
        %2008 = vmatprep.subr.bf16.mxu0 0
        %2009 = vmatpush1.bf16.xpose.msra.mxu0 0
        %2010 = vmatprep.subr.bf16.mxu0 0
        %2011 = vmatpush1.bf16.xpose.msra.mxu0 0
        %2012 = vmatprep.mubr.bf16.mxu0 0
        %2013 = vmatmul.mubr.bf16.gmra.mrb[0].mxu0 %v1975
        %v2014 = vpop.f32.mrb[0].mxu0
        %v2015 = vadd.f32 0.0, %v2014
        %v2016 = vpop.f32.mrb[0].mxu0
        %v2017 = vpop.f32.mrb[0].mxu0
        %v2018 = vpop.f32.mrb[0].mxu0
        %2019 = vdwg.mxu0
        %v2021 = vsel %vm1927, %v1313, 0
        %v2024 = vsel %vm1927, %v1617, 0
        %2026 = vmatprep.subr.bf16.mxu0 0
        %2027 = vmatpush1.bf16.xpose.msra.mxu0 %v2024
        %2028 = vmatprep.subr.bf16.mxu0 0
        %2029 = vmatpush1.bf16.xpose.msra.mxu0 0
        %2030 = vmatprep.subr.bf16.mxu0 0
        %2031 = vmatpush1.bf16.xpose.msra.mxu0 0
        %2032 = vmatprep.subr.bf16.mxu0 0
        %2033 = vmatpush1.bf16.xpose.msra.mxu0 0
        %2034 = vmatprep.subr.bf16.mxu0 0
        %2035 = vmatpush1.bf16.xpose.msra.mxu0 0
        %2036 = vmatprep.subr.bf16.mxu0 0
        %2037 = vmatpush1.bf16.xpose.msra.mxu0 0
        %2038 = vmatprep.subr.bf16.mxu0 0
        %2039 = vmatpush1.bf16.xpose.msra.mxu0 0
        %2040 = vmatprep.subr.bf16.mxu0 0
        %2041 = vmatpush1.bf16.xpose.msra.mxu0 0
        %2042 = vmatprep.subr.bf16.mxu0 0
        %2043 = vmatpush1.bf16.xpose.msra.mxu0 0
        %2044 = vmatprep.subr.bf16.mxu0 0
        %2045 = vmatpush1.bf16.xpose.msra.mxu0 0
        %2046 = vmatprep.subr.bf16.mxu0 0
        %2047 = vmatpush1.bf16.xpose.msra.mxu0 0
        %2048 = vmatprep.subr.bf16.mxu0 0
        %2049 = vmatpush1.bf16.xpose.msra.mxu0 0
        %2050 = vmatprep.subr.bf16.mxu0 0
        %2051 = vmatpush1.bf16.xpose.msra.mxu0 0
        %2052 = vmatprep.subr.bf16.mxu0 0
        %2053 = vmatpush1.bf16.xpose.msra.mxu0 0
        %2054 = vmatprep.subr.bf16.mxu0 0
        %2055 = vmatpush1.bf16.xpose.msra.mxu0 0
        %2056 = vmatprep.subr.bf16.mxu0 0
        %2057 = vmatpush1.bf16.xpose.msra.mxu0 0
        %2058 = vmatprep.mubr.bf16.mxu0 0
        %2059 = vmatmul.mubr.bf16.gmra.mrb[0].mxu0 %v2021
        %v2060 = vpop.f32.mrb[0].mxu0
        %v2061 = vadd.f32 0.0, %v2060
        %v2062 = vpop.f32.mrb[0].mxu0
        %v2063 = vpop.f32.mrb[0].mxu0
        %v2064 = vpop.f32.mrb[0].mxu0
        %2065 = vdwg.mxu0
        %v2067 = vsel %vm1927, %v1314, 0
        %v2070 = vsel %vm1927, %v1618, 0
        %2072 = vmatprep.subr.bf16.mxu0 0
        %2073 = vmatpush1.bf16.xpose.msra.mxu0 %v2070
        %2074 = vmatprep.subr.bf16.mxu0 0
        %2075 = vmatpush1.bf16.xpose.msra.mxu0 0
        %2076 = vmatprep.subr.bf16.mxu0 0
        %2077 = vmatpush1.bf16.xpose.msra.mxu0 0
        %2078 = vmatprep.subr.bf16.mxu0 0
        %2079 = vmatpush1.bf16.xpose.msra.mxu0 0
        %2080 = vmatprep.subr.bf16.mxu0 0
        %2081 = vmatpush1.bf16.xpose.msra.mxu0 0
        %2082 = vmatprep.subr.bf16.mxu0 0
        %2083 = vmatpush1.bf16.xpose.msra.mxu0 0
        %2084 = vmatprep.subr.bf16.mxu0 0
        %2085 = vmatpush1.bf16.xpose.msra.mxu0 0
        %2086 = vmatprep.subr.bf16.mxu0 0
        %2087 = vmatpush1.bf16.xpose.msra.mxu0 0
        %2088 = vmatprep.subr.bf16.mxu0 0
        %2089 = vmatpush1.bf16.xpose.msra.mxu0 0
        %2090 = vmatprep.subr.bf16.mxu0 0
        %2091 = vmatpush1.bf16.xpose.msra.mxu0 0
        %2092 = vmatprep.subr.bf16.mxu0 0
        %2093 = vmatpush1.bf16.xpose.msra.mxu0 0
        %2094 = vmatprep.subr.bf16.mxu0 0
        %2095 = vmatpush1.bf16.xpose.msra.mxu0 0
        %2096 = vmatprep.subr.bf16.mxu0 0
        %2097 = vmatpush1.bf16.xpose.msra.mxu0 0
        %2098 = vmatprep.subr.bf16.mxu0 0
        %2099 = vmatpush1.bf16.xpose.msra.mxu0 0
        %2100 = vmatprep.subr.bf16.mxu0 0
        %2101 = vmatpush1.bf16.xpose.msra.mxu0 0
        %2102 = vmatprep.subr.bf16.mxu0 0
        %2103 = vmatpush1.bf16.xpose.msra.mxu0 0
        %2104 = vmatprep.mubr.bf16.mxu0 0
        %2105 = vmatmul.mubr.bf16.gmra.mrb[0].mxu0 %v2067
        %v2106 = vpop.f32.mrb[0].mxu0
        %v2107 = vadd.f32 0.0, %v2106
        %v2108 = vpop.f32.mrb[0].mxu0
        %v2109 = vpop.f32.mrb[0].mxu0
        %v2110 = vpop.f32.mrb[0].mxu0
        %2111 = vdwg.mxu0
        %v2113 = vsel %vm1927, %v1315, 0
        %v2116 = vsel %vm1927, %v1619, 0
        %2118 = vmatprep.subr.bf16.mxu0 0
        %2119 = vmatpush1.bf16.xpose.msra.mxu0 %v2116
        %2120 = vmatprep.subr.bf16.mxu0 0
        %2121 = vmatpush1.bf16.xpose.msra.mxu0 0
        %2122 = vmatprep.subr.bf16.mxu0 0
        %2123 = vmatpush1.bf16.xpose.msra.mxu0 0
        %2124 = vmatprep.subr.bf16.mxu0 0
        %2125 = vmatpush1.bf16.xpose.msra.mxu0 0
        %2126 = vmatprep.subr.bf16.mxu0 0
        %2127 = vmatpush1.bf16.xpose.msra.mxu0 0
        %2128 = vmatprep.subr.bf16.mxu0 0
        %2129 = vmatpush1.bf16.xpose.msra.mxu0 0
        %2130 = vmatprep.subr.bf16.mxu0 0
        %2131 = vmatpush1.bf16.xpose.msra.mxu0 0
        %2132 = vmatprep.subr.bf16.mxu0 0
        %2133 = vmatpush1.bf16.xpose.msra.mxu0 0
        %2134 = vmatprep.subr.bf16.mxu0 0
        %2135 = vmatpush1.bf16.xpose.msra.mxu0 0
        %2136 = vmatprep.subr.bf16.mxu0 0
        %2137 = vmatpush1.bf16.xpose.msra.mxu0 0
        %2138 = vmatprep.subr.bf16.mxu0 0
        %2139 = vmatpush1.bf16.xpose.msra.mxu0 0
        %2140 = vmatprep.subr.bf16.mxu0 0
        %2141 = vmatpush1.bf16.xpose.msra.mxu0 0
        %2142 = vmatprep.subr.bf16.mxu0 0
        %2143 = vmatpush1.bf16.xpose.msra.mxu0 0
        %2144 = vmatprep.subr.bf16.mxu0 0
        %2145 = vmatpush1.bf16.xpose.msra.mxu0 0
        %2146 = vmatprep.subr.bf16.mxu0 0
        %2147 = vmatpush1.bf16.xpose.msra.mxu0 0
        %2148 = vmatprep.subr.bf16.mxu0 0
        %2149 = vmatpush1.bf16.xpose.msra.mxu0 0
        %2150 = vmatprep.mubr.bf16.mxu0 0
        %2151 = vmatmul.mubr.bf16.gmra.mrb[0].mxu0 %v2113
        %v2152 = vpop.f32.mrb[0].mxu0
        %v2153 = vadd.f32 0.0, %v2152
        %v2154 = vpop.f32.mrb[0].mxu0
        %v2155 = vpop.f32.mrb[0].mxu0
        %v2156 = vpop.f32.mrb[0].mxu0
        %2157 = vdwg.mxu0
        %v2159 = vsel %vm1927, %v1316, 0
        %v2162 = vsel %vm1927, %v1620, 0
        %2164 = vmatprep.subr.bf16.mxu0 0
        %2165 = vmatpush1.bf16.xpose.msra.mxu0 %v2162
        %2166 = vmatprep.subr.bf16.mxu0 0
        %2167 = vmatpush1.bf16.xpose.msra.mxu0 0
        %2168 = vmatprep.subr.bf16.mxu0 0
        %2169 = vmatpush1.bf16.xpose.msra.mxu0 0
        %2170 = vmatprep.subr.bf16.mxu0 0
        %2171 = vmatpush1.bf16.xpose.msra.mxu0 0
        %2172 = vmatprep.subr.bf16.mxu0 0
        %2173 = vmatpush1.bf16.xpose.msra.mxu0 0
        %2174 = vmatprep.subr.bf16.mxu0 0
        %2175 = vmatpush1.bf16.xpose.msra.mxu0 0
        %2176 = vmatprep.subr.bf16.mxu0 0
        %2177 = vmatpush1.bf16.xpose.msra.mxu0 0
        %2178 = vmatprep.subr.bf16.mxu0 0
        %2179 = vmatpush1.bf16.xpose.msra.mxu0 0
        %2180 = vmatprep.subr.bf16.mxu0 0
        %2181 = vmatpush1.bf16.xpose.msra.mxu0 0
        %2182 = vmatprep.subr.bf16.mxu0 0
        %2183 = vmatpush1.bf16.xpose.msra.mxu0 0
        %2184 = vmatprep.subr.bf16.mxu0 0
        %2185 = vmatpush1.bf16.xpose.msra.mxu0 0
        %2186 = vmatprep.subr.bf16.mxu0 0
        %2187 = vmatpush1.bf16.xpose.msra.mxu0 0
        %2188 = vmatprep.subr.bf16.mxu0 0
        %2189 = vmatpush1.bf16.xpose.msra.mxu0 0
        %2190 = vmatprep.subr.bf16.mxu0 0
        %2191 = vmatpush1.bf16.xpose.msra.mxu0 0
        %2192 = vmatprep.subr.bf16.mxu0 0
        %2193 = vmatpush1.bf16.xpose.msra.mxu0 0
        %2194 = vmatprep.subr.bf16.mxu0 0
        %2195 = vmatpush1.bf16.xpose.msra.mxu0 0
        %2196 = vmatprep.mubr.bf16.mxu0 0
        %2197 = vmatmul.mubr.bf16.gmra.mrb[0].mxu0 %v2159
        %v2198 = vpop.f32.mrb[0].mxu0
        %v2199 = vadd.f32 0.0, %v2198
        %v2200 = vpop.f32.mrb[0].mxu0
        %v2201 = vpop.f32.mrb[0].mxu0
        %v2202 = vpop.f32.mrb[0].mxu0
        %2203 = vdwg.mxu0
        %v2205 = vsel %vm1927, %v1317, 0
        %v2208 = vsel %vm1927, %v1621, 0
        %2210 = vmatprep.subr.bf16.mxu0 0
        %2211 = vmatpush1.bf16.xpose.msra.mxu0 %v2208
        %2212 = vmatprep.subr.bf16.mxu0 0
        %2213 = vmatpush1.bf16.xpose.msra.mxu0 0
        %2214 = vmatprep.subr.bf16.mxu0 0
        %2215 = vmatpush1.bf16.xpose.msra.mxu0 0
        %2216 = vmatprep.subr.bf16.mxu0 0
        %2217 = vmatpush1.bf16.xpose.msra.mxu0 0
        %2218 = vmatprep.subr.bf16.mxu0 0
        %2219 = vmatpush1.bf16.xpose.msra.mxu0 0
        %2220 = vmatprep.subr.bf16.mxu0 0
        %2221 = vmatpush1.bf16.xpose.msra.mxu0 0
        %2222 = vmatprep.subr.bf16.mxu0 0
        %2223 = vmatpush1.bf16.xpose.msra.mxu0 0
        %2224 = vmatprep.subr.bf16.mxu0 0
        %2225 = vmatpush1.bf16.xpose.msra.mxu0 0
        %2226 = vmatprep.subr.bf16.mxu0 0
        %2227 = vmatpush1.bf16.xpose.msra.mxu0 0
        %2228 = vmatprep.subr.bf16.mxu0 0
        %2229 = vmatpush1.bf16.xpose.msra.mxu0 0
        %2230 = vmatprep.subr.bf16.mxu0 0
        %2231 = vmatpush1.bf16.xpose.msra.mxu0 0
        %2232 = vmatprep.subr.bf16.mxu0 0
        %2233 = vmatpush1.bf16.xpose.msra.mxu0 0
        %2234 = vmatprep.subr.bf16.mxu0 0
        %2235 = vmatpush1.bf16.xpose.msra.mxu0 0
        %2236 = vmatprep.subr.bf16.mxu0 0
        %2237 = vmatpush1.bf16.xpose.msra.mxu0 0
        %2238 = vmatprep.subr.bf16.mxu0 0
        %2239 = vmatpush1.bf16.xpose.msra.mxu0 0
        %2240 = vmatprep.subr.bf16.mxu0 0
        %2241 = vmatpush1.bf16.xpose.msra.mxu0 0
        %2242 = vmatprep.mubr.bf16.mxu0 0
        %2243 = vmatmul.mubr.bf16.gmra.mrb[0].mxu0 %v2205
        %v2244 = vpop.f32.mrb[0].mxu0
        %v2245 = vadd.f32 0.0, %v2244
        %v2246 = vpop.f32.mrb[0].mxu0
        %v2247 = vpop.f32.mrb[0].mxu0
        %v2248 = vpop.f32.mrb[0].mxu0
        %2249 = vdwg.mxu0
        %v2251 = vsel %vm1927, %v1318, 0
        %v2254 = vsel %vm1927, %v1622, 0
        %2256 = vmatprep.subr.bf16.mxu0 0
        %2257 = vmatpush1.bf16.xpose.msra.mxu0 %v2254
        %2258 = vmatprep.subr.bf16.mxu0 0
        %2259 = vmatpush1.bf16.xpose.msra.mxu0 0
        %2260 = vmatprep.subr.bf16.mxu0 0
        %2261 = vmatpush1.bf16.xpose.msra.mxu0 0
        %2262 = vmatprep.subr.bf16.mxu0 0
        %2263 = vmatpush1.bf16.xpose.msra.mxu0 0
        %2264 = vmatprep.subr.bf16.mxu0 0
        %2265 = vmatpush1.bf16.xpose.msra.mxu0 0
        %2266 = vmatprep.subr.bf16.mxu0 0
        %2267 = vmatpush1.bf16.xpose.msra.mxu0 0
        %2268 = vmatprep.subr.bf16.mxu0 0
        %2269 = vmatpush1.bf16.xpose.msra.mxu0 0
        %2270 = vmatprep.subr.bf16.mxu0 0
        %2271 = vmatpush1.bf16.xpose.msra.mxu0 0
        %2272 = vmatprep.subr.bf16.mxu0 0
        %2273 = vmatpush1.bf16.xpose.msra.mxu0 0
        %2274 = vmatprep.subr.bf16.mxu0 0
        %2275 = vmatpush1.bf16.xpose.msra.mxu0 0
        %2276 = vmatprep.subr.bf16.mxu0 0
        %2277 = vmatpush1.bf16.xpose.msra.mxu0 0
        %2278 = vmatprep.subr.bf16.mxu0 0
        %2279 = vmatpush1.bf16.xpose.msra.mxu0 0
        %2280 = vmatprep.subr.bf16.mxu0 0
        %2281 = vmatpush1.bf16.xpose.msra.mxu0 0
        %2282 = vmatprep.subr.bf16.mxu0 0
        %2283 = vmatpush1.bf16.xpose.msra.mxu0 0
        %2284 = vmatprep.subr.bf16.mxu0 0
        %2285 = vmatpush1.bf16.xpose.msra.mxu0 0
        %2286 = vmatprep.subr.bf16.mxu0 0
        %2287 = vmatpush1.bf16.xpose.msra.mxu0 0
        %2288 = vmatprep.mubr.bf16.mxu0 0
        %2289 = vmatmul.mubr.bf16.gmra.mrb[0].mxu0 %v2251
        %v2290 = vpop.f32.mrb[0].mxu0
        %v2291 = vadd.f32 0.0, %v2290
        %v2292 = vpop.f32.mrb[0].mxu0
        %v2293 = vpop.f32.mrb[0].mxu0
        %v2294 = vpop.f32.mrb[0].mxu0
        %2295 = vdwg.mxu0
        %v2296 = vmul.f32 %v1969, 0.35355338
        %v2297 = vmul.f32 %v2015, 0.35355338
        %v2298 = vmul.f32 %v2061, 0.35355338
        %v2299 = vmul.f32 %v2107, 0.35355338
        %v2300 = vmul.f32 %v2153, 0.35355338
        %v2301 = vmul.f32 %v2199, 0.35355338
        %v2302 = vmul.f32 %v2245, 0.35355338
        %v2303 = vmul.f32 %v2291, 0.35355338
        %v2304 = vsel %vm1927, %v2296, -inf
        %2305 = vmax.xlane.f32.xlu0 %v2304
        %v2306 = vpop.xlane.xlu0 %2305
        %v2307 = vsel %vm1927, %v2297, -inf
        %2308 = vmax.xlane.f32.xlu0 %v2307
        %v2309 = vpop.xlane.xlu0 %2308
        %v2310 = vsel %vm1927, %v2298, -inf
        %2311 = vmax.xlane.f32.xlu0 %v2310
        %v2312 = vpop.xlane.xlu0 %2311
        %v2313 = vsel %vm1927, %v2299, -inf
        %2314 = vmax.xlane.f32.xlu0 %v2313
        %v2315 = vpop.xlane.xlu0 %2314
        %v2316 = vsel %vm1927, %v2300, -inf
        %2317 = vmax.xlane.f32.xlu0 %v2316
        %v2318 = vpop.xlane.xlu0 %2317
        %v2319 = vsel %vm1927, %v2301, -inf
        %2320 = vmax.xlane.f32.xlu0 %v2319
        %v2321 = vpop.xlane.xlu0 %2320
        %v2322 = vsel %vm1927, %v2302, -inf
        %2323 = vmax.xlane.f32.xlu0 %v2322
        %v2324 = vpop.xlane.xlu0 %2323
        %v2325 = vsel %vm1927, %v2303, -inf
        %2326 = vmax.xlane.f32.xlu0 %v2325
        %v2327 = vpop.xlane.xlu0 %2326
        %v2328 = vsub.f32 %v2296, %v2306
        %v2329 = vsub.f32 %v2297, %v2309
        %v2330 = vsub.f32 %v2298, %v2312
        %v2331 = vsub.f32 %v2299, %v2315
        %v2332 = vsub.f32 %v2300, %v2318
        %v2333 = vsub.f32 %v2301, %v2321
        %v2334 = vsub.f32 %v2302, %v2324
        %v2335 = vsub.f32 %v2303, %v2327
        %v2336 = vmul.f32 %v2328, 1.442695
        %v2337 = vpow.pop %v2336
        %v2338 = vmul.f32 %v2329, 1.442695
        %v2339 = vpow.pop %v2338
        %v2340 = vmul.f32 %v2330, 1.442695
        %v2341 = vpow.pop %v2340
        %v2342 = vmul.f32 %v2331, 1.442695
        %v2343 = vpow.pop %v2342
        %v2344 = vmul.f32 %v2332, 1.442695
        %v2345 = vpow.pop %v2344
        %v2346 = vmul.f32 %v2333, 1.442695
        %v2347 = vpow.pop %v2346
        %v2348 = vmul.f32 %v2334, 1.442695
        %v2349 = vpow.pop %v2348
        %v2350 = vmul.f32 %v2335, 1.442695
        %v2351 = vpow.pop %v2350
        %v2352 = vsel %vm1927, %v2337, 0.0
        %2353 = vadd.xlane.f32.xlu0 %v2352
        %v2354 = vpop.xlane.xlu0 %2353
        %v2355 = vsel %vm1927, %v2339, 0.0
        %2356 = vadd.xlane.f32.xlu0 %v2355
        %v2357 = vpop.xlane.xlu0 %2356
        %v2358 = vsel %vm1927, %v2341, 0.0
        %2359 = vadd.xlane.f32.xlu0 %v2358
        %v2360 = vpop.xlane.xlu0 %2359
        %v2361 = vsel %vm1927, %v2343, 0.0
        %2362 = vadd.xlane.f32.xlu0 %v2361
        %v2363 = vpop.xlane.xlu0 %2362
        %v2364 = vsel %vm1927, %v2345, 0.0
        %2365 = vadd.xlane.f32.xlu0 %v2364
        %v2366 = vpop.xlane.xlu0 %2365
        %v2367 = vsel %vm1927, %v2347, 0.0
        %2368 = vadd.xlane.f32.xlu0 %v2367
        %v2369 = vpop.xlane.xlu0 %2368
        %v2370 = vsel %vm1927, %v2349, 0.0
        %2371 = vadd.xlane.f32.xlu0 %v2370
        %v2372 = vpop.xlane.xlu0 %2371
        %v2373 = vsel %vm1927, %v2351, 0.0
        %2374 = vadd.xlane.f32.xlu0 %v2373
        %v2375 = vpop.xlane.xlu0 %2374
        %v2376 = vrcp.pop %v2354
        %v2377 = vrcp.pop %v2357
        %v2378 = vrcp.pop %v2360
        %v2379 = vrcp.pop %v2363
        %v2380 = vrcp.pop %v2366
        %v2381 = vrcp.pop %v2369
        %v2382 = vrcp.pop %v2372
        %v2383 = vrcp.pop %v2375
        %v2384 = vmul.f32 %v2337, %v2376
        %v2385 = vmul.f32 %v2339, %v2377
        %v2386 = vmul.f32 %v2341, %v2378
        %v2387 = vmul.f32 %v2343, %v2379
        %v2388 = vmul.f32 %v2345, %v2380
        %v2389 = vmul.f32 %v2347, %v2381
        %v2390 = vmul.f32 %v2349, %v2382
        %v2391 = vmul.f32 %v2351, %v2383
        %v2392 = vpack.c.bf16 %v2384, %v2384
        %v2393 = vpack.c.bf16 %v2385, %v2385
        %v2394 = vpack.c.bf16 %v2386, %v2386
        %v2395 = vpack.c.bf16 %v2387, %v2387
        %v2396 = vpack.c.bf16 %v2388, %v2388
        %v2397 = vpack.c.bf16 %v2389, %v2389
        %v2398 = vpack.c.bf16 %v2390, %v2390
        %v2399 = vpack.c.bf16 %v2391, %v2391
        %v2401 = vsel %vm1927, %v2392, 0
        %vm2403 = vcmask 1043456
        %v2405 = vsel %vm2403, %v1919, 0
        %2407 = vmatprep.subr.bf16.mxu0 0
        %2408 = vmatpush1.bf16.msra.mxu0 %v2405
        %2409 = vmatprep.subr.bf16.mxu0 0
        %2410 = vmatpush1.bf16.msra.mxu0 0
        %2411 = vmatprep.subr.bf16.mxu0 0
        %2412 = vmatpush1.bf16.msra.mxu0 0
        %2413 = vmatprep.subr.bf16.mxu0 0
        %2414 = vmatpush1.bf16.msra.mxu0 0
        %2415 = vmatprep.subr.bf16.mxu0 0
        %2416 = vmatpush1.bf16.msra.mxu0 0
        %2417 = vmatprep.subr.bf16.mxu0 0
        %2418 = vmatpush1.bf16.msra.mxu0 0
        %2419 = vmatprep.subr.bf16.mxu0 0
        %2420 = vmatpush1.bf16.msra.mxu0 0
        %2421 = vmatprep.subr.bf16.mxu0 0
        %2422 = vmatpush1.bf16.msra.mxu0 0
        %2423 = vmatprep.subr.bf16.mxu0 0
        %2424 = vmatpush1.bf16.msra.mxu0 0
        %2425 = vmatprep.subr.bf16.mxu0 0
        %2426 = vmatpush1.bf16.msra.mxu0 0
        %2427 = vmatprep.subr.bf16.mxu0 0
        %2428 = vmatpush1.bf16.msra.mxu0 0
        %2429 = vmatprep.subr.bf16.mxu0 0
        %2430 = vmatpush1.bf16.msra.mxu0 0
        %2431 = vmatprep.subr.bf16.mxu0 0
        %2432 = vmatpush1.bf16.msra.mxu0 0
        %2433 = vmatprep.subr.bf16.mxu0 0
        %2434 = vmatpush1.bf16.msra.mxu0 0
        %2435 = vmatprep.subr.bf16.mxu0 0
        %2436 = vmatpush1.bf16.msra.mxu0 0
        %2437 = vmatprep.subr.bf16.mxu0 0
        %2438 = vmatpush1.bf16.msra.mxu0 0
        %2439 = vmatprep.mubr.bf16.mxu0 0
        %2440 = vmatmul.mubr.bf16.gmra.mrb[0].mxu0 %v2401
        %v2441 = vpop.f32.mrb[0].mxu0
        %v2442 = vadd.f32 0.0, %v2441
        %v2443 = vpop.f32.mrb[0].mxu0
        %v2444 = vpop.f32.mrb[0].mxu0
        %v2445 = vpop.f32.mrb[0].mxu0
        %2446 = vdwg.mxu0
        %v2448 = vsel %vm1927, %v2393, 0
        %v2451 = vsel %vm2403, %v1920, 0
        %2453 = vmatprep.subr.bf16.mxu0 0
        %2454 = vmatpush1.bf16.msra.mxu0 %v2451
        %2455 = vmatprep.subr.bf16.mxu0 0
        %2456 = vmatpush1.bf16.msra.mxu0 0
        %2457 = vmatprep.subr.bf16.mxu0 0
        %2458 = vmatpush1.bf16.msra.mxu0 0
        %2459 = vmatprep.subr.bf16.mxu0 0
        %2460 = vmatpush1.bf16.msra.mxu0 0
        %2461 = vmatprep.subr.bf16.mxu0 0
        %2462 = vmatpush1.bf16.msra.mxu0 0
        %2463 = vmatprep.subr.bf16.mxu0 0
        %2464 = vmatpush1.bf16.msra.mxu0 0
        %2465 = vmatprep.subr.bf16.mxu0 0
        %2466 = vmatpush1.bf16.msra.mxu0 0
        %2467 = vmatprep.subr.bf16.mxu0 0
        %2468 = vmatpush1.bf16.msra.mxu0 0
        %2469 = vmatprep.subr.bf16.mxu0 0
        %2470 = vmatpush1.bf16.msra.mxu0 0
        %2471 = vmatprep.subr.bf16.mxu0 0
        %2472 = vmatpush1.bf16.msra.mxu0 0
        %2473 = vmatprep.subr.bf16.mxu0 0
        %2474 = vmatpush1.bf16.msra.mxu0 0
        %2475 = vmatprep.subr.bf16.mxu0 0
        %2476 = vmatpush1.bf16.msra.mxu0 0
        %2477 = vmatprep.subr.bf16.mxu0 0
        %2478 = vmatpush1.bf16.msra.mxu0 0
        %2479 = vmatprep.subr.bf16.mxu0 0
        %2480 = vmatpush1.bf16.msra.mxu0 0
        %2481 = vmatprep.subr.bf16.mxu0 0
        %2482 = vmatpush1.bf16.msra.mxu0 0
        %2483 = vmatprep.subr.bf16.mxu0 0
        %2484 = vmatpush1.bf16.msra.mxu0 0
        %2485 = vmatprep.mubr.bf16.mxu0 0
        %2486 = vmatmul.mubr.bf16.gmra.mrb[0].mxu0 %v2448
        %v2487 = vpop.f32.mrb[0].mxu0
        %v2488 = vadd.f32 0.0, %v2487
        %v2489 = vpop.f32.mrb[0].mxu0
        %v2490 = vpop.f32.mrb[0].mxu0
        %v2491 = vpop.f32.mrb[0].mxu0
        %2492 = vdwg.mxu0
        %v2494 = vsel %vm1927, %v2394, 0
        %v2497 = vsel %vm2403, %v1921, 0
        %2499 = vmatprep.subr.bf16.mxu0 0
        %2500 = vmatpush1.bf16.msra.mxu0 %v2497
        %2501 = vmatprep.subr.bf16.mxu0 0
        %2502 = vmatpush1.bf16.msra.mxu0 0
        %2503 = vmatprep.subr.bf16.mxu0 0
        %2504 = vmatpush1.bf16.msra.mxu0 0
        %2505 = vmatprep.subr.bf16.mxu0 0
        %2506 = vmatpush1.bf16.msra.mxu0 0
        %2507 = vmatprep.subr.bf16.mxu0 0
        %2508 = vmatpush1.bf16.msra.mxu0 0
        %2509 = vmatprep.subr.bf16.mxu0 0
        %2510 = vmatpush1.bf16.msra.mxu0 0
        %2511 = vmatprep.subr.bf16.mxu0 0
        %2512 = vmatpush1.bf16.msra.mxu0 0
        %2513 = vmatprep.subr.bf16.mxu0 0
        %2514 = vmatpush1.bf16.msra.mxu0 0
        %2515 = vmatprep.subr.bf16.mxu0 0
        %2516 = vmatpush1.bf16.msra.mxu0 0
        %2517 = vmatprep.subr.bf16.mxu0 0
        %2518 = vmatpush1.bf16.msra.mxu0 0
        %2519 = vmatprep.subr.bf16.mxu0 0
        %2520 = vmatpush1.bf16.msra.mxu0 0
        %2521 = vmatprep.subr.bf16.mxu0 0
        %2522 = vmatpush1.bf16.msra.mxu0 0
        %2523 = vmatprep.subr.bf16.mxu0 0
        %2524 = vmatpush1.bf16.msra.mxu0 0
        %2525 = vmatprep.subr.bf16.mxu0 0
        %2526 = vmatpush1.bf16.msra.mxu0 0
        %2527 = vmatprep.subr.bf16.mxu0 0
        %2528 = vmatpush1.bf16.msra.mxu0 0
        %2529 = vmatprep.subr.bf16.mxu0 0
        %2530 = vmatpush1.bf16.msra.mxu0 0
        %2531 = vmatprep.mubr.bf16.mxu0 0
        %2532 = vmatmul.mubr.bf16.gmra.mrb[0].mxu0 %v2494
        %v2533 = vpop.f32.mrb[0].mxu0
        %v2534 = vadd.f32 0.0, %v2533
        %v2535 = vpop.f32.mrb[0].mxu0
        %v2536 = vpop.f32.mrb[0].mxu0
        %v2537 = vpop.f32.mrb[0].mxu0
        %2538 = vdwg.mxu0
        %v2540 = vsel %vm1927, %v2395, 0
        %v2543 = vsel %vm2403, %v1922, 0
        %2545 = vmatprep.subr.bf16.mxu0 0
        %2546 = vmatpush1.bf16.msra.mxu0 %v2543
        %2547 = vmatprep.subr.bf16.mxu0 0
        %2548 = vmatpush1.bf16.msra.mxu0 0
        %2549 = vmatprep.subr.bf16.mxu0 0
        %2550 = vmatpush1.bf16.msra.mxu0 0
        %2551 = vmatprep.subr.bf16.mxu0 0
        %2552 = vmatpush1.bf16.msra.mxu0 0
        %2553 = vmatprep.subr.bf16.mxu0 0
        %2554 = vmatpush1.bf16.msra.mxu0 0
        %2555 = vmatprep.subr.bf16.mxu0 0
        %2556 = vmatpush1.bf16.msra.mxu0 0
        %2557 = vmatprep.subr.bf16.mxu0 0
        %2558 = vmatpush1.bf16.msra.mxu0 0
        %2559 = vmatprep.subr.bf16.mxu0 0
        %2560 = vmatpush1.bf16.msra.mxu0 0
        %2561 = vmatprep.subr.bf16.mxu0 0
        %2562 = vmatpush1.bf16.msra.mxu0 0
        %2563 = vmatprep.subr.bf16.mxu0 0
        %2564 = vmatpush1.bf16.msra.mxu0 0
        %2565 = vmatprep.subr.bf16.mxu0 0
        %2566 = vmatpush1.bf16.msra.mxu0 0
        %2567 = vmatprep.subr.bf16.mxu0 0
        %2568 = vmatpush1.bf16.msra.mxu0 0
        %2569 = vmatprep.subr.bf16.mxu0 0
        %2570 = vmatpush1.bf16.msra.mxu0 0
        %2571 = vmatprep.subr.bf16.mxu0 0
        %2572 = vmatpush1.bf16.msra.mxu0 0
        %2573 = vmatprep.subr.bf16.mxu0 0
        %2574 = vmatpush1.bf16.msra.mxu0 0
        %2575 = vmatprep.subr.bf16.mxu0 0
        %2576 = vmatpush1.bf16.msra.mxu0 0
        %2577 = vmatprep.mubr.bf16.mxu0 0
        %2578 = vmatmul.mubr.bf16.gmra.mrb[0].mxu0 %v2540
        %v2579 = vpop.f32.mrb[0].mxu0
        %v2580 = vadd.f32 0.0, %v2579
        %v2581 = vpop.f32.mrb[0].mxu0
        %v2582 = vpop.f32.mrb[0].mxu0
        %v2583 = vpop.f32.mrb[0].mxu0
        %2584 = vdwg.mxu0
        %v2586 = vsel %vm1927, %v2396, 0
        %v2589 = vsel %vm2403, %v1923, 0
        %2591 = vmatprep.subr.bf16.mxu0 0
        %2592 = vmatpush1.bf16.msra.mxu0 %v2589
        %2593 = vmatprep.subr.bf16.mxu0 0
        %2594 = vmatpush1.bf16.msra.mxu0 0
        %2595 = vmatprep.subr.bf16.mxu0 0
        %2596 = vmatpush1.bf16.msra.mxu0 0
        %2597 = vmatprep.subr.bf16.mxu0 0
        %2598 = vmatpush1.bf16.msra.mxu0 0
        %2599 = vmatprep.subr.bf16.mxu0 0
        %2600 = vmatpush1.bf16.msra.mxu0 0
        %2601 = vmatprep.subr.bf16.mxu0 0
        %2602 = vmatpush1.bf16.msra.mxu0 0
        %2603 = vmatprep.subr.bf16.mxu0 0
        %2604 = vmatpush1.bf16.msra.mxu0 0
        %2605 = vmatprep.subr.bf16.mxu0 0
        %2606 = vmatpush1.bf16.msra.mxu0 0
        %2607 = vmatprep.subr.bf16.mxu0 0
        %2608 = vmatpush1.bf16.msra.mxu0 0
        %2609 = vmatprep.subr.bf16.mxu0 0
        %2610 = vmatpush1.bf16.msra.mxu0 0
        %2611 = vmatprep.subr.bf16.mxu0 0
        %2612 = vmatpush1.bf16.msra.mxu0 0
        %2613 = vmatprep.subr.bf16.mxu0 0
        %2614 = vmatpush1.bf16.msra.mxu0 0
        %2615 = vmatprep.subr.bf16.mxu0 0
        %2616 = vmatpush1.bf16.msra.mxu0 0
        %2617 = vmatprep.subr.bf16.mxu0 0
        %2618 = vmatpush1.bf16.msra.mxu0 0
        %2619 = vmatprep.subr.bf16.mxu0 0
        %2620 = vmatpush1.bf16.msra.mxu0 0
        %2621 = vmatprep.subr.bf16.mxu0 0
        %2622 = vmatpush1.bf16.msra.mxu0 0
        %2623 = vmatprep.mubr.bf16.mxu0 0
        %2624 = vmatmul.mubr.bf16.gmra.mrb[0].mxu0 %v2586
        %v2625 = vpop.f32.mrb[0].mxu0
        %v2626 = vadd.f32 0.0, %v2625
        %v2627 = vpop.f32.mrb[0].mxu0
        %v2628 = vpop.f32.mrb[0].mxu0
        %v2629 = vpop.f32.mrb[0].mxu0
        %2630 = vdwg.mxu0
        %v2632 = vsel %vm1927, %v2397, 0
        %v2635 = vsel %vm2403, %v1924, 0
        %2637 = vmatprep.subr.bf16.mxu0 0
        %2638 = vmatpush1.bf16.msra.mxu0 %v2635
        %2639 = vmatprep.subr.bf16.mxu0 0
        %2640 = vmatpush1.bf16.msra.mxu0 0
        %2641 = vmatprep.subr.bf16.mxu0 0
        %2642 = vmatpush1.bf16.msra.mxu0 0
        %2643 = vmatprep.subr.bf16.mxu0 0
        %2644 = vmatpush1.bf16.msra.mxu0 0
        %2645 = vmatprep.subr.bf16.mxu0 0
        %2646 = vmatpush1.bf16.msra.mxu0 0
        %2647 = vmatprep.subr.bf16.mxu0 0
        %2648 = vmatpush1.bf16.msra.mxu0 0
        %2649 = vmatprep.subr.bf16.mxu0 0
        %2650 = vmatpush1.bf16.msra.mxu0 0
        %2651 = vmatprep.subr.bf16.mxu0 0
        %2652 = vmatpush1.bf16.msra.mxu0 0
        %2653 = vmatprep.subr.bf16.mxu0 0
        %2654 = vmatpush1.bf16.msra.mxu0 0
        %2655 = vmatprep.subr.bf16.mxu0 0
        %2656 = vmatpush1.bf16.msra.mxu0 0
        %2657 = vmatprep.subr.bf16.mxu0 0
        %2658 = vmatpush1.bf16.msra.mxu0 0
        %2659 = vmatprep.subr.bf16.mxu0 0
        %2660 = vmatpush1.bf16.msra.mxu0 0
        %2661 = vmatprep.subr.bf16.mxu0 0
        %2662 = vmatpush1.bf16.msra.mxu0 0
        %2663 = vmatprep.subr.bf16.mxu0 0
        %2664 = vmatpush1.bf16.msra.mxu0 0
        %2665 = vmatprep.subr.bf16.mxu0 0
        %2666 = vmatpush1.bf16.msra.mxu0 0
        %2667 = vmatprep.subr.bf16.mxu0 0
        %2668 = vmatpush1.bf16.msra.mxu0 0
        %2669 = vmatprep.mubr.bf16.mxu0 0
        %2670 = vmatmul.mubr.bf16.gmra.mrb[0].mxu0 %v2632
        %v2671 = vpop.f32.mrb[0].mxu0
        %v2672 = vadd.f32 0.0, %v2671
        %v2673 = vpop.f32.mrb[0].mxu0
        %v2674 = vpop.f32.mrb[0].mxu0
        %v2675 = vpop.f32.mrb[0].mxu0
        %2676 = vdwg.mxu0
        %v2678 = vsel %vm1927, %v2398, 0
        %v2681 = vsel %vm2403, %v1925, 0
        %2683 = vmatprep.subr.bf16.mxu0 0
        %2684 = vmatpush1.bf16.msra.mxu0 %v2681
        %2685 = vmatprep.subr.bf16.mxu0 0
        %2686 = vmatpush1.bf16.msra.mxu0 0
        %2687 = vmatprep.subr.bf16.mxu0 0
        %2688 = vmatpush1.bf16.msra.mxu0 0
        %2689 = vmatprep.subr.bf16.mxu0 0
        %2690 = vmatpush1.bf16.msra.mxu0 0
        %2691 = vmatprep.subr.bf16.mxu0 0
        %2692 = vmatpush1.bf16.msra.mxu0 0
        %2693 = vmatprep.subr.bf16.mxu0 0
        %2694 = vmatpush1.bf16.msra.mxu0 0
        %2695 = vmatprep.subr.bf16.mxu0 0
        %2696 = vmatpush1.bf16.msra.mxu0 0
        %2697 = vmatprep.subr.bf16.mxu0 0
        %2698 = vmatpush1.bf16.msra.mxu0 0
        %2699 = vmatprep.subr.bf16.mxu0 0
        %2700 = vmatpush1.bf16.msra.mxu0 0
        %2701 = vmatprep.subr.bf16.mxu0 0
        %2702 = vmatpush1.bf16.msra.mxu0 0
        %2703 = vmatprep.subr.bf16.mxu0 0
        %2704 = vmatpush1.bf16.msra.mxu0 0
        %2705 = vmatprep.subr.bf16.mxu0 0
        %2706 = vmatpush1.bf16.msra.mxu0 0
        %2707 = vmatprep.subr.bf16.mxu0 0
        %2708 = vmatpush1.bf16.msra.mxu0 0
        %2709 = vmatprep.subr.bf16.mxu0 0
        %2710 = vmatpush1.bf16.msra.mxu0 0
        %2711 = vmatprep.subr.bf16.mxu0 0
        %2712 = vmatpush1.bf16.msra.mxu0 0
        %2713 = vmatprep.subr.bf16.mxu0 0
        %2714 = vmatpush1.bf16.msra.mxu0 0
        %2715 = vmatprep.mubr.bf16.mxu0 0
        %2716 = vmatmul.mubr.bf16.gmra.mrb[0].mxu0 %v2678
        %v2717 = vpop.f32.mrb[0].mxu0
        %v2718 = vadd.f32 0.0, %v2717
        %v2719 = vpop.f32.mrb[0].mxu0
        %v2720 = vpop.f32.mrb[0].mxu0
        %v2721 = vpop.f32.mrb[0].mxu0
        %2722 = vdwg.mxu0
        %v2724 = vsel %vm1927, %v2399, 0
        %v2727 = vsel %vm2403, %v1926, 0
        %2729 = vmatprep.subr.bf16.mxu0 0
        %2730 = vmatpush1.bf16.msra.mxu0 %v2727
        %2731 = vmatprep.subr.bf16.mxu0 0
        %2732 = vmatpush1.bf16.msra.mxu0 0
        %2733 = vmatprep.subr.bf16.mxu0 0
        %2734 = vmatpush1.bf16.msra.mxu0 0
        %2735 = vmatprep.subr.bf16.mxu0 0
        %2736 = vmatpush1.bf16.msra.mxu0 0
        %2737 = vmatprep.subr.bf16.mxu0 0
        %2738 = vmatpush1.bf16.msra.mxu0 0
        %2739 = vmatprep.subr.bf16.mxu0 0
        %2740 = vmatpush1.bf16.msra.mxu0 0
        %2741 = vmatprep.subr.bf16.mxu0 0
        %2742 = vmatpush1.bf16.msra.mxu0 0
        %2743 = vmatprep.subr.bf16.mxu0 0
        %2744 = vmatpush1.bf16.msra.mxu0 0
        %2745 = vmatprep.subr.bf16.mxu0 0
        %2746 = vmatpush1.bf16.msra.mxu0 0
        %2747 = vmatprep.subr.bf16.mxu0 0
        %2748 = vmatpush1.bf16.msra.mxu0 0
        %2749 = vmatprep.subr.bf16.mxu0 0
        %2750 = vmatpush1.bf16.msra.mxu0 0
        %2751 = vmatprep.subr.bf16.mxu0 0
        %2752 = vmatpush1.bf16.msra.mxu0 0
        %2753 = vmatprep.subr.bf16.mxu0 0
        %2754 = vmatpush1.bf16.msra.mxu0 0
        %2755 = vmatprep.subr.bf16.mxu0 0
        %2756 = vmatpush1.bf16.msra.mxu0 0
        %2757 = vmatprep.subr.bf16.mxu0 0
        %2758 = vmatpush1.bf16.msra.mxu0 0
        %2759 = vmatprep.subr.bf16.mxu0 0
        %2760 = vmatpush1.bf16.msra.mxu0 0
        %2761 = vmatprep.mubr.bf16.mxu0 0
        %2762 = vmatmul.mubr.bf16.gmra.mrb[0].mxu0 %v2724
        %v2763 = vpop.f32.mrb[0].mxu0
        %v2764 = vadd.f32 0.0, %v2763
        %v2765 = vpop.f32.mrb[0].mxu0
        %v2766 = vpop.f32.mrb[0].mxu0
        %v2767 = vpop.f32.mrb[0].mxu0
        %2768 = vdwg.mxu0
        %v2769 = vcombine.low %v2442, %v2534
        %v2770 = vcombine.high %v2442, %v2534
        %v2772 = vunpack.c.l.s4 1983009808
        %v2773 = vunpack.c.0.s8 %v2772
        %v2774 = vlaneseq
        %v2775 = vshrl.u32 %v2774, 7
        %v2776 = vsub.s32 %v2773, %v2775
        %v2777 = vrot.slane %v2769, %v2776
        %v2779 = vunpack.c.l.s4 1983009808
        %v2780 = vunpack.c.0.s8 %v2779
        %v2781 = vlaneseq
        %v2782 = vshrl.u32 %v2781, 7
        %v2783 = vsub.s32 %v2780, %v2782
        %v2784 = vrot.slane %v2770, %v2783
        %v2785 = vcombine.low %v2488, %v2580
        %v2786 = vcombine.high %v2488, %v2580
        %v2788 = vunpack.c.l.s4 1983009808
        %v2789 = vunpack.c.0.s8 %v2788
        %v2790 = vlaneseq
        %v2791 = vshrl.u32 %v2790, 7
        %v2792 = vsub.s32 %v2789, %v2791
        %v2793 = vrot.slane %v2785, %v2792
        %v2795 = vunpack.c.l.s4 1983009808
        %v2796 = vunpack.c.0.s8 %v2795
        %v2797 = vlaneseq
        %v2798 = vshrl.u32 %v2797, 7
        %v2799 = vsub.s32 %v2796, %v2798
        %v2800 = vrot.slane %v2786, %v2799
        %v2801 = vcombine.low %v2777, %v2793
        %v2802 = vcombine.high %v2777, %v2793
        %v2804 = vunpack.c.l.s4 1934713408
        %v2805 = vunpack.c.0.s8 %v2804
        %v2806 = vlaneseq
        %v2807 = vshrl.u32 %v2806, 7
        %v2808 = vsub.s32 %v2805, %v2807
        %v2809 = vrot.slane %v2801, %v2808
        %v2811 = vunpack.c.l.s4 1934713408
        %v2812 = vunpack.c.0.s8 %v2811
        %v2813 = vlaneseq
        %v2814 = vshrl.u32 %v2813, 7
        %v2815 = vsub.s32 %v2812, %v2814
        %v2816 = vrot.slane %v2802, %v2815
        %v2817 = vcombine.low %v2784, %v2800
        %v2818 = vcombine.high %v2784, %v2800
        %v2820 = vunpack.c.l.s4 1934713408
        %v2821 = vunpack.c.0.s8 %v2820
        %v2822 = vlaneseq
        %v2823 = vshrl.u32 %v2822, 7
        %v2824 = vsub.s32 %v2821, %v2823
        %v2825 = vrot.slane %v2817, %v2824
        %v2827 = vunpack.c.l.s4 1934713408
        %v2828 = vunpack.c.0.s8 %v2827
        %v2829 = vlaneseq
        %v2830 = vshrl.u32 %v2829, 7
        %v2831 = vsub.s32 %v2828, %v2830
        %v2832 = vrot.slane %v2818, %v2831
        %v2833 = vcombine.high %v2809, 0.0
        %v2834 = vcombine.high %v2816, 0.0
        %v2835 = vcombine.high %v2825, 0.0
        %v2836 = vcombine.high %v2832, 0.0
        %v2837 = vcombine.low %v2626, %v2718
        %v2838 = vcombine.high %v2626, %v2718
        %v2840 = vunpack.c.l.s4 1983009808
        %v2841 = vunpack.c.0.s8 %v2840
        %v2842 = vlaneseq
        %v2843 = vshrl.u32 %v2842, 7
        %v2844 = vsub.s32 %v2841, %v2843
        %v2845 = vrot.slane %v2837, %v2844
        %v2847 = vunpack.c.l.s4 1983009808
        %v2848 = vunpack.c.0.s8 %v2847
        %v2849 = vlaneseq
        %v2850 = vshrl.u32 %v2849, 7
        %v2851 = vsub.s32 %v2848, %v2850
        %v2852 = vrot.slane %v2838, %v2851
        %v2853 = vcombine.low %v2672, %v2764
        %v2854 = vcombine.high %v2672, %v2764
        %v2856 = vunpack.c.l.s4 1983009808
        %v2857 = vunpack.c.0.s8 %v2856
        %v2858 = vlaneseq
        %v2859 = vshrl.u32 %v2858, 7
        %v2860 = vsub.s32 %v2857, %v2859
        %v2861 = vrot.slane %v2853, %v2860
        %v2863 = vunpack.c.l.s4 1983009808
        %v2864 = vunpack.c.0.s8 %v2863
        %v2865 = vlaneseq
        %v2866 = vshrl.u32 %v2865, 7
        %v2867 = vsub.s32 %v2864, %v2866
        %v2868 = vrot.slane %v2854, %v2867
        %v2869 = vcombine.low %v2845, %v2861
        %v2870 = vcombine.high %v2845, %v2861
        %v2872 = vunpack.c.l.s4 1934713408
        %v2873 = vunpack.c.0.s8 %v2872
        %v2874 = vlaneseq
        %v2875 = vshrl.u32 %v2874, 7
        %v2876 = vsub.s32 %v2873, %v2875
        %v2877 = vrot.slane %v2869, %v2876
        %v2879 = vunpack.c.l.s4 1934713408
        %v2880 = vunpack.c.0.s8 %v2879
        %v2881 = vlaneseq
        %v2882 = vshrl.u32 %v2881, 7
        %v2883 = vsub.s32 %v2880, %v2882
        %v2884 = vrot.slane %v2870, %v2883
        %v2885 = vcombine.low %v2852, %v2868
        %v2886 = vcombine.high %v2852, %v2868
        %v2888 = vunpack.c.l.s4 1934713408
        %v2889 = vunpack.c.0.s8 %v2888
        %v2890 = vlaneseq
        %v2891 = vshrl.u32 %v2890, 7
        %v2892 = vsub.s32 %v2889, %v2891
        %v2893 = vrot.slane %v2885, %v2892
        %v2895 = vunpack.c.l.s4 1934713408
        %v2896 = vunpack.c.0.s8 %v2895
        %v2897 = vlaneseq
        %v2898 = vshrl.u32 %v2897, 7
        %v2899 = vsub.s32 %v2896, %v2898
        %v2900 = vrot.slane %v2886, %v2899
        %v2901 = vcombine.high %v2877, 0.0
        %v2902 = vcombine.high %v2884, 0.0
        %v2903 = vcombine.high %v2893, 0.0
        %v2904 = vcombine.high %v2900, 0.0
        %v2905 = vcombine.low %v2809, %v2816
        %v2907 = vunpack.c.l.s4 1983009808
        %v2908 = vunpack.c.0.s8 %v2907
        %v2909 = vlaneseq
        %v2910 = vshrl.u32 %v2909, 7
        %v2911 = vsub.s32 %v2908, %v2910
        %v2912 = vrot.slane %v2905, %v2911
        %v2913 = vcombine.low %v2833, %v2834
        %v2915 = vunpack.c.l.s4 1983009808
        %v2916 = vunpack.c.0.s8 %v2915
        %v2917 = vlaneseq
        %v2918 = vshrl.u32 %v2917, 7
        %v2919 = vsub.s32 %v2916, %v2918
        %v2920 = vrot.slane %v2913, %v2919
        %v2921 = vcombine.low %v2825, %v2832
        %v2923 = vunpack.c.l.s4 1983009808
        %v2924 = vunpack.c.0.s8 %v2923
        %v2925 = vlaneseq
        %v2926 = vshrl.u32 %v2925, 7
        %v2927 = vsub.s32 %v2924, %v2926
        %v2928 = vrot.slane %v2921, %v2927
        %v2929 = vcombine.low %v2835, %v2836
        %v2931 = vunpack.c.l.s4 1983009808
        %v2932 = vunpack.c.0.s8 %v2931
        %v2933 = vlaneseq
        %v2934 = vshrl.u32 %v2933, 7
        %v2935 = vsub.s32 %v2932, %v2934
        %v2936 = vrot.slane %v2929, %v2935
        %v2937 = vcombine.low %v2912, %v2920
        %v2938 = vcombine.high %v2912, %v2920
        %v2940 = vunpack.c.l.s4 1934713408
        %v2941 = vunpack.c.0.s8 %v2940
        %v2942 = vlaneseq
        %v2943 = vshrl.u32 %v2942, 7
        %v2944 = vsub.s32 %v2941, %v2943
        %v2945 = vrot.slane %v2937, %v2944
        %v2947 = vunpack.c.l.s4 1934713408
        %v2948 = vunpack.c.0.s8 %v2947
        %v2949 = vlaneseq
        %v2950 = vshrl.u32 %v2949, 7
        %v2951 = vsub.s32 %v2948, %v2950
        %v2952 = vrot.slane %v2938, %v2951
        %v2953 = vcombine.low %v2928, %v2936
        %v2954 = vcombine.high %v2928, %v2936
        %v2956 = vunpack.c.l.s4 1934713408
        %v2957 = vunpack.c.0.s8 %v2956
        %v2958 = vlaneseq
        %v2959 = vshrl.u32 %v2958, 7
        %v2960 = vsub.s32 %v2957, %v2959
        %v2961 = vrot.slane %v2953, %v2960
        %v2963 = vunpack.c.l.s4 1934713408
        %v2964 = vunpack.c.0.s8 %v2963
        %v2965 = vlaneseq
        %v2966 = vshrl.u32 %v2965, 7
        %v2967 = vsub.s32 %v2964, %v2966
        %v2968 = vrot.slane %v2954, %v2967
        %v2969 = vcombine.low %v2945, %v2961
        %v2970 = vcombine.high %v2945, %v2961
        %v2971 = vcombine.low %v2952, %v2968
        %v2972 = vcombine.high %v2952, %v2968
        %v2973 = vcombine.low %v2877, %v2884
        %v2975 = vunpack.c.l.s4 1983009808
        %v2976 = vunpack.c.0.s8 %v2975
        %v2977 = vlaneseq
        %v2978 = vshrl.u32 %v2977, 7
        %v2979 = vsub.s32 %v2976, %v2978
        %v2980 = vrot.slane %v2973, %v2979
        %v2981 = vcombine.low %v2901, %v2902
        %v2983 = vunpack.c.l.s4 1983009808
        %v2984 = vunpack.c.0.s8 %v2983
        %v2985 = vlaneseq
        %v2986 = vshrl.u32 %v2985, 7
        %v2987 = vsub.s32 %v2984, %v2986
        %v2988 = vrot.slane %v2981, %v2987
        %v2989 = vcombine.low %v2893, %v2900
        %v2991 = vunpack.c.l.s4 1983009808
        %v2992 = vunpack.c.0.s8 %v2991
        %v2993 = vlaneseq
        %v2994 = vshrl.u32 %v2993, 7
        %v2995 = vsub.s32 %v2992, %v2994
        %v2996 = vrot.slane %v2989, %v2995
        %v2997 = vcombine.low %v2903, %v2904
        %v2999 = vunpack.c.l.s4 1983009808
        %v3000 = vunpack.c.0.s8 %v2999
        %v3001 = vlaneseq
        %v3002 = vshrl.u32 %v3001, 7
        %v3003 = vsub.s32 %v3000, %v3002
        %v3004 = vrot.slane %v2997, %v3003
        %v3005 = vcombine.low %v2980, %v2988
        %v3006 = vcombine.high %v2980, %v2988
        %v3008 = vunpack.c.l.s4 1934713408
        %v3009 = vunpack.c.0.s8 %v3008
        %v3010 = vlaneseq
        %v3011 = vshrl.u32 %v3010, 7
        %v3012 = vsub.s32 %v3009, %v3011
        %v3013 = vrot.slane %v3005, %v3012
        %v3015 = vunpack.c.l.s4 1934713408
        %v3016 = vunpack.c.0.s8 %v3015
        %v3017 = vlaneseq
        %v3018 = vshrl.u32 %v3017, 7
        %v3019 = vsub.s32 %v3016, %v3018
        %v3020 = vrot.slane %v3006, %v3019
        %v3021 = vcombine.low %v2996, %v3004
        %v3022 = vcombine.high %v2996, %v3004
        %v3024 = vunpack.c.l.s4 1934713408
        %v3025 = vunpack.c.0.s8 %v3024
        %v3026 = vlaneseq
        %v3027 = vshrl.u32 %v3026, 7
        %v3028 = vsub.s32 %v3025, %v3027
        %v3029 = vrot.slane %v3021, %v3028
        %v3031 = vunpack.c.l.s4 1934713408
        %v3032 = vunpack.c.0.s8 %v3031
        %v3033 = vlaneseq
        %v3034 = vshrl.u32 %v3033, 7
        %v3035 = vsub.s32 %v3032, %v3034
        %v3036 = vrot.slane %v3022, %v3035
        %v3037 = vcombine.low %v3013, %v3029
        %v3038 = vcombine.high %v3013, %v3029
        %v3039 = vcombine.low %v3020, %v3036
        %v3040 = vcombine.high %v3020, %v3036
        %3043 = vrot.lane.b32.xlu0 %v2970, 8
        %v3044 = vpop.permute.xlu0 %3043
        %3045 = vrot.lane.b32.xlu0 %v3038, 8
        %v3046 = vpop.permute.xlu0 %3045
        %3051 = vrot.lane.b32.xlu0 %v2971, 16
        %v3052 = vpop.permute.xlu0 %3051
        %3053 = vrot.lane.b32.xlu0 %v3039, 16
        %v3054 = vpop.permute.xlu0 %3053
        %3059 = vrot.lane.b32.xlu0 %v2972, 24
        %v3060 = vpop.permute.xlu0 %3059
        %3061 = vrot.lane.b32.xlu0 %v3040, 24
        %v3062 = vpop.permute.xlu0 %3061
        %v3065 = vsel %vm1927, %v2969, %v3044
        %v3066 = vsel %vm1927, %v3037, %v3046
        %vm3067 = vcmask 130048
        %v3068 = vsel %vm3067, %v3065, %v3052
        %v3069 = vsel %vm3067, %v3066, %v3054
        %vm3070 = vcmask 195584
        %v3071 = vsel %vm3070, %v3068, %v3060
        %v3072 = vsel %vm3070, %v3069, %v3062
        %v3073 = vpack.c.bf16 %v3072, %v3071
        %v3074 = vld [vmem:[%s724] sm:$0xf]
        %v3075 = vld [vmem:[%s724 + $0x4] sm:$0xf]
        %v3076 = vld [vmem:[%s724 + $0x8] sm:$0xf]
        %v3077 = vld [vmem:[%s724 + $0xc] sm:$0xf]
        %v3078 = vld [vmem:[%s732] sm:$0x1]
        %v3080 = vlaneseq
        %v3081 = vshrl.u32 %v3080, 7
        %v3082 = vsub.s32 0, %v3081
        %v3083 = vrot.slane %v3078, %v3082
        %v3089 = vunpack.c.l.b16 %v3074
        %v3090 = vunpack.c.l.b16 %v3075
        %v3091 = vunpack.c.l.b16 %v3076
        %v3092 = vunpack.c.l.b16 %v3077
        %v3093 = vpack.c.b16 %v3090, %v3089
        %v3094 = vpack.c.b16 %v3092, %v3091
        %v3098 = vsel %vm901, %v3073, 0
        %3100 = vmatprep.subr.bf16.mxu0 0
        %3101 = vmatpush1.bf16.msra.mxu0 %v3093
        %3102 = vmatprep.subr.bf16.mxu0 0
        %3103 = vmatpush1.bf16.msra.mxu0 %v3094
        %3104 = vmatprep.subr.bf16.mxu0 0
        %3105 = vmatpush1.bf16.msra.mxu0 0
        %3106 = vmatprep.subr.bf16.mxu0 0
        %3107 = vmatpush1.bf16.msra.mxu0 0
        %3108 = vmatprep.subr.bf16.mxu0 0
        %3109 = vmatpush1.bf16.msra.mxu0 0
        %3110 = vmatprep.subr.bf16.mxu0 0
        %3111 = vmatpush1.bf16.msra.mxu0 0
        %3112 = vmatprep.subr.bf16.mxu0 0
        %3113 = vmatpush1.bf16.msra.mxu0 0
        %3114 = vmatprep.subr.bf16.mxu0 0
        %3115 = vmatpush1.bf16.msra.mxu0 0
        %3116 = vmatprep.subr.bf16.mxu0 0
        %3117 = vmatpush1.bf16.msra.mxu0 0
        %3118 = vmatprep.subr.bf16.mxu0 0
        %3119 = vmatpush1.bf16.msra.mxu0 0
        %3120 = vmatprep.subr.bf16.mxu0 0
        %3121 = vmatpush1.bf16.msra.mxu0 0
        %3122 = vmatprep.subr.bf16.mxu0 0
        %3123 = vmatpush1.bf16.msra.mxu0 0
        %3124 = vmatprep.subr.bf16.mxu0 0
        %3125 = vmatpush1.bf16.msra.mxu0 0
        %3126 = vmatprep.subr.bf16.mxu0 0
        %3127 = vmatpush1.bf16.msra.mxu0 0
        %3128 = vmatprep.subr.bf16.mxu0 0
        %3129 = vmatpush1.bf16.msra.mxu0 0
        %3130 = vmatprep.subr.bf16.mxu0 0
        %3131 = vmatpush1.bf16.msra.mxu0 0
        %3132 = vmatprep.mubr.bf16.mxu0 0
        %3133 = vmatmul.mubr.bf16.gmra.mrb[0].mxu0 %v3098
        %v3134 = vpop.f32.mrb[0].mxu0
        %v3135 = vadd.f32 %v3083, %v3134
        %v3136 = vpop.f32.mrb[0].mxu0
        %v3137 = vpop.f32.mrb[0].mxu0
        %v3138 = vadd.f32 %v3083, %v3137
        %v3139 = vpop.f32.mrb[0].mxu0
        %3140 = vdwg.mxu0
        %v3141 = vadd.f32 %v897, %v3135
        %v3142 = vadd.f32 %v898, %v3138
        %v3143 = vld [vmem:[%s740] sm:$0x1]
        %v3144 = vld [vmem:[%s748] sm:$0x1]
        %v3145 = vsel %vm901, %v3141, 0.0
        %3146 = vadd.xlane.f32.xlu0 %v3145
        %v3147 = vpop.xlane.xlu0 %3146
        %v3148 = vsel %vm901, %v3142, 0.0
        %3149 = vadd.xlane.f32.xlu0 %v3148
        %v3150 = vpop.xlane.xlu0 %3149
        %v3151 = vmul.f32 %v3147, %v908
        %v3152 = vmul.f32 %v3150, %v908
        %v3153 = vmul.f32 %v3141, %v3141
        %v3154 = vmul.f32 %v3142, %v3142
        %v3155 = vsel %vm901, %v3153, 0.0
        %3156 = vadd.xlane.f32.xlu0 %v3155
        %v3157 = vpop.xlane.xlu0 %3156
        %v3158 = vsel %vm901, %v3154, 0.0
        %3159 = vadd.xlane.f32.xlu0 %v3158
        %v3160 = vpop.xlane.xlu0 %3159
        %v3161 = vmul.f32 %v3157, %v908
        %v3162 = vmul.f32 %v3160, %v908
        %v3163 = vmul.f32 %v3151, %v3151
        %v3164 = vmul.f32 %v3152, %v3152
        %v3165 = vsub.f32 %v3161, %v3163
        %v3166 = vsub.f32 %v3162, %v3164
        %v3167 = vmax.f32 %v3165, 0.0
        %v3168 = vmax.f32 %v3166, 0.0
        %v3169 = vsub.f32 %v3141, %v3151
        %v3170 = vsub.f32 %v3142, %v3152
        %v3171 = vadd.f32 %v3167, 1e-06
        %v3172 = vadd.f32 %v3168, 1e-06
        %v3173 = vrsqrt.pop %v3171
        %v3174 = vrsqrt.pop %v3172
        %v3175 = vmul.f32 %v3169, %v3173
        %v3176 = vmul.f32 %v3170, %v3174
        %v3178 = vlaneseq
        %v3179 = vshrl.u32 %v3178, 7
        %v3180 = vsub.s32 0, %v3179
        %v3181 = vrot.slane %v3143, %v3180
        %v3183 = vmul.f32 %v3175, %v3181
        %v3184 = vmul.f32 %v3176, %v3181
        %v3186 = vlaneseq
        %v3187 = vshrl.u32 %v3186, 7
        %v3188 = vsub.s32 0, %v3187
        %v3189 = vrot.slane %v3144, %v3188
        %v3191 = vadd.f32 %v3183, %v3189
        %v3192 = vadd.f32 %v3184, %v3189
        %v3193 = vpack.c.bf16 %v3192, %v3191
        %v3194 = vld [vmem:[%s757] sm:$0xf]
        %v3195 = vld [vmem:[%s757 + $0x4] sm:$0xf]
        %v3196 = vld [vmem:[%s757 + $0x8] sm:$0xf]
        %v3197 = vld [vmem:[%s757 + $0xc] sm:$0xf]
        %v3198 = vld [vmem:[%s765] sm:$0x1]
        %v3200 = vlaneseq
        %v3201 = vshrl.u32 %v3200, 7
        %v3202 = vsub.s32 0, %v3201
        %v3203 = vrot.slane %v3198, %v3202
        %v3209 = vunpack.c.l.b16 %v3194
        %v3210 = vunpack.c.l.b16 %v3195
        %v3211 = vunpack.c.l.b16 %v3196
        %v3212 = vunpack.c.l.b16 %v3197
        %v3213 = vpack.c.b16 %v3210, %v3209
        %v3214 = vpack.c.b16 %v3212, %v3211
        %v3218 = vsel %vm901, %v3193, 0
        %3220 = vmatprep.subr.bf16.mxu0 0
        %3221 = vmatpush1.bf16.msra.mxu0 %v3213
        %3222 = vmatprep.subr.bf16.mxu0 0
        %3223 = vmatpush1.bf16.msra.mxu0 %v3214
        %3224 = vmatprep.subr.bf16.mxu0 0
        %3225 = vmatpush1.bf16.msra.mxu0 0
        %3226 = vmatprep.subr.bf16.mxu0 0
        %3227 = vmatpush1.bf16.msra.mxu0 0
        %3228 = vmatprep.subr.bf16.mxu0 0
        %3229 = vmatpush1.bf16.msra.mxu0 0
        %3230 = vmatprep.subr.bf16.mxu0 0
        %3231 = vmatpush1.bf16.msra.mxu0 0
        %3232 = vmatprep.subr.bf16.mxu0 0
        %3233 = vmatpush1.bf16.msra.mxu0 0
        %3234 = vmatprep.subr.bf16.mxu0 0
        %3235 = vmatpush1.bf16.msra.mxu0 0
        %3236 = vmatprep.subr.bf16.mxu0 0
        %3237 = vmatpush1.bf16.msra.mxu0 0
        %3238 = vmatprep.subr.bf16.mxu0 0
        %3239 = vmatpush1.bf16.msra.mxu0 0
        %3240 = vmatprep.subr.bf16.mxu0 0
        %3241 = vmatpush1.bf16.msra.mxu0 0
        %3242 = vmatprep.subr.bf16.mxu0 0
        %3243 = vmatpush1.bf16.msra.mxu0 0
        %3244 = vmatprep.subr.bf16.mxu0 0
        %3245 = vmatpush1.bf16.msra.mxu0 0
        %3246 = vmatprep.subr.bf16.mxu0 0
        %3247 = vmatpush1.bf16.msra.mxu0 0
        %3248 = vmatprep.subr.bf16.mxu0 0
        %3249 = vmatpush1.bf16.msra.mxu0 0
        %3250 = vmatprep.subr.bf16.mxu0 0
        %3251 = vmatpush1.bf16.msra.mxu0 0
        %3252 = vmatprep.mubr.bf16.mxu0 0
        %3253 = vmatmul.mubr.bf16.gmra.mrb[0].mxu0 %v3218
        %v3254 = vpop.f32.mrb[0].mxu0
        %v3255 = vadd.f32 %v3203, %v3254
        %v3256 = vpop.f32.mrb[0].mxu0
        %v3257 = vpop.f32.mrb[0].mxu0
        %v3258 = vadd.f32 %v3203, %v3257
        %v3259 = vpop.f32.mrb[0].mxu0
        %3260 = vdwg.mxu0
        %v3261 = vmul.f32 %v3255, 0.5
        %v3262 = vmul.f32 %v3258, 0.5
        %v3263 = vmul.f32 %v3255, 0.70710677
        %v3264 = vmul.f32 %v3258, 0.70710677
        %v3265 = verf.f32.pop %v3263
        %v3266 = verf.f32.pop %v3264
        %v3267 = vadd.f32 %v3265, 1.0
        %v3268 = vadd.f32 %v3266, 1.0
        %v3269 = vmul.f32 %v3261, %v3267
        %v3270 = vmul.f32 %v3262, %v3268
        %v3271 = vpack.c.bf16 %v3270, %v3269
        %v3272 = vld [vmem:[%s774] sm:$0xf]
        %v3273 = vld [vmem:[%s774 + $0x4] sm:$0xf]
        %v3274 = vld [vmem:[%s774 + $0x8] sm:$0xf]
        %v3275 = vld [vmem:[%s774 + $0xc] sm:$0xf]
        %v3276 = vld [vmem:[%s774 + $0x10] sm:$0xf]
        %v3277 = vld [vmem:[%s774 + $0x14] sm:$0xf]
        %v3278 = vld [vmem:[%s774 + $0x18] sm:$0xf]
        %v3279 = vld [vmem:[%s774 + $0x1c] sm:$0xf]
        %v3280 = vld [vmem:[%s774 + $0x20] sm:$0xf]
        %v3281 = vld [vmem:[%s774 + $0x24] sm:$0xf]
        %v3282 = vld [vmem:[%s774 + $0x28] sm:$0xf]
        %v3283 = vld [vmem:[%s774 + $0x2c] sm:$0xf]
        %v3284 = vld [vmem:[%s774 + $0x30] sm:$0xf]
        %v3285 = vld [vmem:[%s774 + $0x34] sm:$0xf]
        %v3286 = vld [vmem:[%s774 + $0x38] sm:$0xf]
        %v3287 = vld [vmem:[%s774 + $0x3c] sm:$0xf]
        %v3288 = vld [vmem:[%s782] sm:$0x1]
        %v3290 = vlaneseq
        %v3291 = vshrl.u32 %v3290, 7
        %v3292 = vsub.s32 0, %v3291
        %v3293 = vrot.slane %v3288, %v3292
        %v3311 = vunpack.c.l.b16 %v3272
        %v3312 = vunpack.c.l.b16 %v3273
        %v3313 = vunpack.c.l.b16 %v3274
        %v3314 = vunpack.c.l.b16 %v3275
        %v3315 = vunpack.c.l.b16 %v3276
        %v3316 = vunpack.c.l.b16 %v3277
        %v3317 = vunpack.c.l.b16 %v3278
        %v3318 = vunpack.c.l.b16 %v3279
        %v3319 = vunpack.c.l.b16 %v3280
        %v3320 = vunpack.c.l.b16 %v3281
        %v3321 = vunpack.c.l.b16 %v3282
        %v3322 = vunpack.c.l.b16 %v3283
        %v3323 = vunpack.c.l.b16 %v3284
        %v3324 = vunpack.c.l.b16 %v3285
        %v3325 = vunpack.c.l.b16 %v3286
        %v3326 = vunpack.c.l.b16 %v3287
        %v3327 = vpack.c.b16 %v3312, %v3311
        %v3328 = vpack.c.b16 %v3314, %v3313
        %v3329 = vpack.c.b16 %v3316, %v3315
        %v3330 = vpack.c.b16 %v3318, %v3317
        %v3331 = vpack.c.b16 %v3320, %v3319
        %v3332 = vpack.c.b16 %v3322, %v3321
        %v3333 = vpack.c.b16 %v3324, %v3323
        %v3334 = vpack.c.b16 %v3326, %v3325
        %3343 = vmatprep.subr.bf16.mxu0 0
        %3344 = vmatpush1.bf16.msra.mxu0 %v3327
        %3345 = vmatprep.subr.bf16.mxu0 0
        %3346 = vmatpush1.bf16.msra.mxu0 %v3328
        %3347 = vmatprep.subr.bf16.mxu0 0
        %3348 = vmatpush1.bf16.msra.mxu0 %v3329
        %3349 = vmatprep.subr.bf16.mxu0 0
        %3350 = vmatpush1.bf16.msra.mxu0 %v3330
        %3351 = vmatprep.subr.bf16.mxu0 0
        %3352 = vmatpush1.bf16.msra.mxu0 %v3331
        %3353 = vmatprep.subr.bf16.mxu0 0
        %3354 = vmatpush1.bf16.msra.mxu0 %v3332
        %3355 = vmatprep.subr.bf16.mxu0 0
        %3356 = vmatpush1.bf16.msra.mxu0 %v3333
        %3357 = vmatprep.subr.bf16.mxu0 0
        %3358 = vmatpush1.bf16.msra.mxu0 %v3334
        %3359 = vmatprep.subr.bf16.mxu0 0
        %3360 = vmatpush1.bf16.msra.mxu0 0
        %3361 = vmatprep.subr.bf16.mxu0 0
        %3362 = vmatpush1.bf16.msra.mxu0 0
        %3363 = vmatprep.subr.bf16.mxu0 0
        %3364 = vmatpush1.bf16.msra.mxu0 0
        %3365 = vmatprep.subr.bf16.mxu0 0
        %3366 = vmatpush1.bf16.msra.mxu0 0
        %3367 = vmatprep.subr.bf16.mxu0 0
        %3368 = vmatpush1.bf16.msra.mxu0 0
        %3369 = vmatprep.subr.bf16.mxu0 0
        %3370 = vmatpush1.bf16.msra.mxu0 0
        %3371 = vmatprep.subr.bf16.mxu0 0
        %3372 = vmatpush1.bf16.msra.mxu0 0
        %3373 = vmatprep.subr.bf16.mxu0 0
        %3374 = vmatpush1.bf16.msra.mxu0 0
        %3375 = vmatprep.mubr.bf16.mxu0 0
        %3376 = vmatmul.mubr.bf16.gmra.mrb[0].mxu0 %v3271
        %v3377 = vpop.f32.mrb[0].mxu0
        %v3378 = vadd.f32 %v3293, %v3377
        %v3379 = vpop.f32.mrb[0].mxu0
        %v3380 = vpop.f32.mrb[0].mxu0
        %v3381 = vadd.f32 %v3293, %v3380
        %v3382 = vpop.f32.mrb[0].mxu0
        %3383 = vdwg.mxu0
        %v3384 = vadd.f32 %v3141, %v3378
        %v3385 = vadd.f32 %v3142, %v3381
        %3386 = vst.msk [vmem:[#allocation2] sm:$0xff] %vm901, %v3384
        %3387 = vst.msk [vmem:[#allocation2 + $0x8] sm:$0xff] %vm901, %v3385
        %p3388 = scmp.eq.s32.totalorder %s49, 9
        // Predicated region
        $region141: #{tpu_custom_call.1} parent=75 // pred_check
          %p3389 = pneg %p3388
        $region142: #{tpu_custom_call.1} parent=75 // pred_check_branch
          %3391 = sbr.rel (%p3389) target = $region144
        $region143: #{tpu_custom_call.1} parent=75 // pred_region
          %v3392 = vld [vmem:[#allocation24] sm:$0x1]
          %v3393 = vld [vmem:[#allocation25] sm:$0x1]
          %v3394 = vsel %vm901, %v3384, 0.0
          %3395 = vadd.xlane.f32.xlu0 %v3394
          %v3396 = vpop.xlane.xlu0 %3395
          %v3397 = vsel %vm901, %v3385, 0.0
          %3398 = vadd.xlane.f32.xlu0 %v3397
          %v3399 = vpop.xlane.xlu0 %3398
          %v3400 = vmul.f32 %v3396, %v908
          %v3401 = vmul.f32 %v3399, %v908
          %v3402 = vmul.f32 %v3384, %v3384
          %v3403 = vmul.f32 %v3385, %v3385
          %v3404 = vsel %vm901, %v3402, 0.0
          %3405 = vadd.xlane.f32.xlu0 %v3404
          %v3406 = vpop.xlane.xlu0 %3405
          %v3407 = vsel %vm901, %v3403, 0.0
          %3408 = vadd.xlane.f32.xlu0 %v3407
          %v3409 = vpop.xlane.xlu0 %3408
          %v3410 = vmul.f32 %v3406, %v908
          %v3411 = vmul.f32 %v3409, %v908
          %v3412 = vmul.f32 %v3400, %v3400
          %v3413 = vmul.f32 %v3401, %v3401
          %v3414 = vsub.f32 %v3410, %v3412
          %v3415 = vsub.f32 %v3411, %v3413
          %v3416 = vmax.f32 %v3414, 0.0
          %v3417 = vmax.f32 %v3415, 0.0
          %v3418 = vsub.f32 %v3384, %v3400
          %v3419 = vsub.f32 %v3385, %v3401
          %v3420 = vadd.f32 %v3416, 1e-06
          %v3421 = vadd.f32 %v3417, 1e-06
          %v3422 = vrsqrt.pop %v3420
          %v3423 = vrsqrt.pop %v3421
          %v3424 = vmul.f32 %v3418, %v3422
          %v3425 = vmul.f32 %v3419, %v3423
          %v3427 = vlaneseq
          %v3428 = vshrl.u32 %v3427, 7
          %v3429 = vsub.s32 0, %v3428
          %v3430 = vrot.slane %v3392, %v3429
          %v3432 = vmul.f32 %v3424, %v3430
          %v3433 = vmul.f32 %v3425, %v3430
          %v3435 = vlaneseq
          %v3436 = vshrl.u32 %v3435, 7
          %v3437 = vsub.s32 0, %v3436
          %v3438 = vrot.slane %v3393, %v3437
          %v3440 = vadd.f32 %v3432, %v3438
          %v3441 = vadd.f32 %v3433, %v3438
          %vm3442 = vcmask 253952
          %3443 = vst.msk [vmem:[#allocation27] sm:$0x1] %vm3442, %v3440
          %3444 = vst.msk [vmem:[#allocation27 + $0x1] sm:$0x1] %vm3442, %v3441
        $region144: #{tpu_custom_call.1} parent=75 // pred_fallthru
          _
        // Predicated region
        $region145: #{tpu_custom_call.1} parent=75 // pred_check
          %p3445 = pneg %p416
        $region146: #{tpu_custom_call.1} parent=75 // pred_check_branch
          %3447 = sbr.rel (%p3445) target = $region148
        $region147: #{tpu_custom_call.1} parent=75 // pred_region
          %s3449 = ssub.s32 32, 32
          %3450 = vsyncadd [#allocation6], %s3449
          %s3451 = sshll.u32 [#allocation27], 4
          %s3452 = int_to_ptr.vmem [resolvable:$true] %s3451
          %3457 = dma.vmem_to_hbm [thread:$0]  %s3452, 32, %s15, [#allocation6], 16, 16, 1
        $region148: #{tpu_custom_call.1} parent=75 // pred_fallthru
          _
        // Predicated region
        $region149: #{tpu_custom_call.1} parent=75 // pred_check
          %p3458 = pneg %p416
        $region150: #{tpu_custom_call.1} parent=75 // pred_check_branch
          %3460 = sbr.rel (%p3458) target = $region152
        $region151: #{tpu_custom_call.1} parent=75 // pred_region
          %3461 = dma.done [#allocation6], 32
        $region152: #{tpu_custom_call.1} parent=75 // pred_fallthru
          _
      $region76: #{tpu_custom_call.1} parent=5 // pred_fallthru
        _
      %p3462 = scmp.le.s32.totalorder 2, %s44
      // Predicated region
      $region153: #{tpu_custom_call.1} parent=5 // pred_check
        %p3463 = pneg %p3462
      $region154: #{tpu_custom_call.1} parent=5 // pred_check_branch
        %3465 = sbr.rel (%p3463) target = $region156
      $region155: #{tpu_custom_call.1} parent=5 // pred_region
        %s3466 = ssub.s32 %s44, 2
      $region156: #{tpu_custom_call.1} parent=5 // pred_fallthru
        _
    $region6: #{tpu_custom_call.1} parent=1 // loop_footer
      %s48 = sadd.s32 1, %s44
    $region7: #{tpu_custom_call.1} parent=1 // loop_footer_branch
      %43 = sbr.rel target = $region3
    $region8: #{tpu_custom_call.1} parent=1 // loop_exit
      _
    %3467 = vsyncpa [#allocation5], 1
    %s3468 = scalar_lea.sflag [#allocation5], 1
    %3469 = vsyncpa %s3468, 1
    %3470 = vsyncpa [#allocation8], 1
    %s3471 = scalar_lea.sflag [#allocation8], 1
    %3472 = vsyncpa %s3471, 1
    %3473 = vsyncpa [#allocation11], 1
    %s3474 = scalar_lea.sflag [#allocation11], 1
    %3475 = vsyncpa %s3474, 1
    %3476 = vsyncpa [#allocation14], 1
    %s3477 = scalar_lea.sflag [#allocation14], 1
    %3478 = vsyncpa %s3477, 1
    %3479 = vsyncpa [#allocation17], 1
    %s3480 = scalar_lea.sflag [#allocation17], 1
    %3481 = vsyncpa %s3480, 1
    %3482 = vsyncpa [#allocation20], 1
    %s3483 = scalar_lea.sflag [#allocation20], 1
    %3484 = vsyncpa %s3483, 1
    %3485 = vsyncpa [#allocation23], 1
    %s3486 = scalar_lea.sflag [#allocation23], 1
    %3487 = vsyncpa %s3486, 1
    %3488 = vsyncpa [#allocation26], 1
    %3489 = vsyncpa [#allocation6], 1
    %s3490 = scalar_lea.sflag [#allocation6], 1
    %3491 = vsyncpa %s3490, 1
  %3492 = vsyncmov [#allocation3]
  %s3493 = vpop.sfrf %3492
  %p3494 = scmp.eq.s32.totalorder %s3493, 0
  %p3495 = pneg %p3494
  %3497 = shalt.err (%p3495)

</llo_original>
